<compile_context>
chip_gen: v7x
topology: tpu7x:2x2x1
jax: 0.10.0
libtpu: 0.0.40
codegen_flags: <defaults>
</compile_context>

<pallas_src>
import math

import jax
import jax.numpy as jnp
from jax.experimental import pallas as pl
from jax.experimental.pallas import tpu as pltpu

# ----------------------------- configuration --------------------------------
CARDS_EMB_WIDTH = 12          # d_model
N_CARDS = 7                   # sequence length (7 cards)
N_LAYERS = 2                  # small demo depth (module default is 8)
DENSE_MUL = 4                 # FFN hidden = D * DENSE_MUL
HIDDEN = CARDS_EMB_WIDTH * DENSE_MUL
LN_EPS = 1e-5
OUT_LANES = 128               # lane-dense packed output width (>= 7*D + N_LAYERS)


# ------------------------------ helpers --------------------------------------
def _layer_norm(h, gamma, beta):
    mu = jnp.mean(h, axis=-1, keepdims=True)
    var = jnp.mean((h - mu) ** 2, axis=-1, keepdims=True)
    return (h - mu) * jax.lax.rsqrt(var + LN_EPS) * gamma + beta


# ------------------------------ Pallas kernel --------------------------------
def card_enc_kernel(x_ref,          # (T, tB, D)   embedded cards, time-major
                    wqkv_ref,       # (L, D, 3D)   fused QKV projection
                    bqkv_ref,       # (L, 3D)
                    wo_ref,         # (L, D, D)
                    bo_ref,         # (L, D)
                    ln1_ref,        # (L, 2, D)    [gamma, beta]
                    ln2_ref,        # (L, 2, D)
                    w1_ref,         # (L, D, H)
                    b1_ref,         # (L, H)
                    w2_ref,         # (L, H, D)
                    b2_ref,         # (L, D)
                    lnf_ref,        # (2, D)       final layer norm
                    out_ref):       # (tB, OUT_LANES)  packed: [7*D features | L zero-fracs | pad]
    T, D, H, L = N_CARDS, CARDS_EMB_WIDTH, HIDDEN, N_LAYERS
    tB = x_ref.shape[1]
    M = T * tB
    inv_sqrt_d = 1.0 / math.sqrt(D)

    # Flat, time-major residual stream: row = t*tB + b.  Since tB % 8 == 0 this reshape
    # is tile-aligned (layout-free).
    x = x_ref[...].astype(jnp.float32).reshape(M, D)

    zfracs = []
    for l in range(L):
        # ---- pre-norm single-head self-attention --------------------------
        h = _layer_norm(x, ln1_ref[l, 0], ln1_ref[l, 1])                        # (M, D)
        # fused QKV: one big (M, D) @ (D, 3D) MXU matmul instead of 3 tiny ones
        qkv = jnp.dot(h, wqkv_ref[l], preferred_element_type=jnp.float32) + bqkv_ref[l]
        qkv3 = qkv.reshape(T, tB, 3 * D)                                        # aligned split
        q = qkv3[:, :, 0:D]
        k = qkv3[:, :, D:2 * D]
        v = qkv3[:, :, 2 * D:3 * D]

        # tiny (T=7) attention on the VPU: broadcast-multiply-reduce; keepdims keeps the
        # (tB, .) minor layout stable -> no lane<->sublane relayouts, no per-example MXU.
        s = jnp.sum(q[:, None, :, :] * k[None, :, :, :],
                    axis=-1, keepdims=True) * inv_sqrt_d                        # (T, T, tB, 1)
        m = jnp.max(s, axis=1, keepdims=True)                                   # (T, 1, tB, 1)
        p = jnp.exp(s - m)
        denom = jnp.sum(p, axis=1, keepdims=True)                               # (T, 1, tB, 1)
        p = p * pl.reciprocal(denom, approx=True)                               # EUP divide
        att = jnp.sum(p * v[None, :, :, :], axis=1)                             # (T, tB, D)

        att = att.reshape(M, D)                                                 # aligned merge
        att = jnp.dot(att, wo_ref[l], preferred_element_type=jnp.float32) + bo_ref[l]
        x = x + att

        # ---- pre-norm feed-forward (ReLU), flat 2-D matmuls -----------------
        h = _layer_norm(x, ln2_ref[l, 0], ln2_ref[l, 1])
        ff = jnp.dot(h, w1_ref[l], preferred_element_type=jnp.float32) + b1_ref[l]   # (M, H)
        relu = jnp.maximum(ff, 0.0)

        # TODO(synk): torchness ZeroesProcessor returns binary zero-indicator tensors;
        # here we report the per-example / per-layer zero fraction instead.
        zr = jnp.mean((relu <= 0.0).astype(jnp.float32), axis=1, keepdims=True)      # (M, 1)
        zb = zr[0:tB, :]
        for t in range(1, T):                            # mean over the 7 time positions
            zb = zb + zr[t * tB:(t + 1) * tB, :]
        zfracs.append(zb * (1.0 / T))                                           # (tB, 1)

        ff = jnp.dot(relu, w2_ref[l], preferred_element_type=jnp.float32) + b2_ref[l]
        x = x + ff

    # final layer norm of the encoder stack
    x = _layer_norm(x, lnf_ref[0], lnf_ref[1])                                  # (M, D)
    x3 = x.reshape(T, tB, D)                                                    # aligned split

    # lane-dense packed output: [x[b,0,:] .. x[b,6,:] | zero-fracs (L) | zero pad] -> 128 lanes
    pieces = [x3[t] for t in range(T)] + zfracs
    pad = OUT_LANES - T * D - L
    if pad > 0:
        pieces.append(jnp.zeros((tB, pad), jnp.float32))
    out_ref[...] = jnp.concatenate(pieces, axis=-1).astype(out_ref.dtype)


# ------------------------------ wrapper --------------------------------------
def card_enc_forward(cards, params, *, tile_b=None):
    """cards: int32 [B, 7] with values in [0, 53). Returns dict {'out', 'zeroes'}."""
    B = cards.shape[0]
    D, T, L, H = CARDS_EMB_WIDTH, N_CARDS, N_LAYERS, HIDDEN
    if tile_b is None:
        tile_b = B                      # small batches: one grid step amortizes all overhead
        # (for very large B on v7x, pass an even split so both TensorCores get work)
    assert B % tile_b == 0, "batch must be a multiple of tile_b"
    assert tile_b % 8 == 0, "tile_b must be a multiple of 8 (tile-aligned in-kernel reshapes)"

    # ---- XLA glue: embedding gather, produced directly time-major (T, B, D) --------------
    # TODO(synk): could be fused into the kernel (scalar-prefetched card ids + in-kernel
    # one-hot matmul gather) to save one small HBM round trip.
    my_idx = jnp.array([0, 0, 1, 1, 1, 1, 1], dtype=jnp.int32)
    x = params['cards_emb'][cards.T] + params['mycards_emb'][my_idx][:, None, :]   # (T, B, D)
    # TF_Dropout(time_drop=0, feat_drop=0) and dropout=0 -> identity (eval mode)
    x = x.astype(jnp.float32)

    grid = (B // tile_b,)
    full = lambda ndim: (lambda i: (0,) * ndim)     # replicated (full-array) weight blocks

    packed = pl.pallas_call(
        card_enc_kernel,
        out_shape=jax.ShapeDtypeStruct((B, OUT_LANES), jnp.float32),
        grid_spec=pltpu.PrefetchScalarGridSpec(
            num_scalar_prefetch=0,
            grid=grid,
            in_specs=[
                pl.BlockSpec((T, tile_b, D), lambda i: (0, i, 0)),      # x (time-major)
                pl.BlockSpec((L, D, 3 * D), full(3)),                   # wqkv (fused)
                pl.BlockSpec((L, 3 * D), full(2)),                      # bqkv
                pl.BlockSpec((L, D, D), full(3)),                       # wo
                pl.BlockSpec((L, D), full(2)),                          # bo
                pl.BlockSpec((L, 2, D), full(3)),                       # ln1
                pl.BlockSpec((L, 2, D), full(3)),                       # ln2
                pl.BlockSpec((L, D, H), full(3)),                       # w1
                pl.BlockSpec((L, H), full(2)),                          # b1
                pl.BlockSpec((L, H, D), full(3)),                       # w2
                pl.BlockSpec((L, D), full(2)),                          # b2
                pl.BlockSpec((2, D), full(2)),                          # lnf
            ],
            out_specs=pl.BlockSpec((tile_b, OUT_LANES), lambda i: (i, 0)),
        ),
        compiler_params=pltpu.CompilerParams(
            dimension_semantics=("parallel",),
        ),
    )(x,
      params['wqkv'], params['bqkv'], params['wo'], params['bo'],
      params['ln1'], params['ln2'],
      params['w1'], params['b1'], params['w2'], params['b2'],
      params['lnf'])

    out = packed[:, :T * D]                 # (B, 7*D)
    zeroes = packed[:, T * D:T * D + L]     # (B, L)
    return {'out': out, 'zeroes': zeroes}


# ------------------------------ parameter init --------------------------------
def init_params(key):
    D, L, H = CARDS_EMB_WIDTH, N_LAYERS, HIDDEN
    ks = jax.random.split(key, 8)
    scale = 0.02
    params = {
        'cards_emb':   scale * jax.random.normal(ks[0], (53, D), jnp.float32),
        'mycards_emb': scale * jax.random.normal(ks[1], (2, D), jnp.float32),
        # fused QKV layout: (L, D, 3D) / (L, 3D)
        'wqkv': scale * jax.random.normal(ks[2], (L, D, 3 * D), jnp.float32),
        'bqkv': jnp.zeros((L, 3 * D), jnp.float32),
        'wo':   scale * jax.random.normal(ks[3], (L, D, D), jnp.float32),
        'bo':   jnp.zeros((L, D), jnp.float32),
        # ln layers: [gamma, beta] -> gamma=1, beta=0
        'ln1':  jnp.stack([jnp.ones((L, D)), jnp.zeros((L, D))], axis=1).astype(jnp.float32),
        'ln2':  jnp.stack([jnp.ones((L, D)), jnp.zeros((L, D))], axis=1).astype(jnp.float32),
        'w1':   scale * jax.random.normal(ks[4], (L, D, H), jnp.float32),
        'b1':   jnp.zeros((L, H), jnp.float32),
        'w2':   scale * jax.random.normal(ks[5], (L, H, D), jnp.float32),
        'b2':   jnp.zeros((L, D), jnp.float32),
        'lnf':  jnp.stack([jnp.ones((D,)), jnp.zeros((D,))], axis=0).astype(jnp.float32),
    }
    return params


# ------------------------------ main ------------------------------------------
if __name__ == "__main__":
    key = jax.random.PRNGKey(0)
    k_param, k_cards = jax.random.split(key)

    params = init_params(k_param)

    B = 16
    cards = jax.random.randint(k_cards, (B, N_CARDS), 0, 53, dtype=jnp.int32)

    fwd = jax.jit(card_enc_forward)        # tile_b defaults to the whole batch (one grid step)
    result = fwd(cards, params)
    jax.block_until_ready(result)

    assert result['out'].shape == (B, N_CARDS * CARDS_EMB_WIDTH)
    assert result['zeroes'].shape == (B, N_LAYERS)
    print("KERNEL_OK")
</pallas_src>

<mosaic_0001>
module attributes {stable_mosaic.version = 11 : i64} {
  func.func @card_enc_kernel(%arg0: i32, %arg1: memref<7x16x12xf32, #tpu.memory_space<vmem>>, %arg2: memref<2x12x36xf32, #tpu.memory_space<vmem>>, %arg3: memref<2x36xf32, #tpu.memory_space<vmem>>, %arg4: memref<2x12x12xf32, #tpu.memory_space<vmem>>, %arg5: memref<2x12xf32, #tpu.memory_space<vmem>>, %arg6: memref<2x2x12xf32, #tpu.memory_space<vmem>>, %arg7: memref<2x2x12xf32, #tpu.memory_space<vmem>>, %arg8: memref<2x12x48xf32, #tpu.memory_space<vmem>>, %arg9: memref<2x48xf32, #tpu.memory_space<vmem>>, %arg10: memref<2x48x12xf32, #tpu.memory_space<vmem>>, %arg11: memref<2x12xf32, #tpu.memory_space<vmem>>, %arg12: memref<2x12xf32, #tpu.memory_space<vmem>>, %arg13: memref<16x128xf32, #tpu.memory_space<vmem>>) attributes {dimension_semantics = [#tpu.dimension_semantics<parallel>], iteration_bounds = array<i64: 1>, scalar_prefetch = 0 : i64, scratch_operands = 0 : i64, tpu.core_type = #tpu.core_type<tc>, window_params = [{transform_indices = @transform_0, window_bounds = array<i64: 7, 16, 12>}, {pipeline_mode = #tpu.pipeline_mode<synchronous>, transform_indices = @transform_1, window_bounds = array<i64: 2, 12, 36>}, {pipeline_mode = #tpu.pipeline_mode<synchronous>, transform_indices = @transform_2, window_bounds = array<i64: 2, 36>}, {pipeline_mode = #tpu.pipeline_mode<synchronous>, transform_indices = @transform_3, window_bounds = array<i64: 2, 12, 12>}, {pipeline_mode = #tpu.pipeline_mode<synchronous>, transform_indices = @transform_4, window_bounds = array<i64: 2, 12>}, {pipeline_mode = #tpu.pipeline_mode<synchronous>, transform_indices = @transform_5, window_bounds = array<i64: 2, 2, 12>}, {pipeline_mode = #tpu.pipeline_mode<synchronous>, transform_indices = @transform_6, window_bounds = array<i64: 2, 2, 12>}, {pipeline_mode = #tpu.pipeline_mode<synchronous>, transform_indices = @transform_7, window_bounds = array<i64: 2, 12, 48>}, {pipeline_mode = #tpu.pipeline_mode<synchronous>, transform_indices = @transform_8, window_bounds = array<i64: 2, 48>}, {pipeline_mode = #tpu.pipeline_mode<synchronous>, transform_indices = @transform_9, window_bounds = array<i64: 2, 48, 12>}, {pipeline_mode = #tpu.pipeline_mode<synchronous>, transform_indices = @transform_10, window_bounds = array<i64: 2, 12>}, {pipeline_mode = #tpu.pipeline_mode<synchronous>, transform_indices = @transform_11, window_bounds = array<i64: 2, 12>}, {transform_indices = @transform_12, window_bounds = array<i64: 16, 128>}]} {
    %c0 = arith.constant 0 : index
    %c0_0 = arith.constant 0 : index
    %c0_1 = arith.constant 0 : index
    %0 = vector.load %arg1[%c0, %c0_0, %c0_1] : memref<7x16x12xf32, #tpu.memory_space<vmem>>, vector<7x16x12xf32>
    %1 = vector.shape_cast %0 : vector<7x16x12xf32> to vector<112x12xf32>
    %c0_2 = arith.constant 0 : index
    %c0_3 = arith.constant 0 : index
    %c0_4 = arith.constant 0 : index
    %2 = vector.load %arg6[%c0_2, %c0_3, %c0_4] : memref<2x2x12xf32, #tpu.memory_space<vmem>>, vector<1x1x12xf32>
    %3 = vector.shape_cast %2 : vector<1x1x12xf32> to vector<12xf32>
    %c0_5 = arith.constant 0 : index
    %c1 = arith.constant 1 : index
    %c0_6 = arith.constant 0 : index
    %4 = vector.load %arg6[%c0_5, %c1, %c0_6] : memref<2x2x12xf32, #tpu.memory_space<vmem>>, vector<1x1x12xf32>
    %5 = vector.shape_cast %4 : vector<1x1x12xf32> to vector<12xf32>
    %cst = arith.constant dense<0.000000e+00> : vector<112xf32>
    %6 = vector.multi_reduction <add>, %1, %cst [1] : vector<112x12xf32> to vector<112xf32>
    %7 = vector.shape_cast %6 : vector<112xf32> to vector<112x1xf32>
    %cst_7 = arith.constant 1.200000e+01 : f32
    %8 = vector.broadcast %cst_7 : f32 to vector<112x1xf32>
    %9 = arith.divf %7, %8 : vector<112x1xf32>
    %10 = vector.broadcast %9 : vector<112x1xf32> to vector<112x12xf32>
    %11 = arith.subf %1, %10 : vector<112x12xf32>
    %12 = arith.mulf %11, %11 : vector<112x12xf32>
    %cst_8 = arith.constant dense<0.000000e+00> : vector<112xf32>
    %13 = vector.multi_reduction <add>, %12, %cst_8 [1] : vector<112x12xf32> to vector<112xf32>
    %14 = vector.shape_cast %13 : vector<112xf32> to vector<112x1xf32>
    %cst_9 = arith.constant 1.200000e+01 : f32
    %15 = vector.broadcast %cst_9 : f32 to vector<112x1xf32>
    %16 = arith.divf %14, %15 : vector<112x1xf32>
    %17 = vector.broadcast %9 : vector<112x1xf32> to vector<112x12xf32>
    %18 = arith.subf %1, %17 : vector<112x12xf32>
    %cst_10 = arith.constant 9.99999974E-6 : f32
    %19 = vector.broadcast %cst_10 : f32 to vector<112x1xf32>
    %20 = arith.addf %16, %19 : vector<112x1xf32>
    %21 = math.rsqrt %20 : vector<112x1xf32>
    %22 = vector.broadcast %21 : vector<112x1xf32> to vector<112x12xf32>
    %23 = arith.mulf %18, %22 : vector<112x12xf32>
    %24 = vector.shape_cast %3 : vector<12xf32> to vector<1x12xf32>
    %25 = vector.broadcast %24 : vector<1x12xf32> to vector<112x12xf32>
    %26 = arith.mulf %23, %25 : vector<112x12xf32>
    %27 = vector.shape_cast %5 : vector<12xf32> to vector<1x12xf32>
    %28 = vector.broadcast %27 : vector<1x12xf32> to vector<112x12xf32>
    %29 = arith.addf %26, %28 : vector<112x12xf32>
    %c0_11 = arith.constant 0 : index
    %c0_12 = arith.constant 0 : index
    %c0_13 = arith.constant 0 : index
    %30 = vector.load %arg2[%c0_11, %c0_12, %c0_13] : memref<2x12x36xf32, #tpu.memory_space<vmem>>, vector<1x12x36xf32>
    %31 = vector.shape_cast %30 : vector<1x12x36xf32> to vector<12x36xf32>
    %cst_14 = arith.constant dense<0.000000e+00> : vector<112x36xf32>
    %32 = tpu.matmul %29, %31, %cst_14 {dimension_numbers = #tpu.dot_dimension_numbers<[1], [0], [0], [1], [0, 0, 1, 1], [], []>} : vector<112x12xf32>, vector<12x36xf32>, vector<112x36xf32> -> vector<112x36xf32>
    %c0_15 = arith.constant 0 : index
    %c0_16 = arith.constant 0 : index
    %33 = vector.load %arg3[%c0_15, %c0_16] : memref<2x36xf32, #tpu.memory_space<vmem>>, vector<1x36xf32>
    %34 = vector.shape_cast %33 : vector<1x36xf32> to vector<36xf32>
    %35 = vector.shape_cast %34 : vector<36xf32> to vector<1x36xf32>
    %36 = vector.broadcast %35 : vector<1x36xf32> to vector<112x36xf32>
    %37 = arith.addf %32, %36 : vector<112x36xf32>
    %38 = vector.shape_cast %37 : vector<112x36xf32> to vector<7x16x36xf32>
    %39 = vector.extract_strided_slice %38 {offsets = [0, 0, 0], sizes = [7, 16, 12], strides = [1, 1, 1]} : vector<7x16x36xf32> to vector<7x16x12xf32>
    %40 = vector.extract_strided_slice %38 {offsets = [0, 0, 12], sizes = [7, 16, 12], strides = [1, 1, 1]} : vector<7x16x36xf32> to vector<7x16x12xf32>
    %41 = vector.extract_strided_slice %38 {offsets = [0, 0, 24], sizes = [7, 16, 12], strides = [1, 1, 1]} : vector<7x16x36xf32> to vector<7x16x12xf32>
    %42 = vector.shape_cast %39 : vector<7x16x12xf32> to vector<7x1x16x12xf32>
    %43 = vector.shape_cast %40 : vector<7x16x12xf32> to vector<1x7x16x12xf32>
    %44 = vector.broadcast %42 : vector<7x1x16x12xf32> to vector<7x7x16x12xf32>
    %45 = vector.broadcast %43 : vector<1x7x16x12xf32> to vector<7x7x16x12xf32>
    %46 = arith.mulf %44, %45 : vector<7x7x16x12xf32>
    %cst_17 = arith.constant dense<0.000000e+00> : vector<7x7x16xf32>
    %47 = vector.multi_reduction <add>, %46, %cst_17 [3] : vector<7x7x16x12xf32> to vector<7x7x16xf32>
    %48 = vector.shape_cast %47 : vector<7x7x16xf32> to vector<7x7x16x1xf32>
    %cst_18 = arith.constant 0.288675129 : f32
    %49 = vector.broadcast %cst_18 : f32 to vector<7x7x16x1xf32>
    %50 = arith.mulf %48, %49 : vector<7x7x16x1xf32>
    %cst_19 = arith.constant dense<0xFF800000> : vector<7x16x1xf32>
    %51 = vector.multi_reduction <maximumf>, %50, %cst_19 [1] : vector<7x7x16x1xf32> to vector<7x16x1xf32>
    %52 = vector.shape_cast %51 : vector<7x16x1xf32> to vector<7x1x16x1xf32>
    %53 = vector.broadcast %52 : vector<7x1x16x1xf32> to vector<7x7x16x1xf32>
    %54 = arith.subf %50, %53 : vector<7x7x16x1xf32>
    %55 = math.exp %54 : vector<7x7x16x1xf32>
    %cst_20 = arith.constant dense<0.000000e+00> : vector<7x16x1xf32>
    %56 = vector.multi_reduction <add>, %55, %cst_20 [1] : vector<7x7x16x1xf32> to vector<7x16x1xf32>
    %57 = vector.shape_cast %56 : vector<7x16x1xf32> to vector<7x1x16x1xf32>
    %58 = tpu.reciprocal %57 {approx = true} : vector<7x1x16x1xf32> -> vector<7x1x16x1xf32>
    %59 = vector.broadcast %58 : vector<7x1x16x1xf32> to vector<7x7x16x1xf32>
    %60 = arith.mulf %55, %59 : vector<7x7x16x1xf32>
    %61 = vector.shape_cast %41 : vector<7x16x12xf32> to vector<1x7x16x12xf32>
    %62 = vector.broadcast %60 : vector<7x7x16x1xf32> to vector<7x7x16x12xf32>
    %63 = vector.broadcast %61 : vector<1x7x16x12xf32> to vector<7x7x16x12xf32>
    %64 = arith.mulf %62, %63 : vector<7x7x16x12xf32>
    %cst_21 = arith.constant dense<0.000000e+00> : vector<7x16x12xf32>
    %65 = vector.multi_reduction <add>, %64, %cst_21 [1] : vector<7x7x16x12xf32> to vector<7x16x12xf32>
    %66 = vector.shape_cast %65 : vector<7x16x12xf32> to vector<112x12xf32>
    %c0_22 = arith.constant 0 : index
    %c0_23 = arith.constant 0 : index
    %c0_24 = arith.constant 0 : index
    %67 = vector.load %arg4[%c0_22, %c0_23, %c0_24] : memref<2x12x12xf32, #tpu.memory_space<vmem>>, vector<1x12x12xf32>
    %68 = vector.shape_cast %67 : vector<1x12x12xf32> to vector<12x12xf32>
    %cst_25 = arith.constant dense<0.000000e+00> : vector<112x12xf32>
    %69 = tpu.matmul %66, %68, %cst_25 {dimension_numbers = #tpu.dot_dimension_numbers<[1], [0], [0], [1], [0, 0, 1, 1], [], []>} : vector<112x12xf32>, vector<12x12xf32>, vector<112x12xf32> -> vector<112x12xf32>
    %c0_26 = arith.constant 0 : index
    %c0_27 = arith.constant 0 : index
    %70 = vector.load %arg5[%c0_26, %c0_27] : memref<2x12xf32, #tpu.memory_space<vmem>>, vector<1x12xf32>
    %71 = vector.shape_cast %70 : vector<1x12xf32> to vector<12xf32>
    %72 = vector.shape_cast %71 : vector<12xf32> to vector<1x12xf32>
    %73 = vector.broadcast %72 : vector<1x12xf32> to vector<112x12xf32>
    %74 = arith.addf %69, %73 : vector<112x12xf32>
    %75 = arith.addf %1, %74 : vector<112x12xf32>
    %c0_28 = arith.constant 0 : index
    %c0_29 = arith.constant 0 : index
    %c0_30 = arith.constant 0 : index
    %76 = vector.load %arg7[%c0_28, %c0_29, %c0_30] : memref<2x2x12xf32, #tpu.memory_space<vmem>>, vector<1x1x12xf32>
    %77 = vector.shape_cast %76 : vector<1x1x12xf32> to vector<12xf32>
    %c0_31 = arith.constant 0 : index
    %c1_32 = arith.constant 1 : index
    %c0_33 = arith.constant 0 : index
    %78 = vector.load %arg7[%c0_31, %c1_32, %c0_33] : memref<2x2x12xf32, #tpu.memory_space<vmem>>, vector<1x1x12xf32>
    %79 = vector.shape_cast %78 : vector<1x1x12xf32> to vector<12xf32>
    %cst_34 = arith.constant dense<0.000000e+00> : vector<112xf32>
    %80 = vector.multi_reduction <add>, %75, %cst_34 [1] : vector<112x12xf32> to vector<112xf32>
    %81 = vector.shape_cast %80 : vector<112xf32> to vector<112x1xf32>
    %cst_35 = arith.constant 1.200000e+01 : f32
    %82 = vector.broadcast %cst_35 : f32 to vector<112x1xf32>
    %83 = arith.divf %81, %82 : vector<112x1xf32>
    %84 = vector.broadcast %83 : vector<112x1xf32> to vector<112x12xf32>
    %85 = arith.subf %75, %84 : vector<112x12xf32>
    %86 = arith.mulf %85, %85 : vector<112x12xf32>
    %cst_36 = arith.constant dense<0.000000e+00> : vector<112xf32>
    %87 = vector.multi_reduction <add>, %86, %cst_36 [1] : vector<112x12xf32> to vector<112xf32>
    %88 = vector.shape_cast %87 : vector<112xf32> to vector<112x1xf32>
    %cst_37 = arith.constant 1.200000e+01 : f32
    %89 = vector.broadcast %cst_37 : f32 to vector<112x1xf32>
    %90 = arith.divf %88, %89 : vector<112x1xf32>
    %91 = vector.broadcast %83 : vector<112x1xf32> to vector<112x12xf32>
    %92 = arith.subf %75, %91 : vector<112x12xf32>
    %cst_38 = arith.constant 9.99999974E-6 : f32
    %93 = vector.broadcast %cst_38 : f32 to vector<112x1xf32>
    %94 = arith.addf %90, %93 : vector<112x1xf32>
    %95 = math.rsqrt %94 : vector<112x1xf32>
    %96 = vector.broadcast %95 : vector<112x1xf32> to vector<112x12xf32>
    %97 = arith.mulf %92, %96 : vector<112x12xf32>
    %98 = vector.shape_cast %77 : vector<12xf32> to vector<1x12xf32>
    %99 = vector.broadcast %98 : vector<1x12xf32> to vector<112x12xf32>
    %100 = arith.mulf %97, %99 : vector<112x12xf32>
    %101 = vector.shape_cast %79 : vector<12xf32> to vector<1x12xf32>
    %102 = vector.broadcast %101 : vector<1x12xf32> to vector<112x12xf32>
    %103 = arith.addf %100, %102 : vector<112x12xf32>
    %c0_39 = arith.constant 0 : index
    %c0_40 = arith.constant 0 : index
    %c0_41 = arith.constant 0 : index
    %104 = vector.load %arg8[%c0_39, %c0_40, %c0_41] : memref<2x12x48xf32, #tpu.memory_space<vmem>>, vector<1x12x48xf32>
    %105 = vector.shape_cast %104 : vector<1x12x48xf32> to vector<12x48xf32>
    %cst_42 = arith.constant dense<0.000000e+00> : vector<112x48xf32>
    %106 = tpu.matmul %103, %105, %cst_42 {dimension_numbers = #tpu.dot_dimension_numbers<[1], [0], [0], [1], [0, 0, 1, 1], [], []>} : vector<112x12xf32>, vector<12x48xf32>, vector<112x48xf32> -> vector<112x48xf32>
    %c0_43 = arith.constant 0 : index
    %c0_44 = arith.constant 0 : index
    %107 = vector.load %arg9[%c0_43, %c0_44] : memref<2x48xf32, #tpu.memory_space<vmem>>, vector<1x48xf32>
    %108 = vector.shape_cast %107 : vector<1x48xf32> to vector<48xf32>
    %109 = vector.shape_cast %108 : vector<48xf32> to vector<1x48xf32>
    %110 = vector.broadcast %109 : vector<1x48xf32> to vector<112x48xf32>
    %111 = arith.addf %106, %110 : vector<112x48xf32>
    %cst_45 = arith.constant 0.000000e+00 : f32
    %112 = vector.broadcast %cst_45 : f32 to vector<112x48xf32>
    %113 = arith.maximumf %111, %112 : vector<112x48xf32>
    %cst_46 = arith.constant 0.000000e+00 : f32
    %114 = vector.broadcast %cst_46 : f32 to vector<112x48xf32>
    %115 = arith.cmpf ole, %113, %114 : vector<112x48xf32>
    %116 = arith.extui %115 : vector<112x48xi1> to vector<112x48xi32>
    %117 = arith.sitofp %116 : vector<112x48xi32> to vector<112x48xf32>
    %cst_47 = arith.constant dense<0.000000e+00> : vector<112xf32>
    %118 = vector.multi_reduction <add>, %117, %cst_47 [1] : vector<112x48xf32> to vector<112xf32>
    %119 = vector.shape_cast %118 : vector<112xf32> to vector<112x1xf32>
    %cst_48 = arith.constant 4.800000e+01 : f32
    %120 = vector.broadcast %cst_48 : f32 to vector<112x1xf32>
    %121 = arith.divf %119, %120 : vector<112x1xf32>
    %122 = vector.extract_strided_slice %121 {offsets = [0, 0], sizes = [16, 1], strides = [1, 1]} : vector<112x1xf32> to vector<16x1xf32>
    %123 = vector.extract_strided_slice %121 {offsets = [16, 0], sizes = [16, 1], strides = [1, 1]} : vector<112x1xf32> to vector<16x1xf32>
    %124 = arith.addf %122, %123 : vector<16x1xf32>
    %125 = vector.extract_strided_slice %121 {offsets = [32, 0], sizes = [16, 1], strides = [1, 1]} : vector<112x1xf32> to vector<16x1xf32>
    %126 = arith.addf %124, %125 : vector<16x1xf32>
    %127 = vector.extract_strided_slice %121 {offsets = [48, 0], sizes = [16, 1], strides = [1, 1]} : vector<112x1xf32> to vector<16x1xf32>
    %128 = arith.addf %126, %127 : vector<16x1xf32>
    %129 = vector.extract_strided_slice %121 {offsets = [64, 0], sizes = [16, 1], strides = [1, 1]} : vector<112x1xf32> to vector<16x1xf32>
    %130 = arith.addf %128, %129 : vector<16x1xf32>
    %131 = vector.extract_strided_slice %121 {offsets = [80, 0], sizes = [16, 1], strides = [1, 1]} : vector<112x1xf32> to vector<16x1xf32>
    %132 = arith.addf %130, %131 : vector<16x1xf32>
    %133 = vector.extract_strided_slice %121 {offsets = [96, 0], sizes = [16, 1], strides = [1, 1]} : vector<112x1xf32> to vector<16x1xf32>
    %134 = arith.addf %132, %133 : vector<16x1xf32>
    %cst_49 = arith.constant 0.142857149 : f32
    %135 = vector.broadcast %cst_49 : f32 to vector<16x1xf32>
    %136 = arith.mulf %134, %135 : vector<16x1xf32>
    %c0_50 = arith.constant 0 : index
    %c0_51 = arith.constant 0 : index
    %c0_52 = arith.constant 0 : index
    %137 = vector.load %arg10[%c0_50, %c0_51, %c0_52] : memref<2x48x12xf32, #tpu.memory_space<vmem>>, vector<1x48x12xf32>
    %138 = vector.shape_cast %137 : vector<1x48x12xf32> to vector<48x12xf32>
    %cst_53 = arith.constant dense<0.000000e+00> : vector<112x12xf32>
    %139 = tpu.matmul %113, %138, %cst_53 {dimension_numbers = #tpu.dot_dimension_numbers<[1], [0], [0], [1], [0, 0, 1, 1], [], []>} : vector<112x48xf32>, vector<48x12xf32>, vector<112x12xf32> -> vector<112x12xf32>
    %c0_54 = arith.constant 0 : index
    %c0_55 = arith.constant 0 : index
    %140 = vector.load %arg11[%c0_54, %c0_55] : memref<2x12xf32, #tpu.memory_space<vmem>>, vector<1x12xf32>
    %141 = vector.shape_cast %140 : vector<1x12xf32> to vector<12xf32>
    %142 = vector.shape_cast %141 : vector<12xf32> to vector<1x12xf32>
    %143 = vector.broadcast %142 : vector<1x12xf32> to vector<112x12xf32>
    %144 = arith.addf %139, %143 : vector<112x12xf32>
    %145 = arith.addf %75, %144 : vector<112x12xf32>
    %c1_56 = arith.constant 1 : index
    %c0_57 = arith.constant 0 : index
    %c0_58 = arith.constant 0 : index
    %146 = vector.load %arg6[%c1_56, %c0_57, %c0_58] : memref<2x2x12xf32, #tpu.memory_space<vmem>>, vector<1x1x12xf32>
    %147 = vector.shape_cast %146 : vector<1x1x12xf32> to vector<12xf32>
    %c1_59 = arith.constant 1 : index
    %c1_60 = arith.constant 1 : index
    %c0_61 = arith.constant 0 : index
    %148 = vector.load %arg6[%c1_59, %c1_60, %c0_61] : memref<2x2x12xf32, #tpu.memory_space<vmem>>, vector<1x1x12xf32>
    %149 = vector.shape_cast %148 : vector<1x1x12xf32> to vector<12xf32>
    %cst_62 = arith.constant dense<0.000000e+00> : vector<112xf32>
    %150 = vector.multi_reduction <add>, %145, %cst_62 [1] : vector<112x12xf32> to vector<112xf32>
    %151 = vector.shape_cast %150 : vector<112xf32> to vector<112x1xf32>
    %cst_63 = arith.constant 1.200000e+01 : f32
    %152 = vector.broadcast %cst_63 : f32 to vector<112x1xf32>
    %153 = arith.divf %151, %152 : vector<112x1xf32>
    %154 = vector.broadcast %153 : vector<112x1xf32> to vector<112x12xf32>
    %155 = arith.subf %145, %154 : vector<112x12xf32>
    %156 = arith.mulf %155, %155 : vector<112x12xf32>
    %cst_64 = arith.constant dense<0.000000e+00> : vector<112xf32>
    %157 = vector.multi_reduction <add>, %156, %cst_64 [1] : vector<112x12xf32> to vector<112xf32>
    %158 = vector.shape_cast %157 : vector<112xf32> to vector<112x1xf32>
    %cst_65 = arith.constant 1.200000e+01 : f32
    %159 = vector.broadcast %cst_65 : f32 to vector<112x1xf32>
    %160 = arith.divf %158, %159 : vector<112x1xf32>
    %161 = vector.broadcast %153 : vector<112x1xf32> to vector<112x12xf32>
    %162 = arith.subf %145, %161 : vector<112x12xf32>
    %cst_66 = arith.constant 9.99999974E-6 : f32
    %163 = vector.broadcast %cst_66 : f32 to vector<112x1xf32>
    %164 = arith.addf %160, %163 : vector<112x1xf32>
    %165 = math.rsqrt %164 : vector<112x1xf32>
    %166 = vector.broadcast %165 : vector<112x1xf32> to vector<112x12xf32>
    %167 = arith.mulf %162, %166 : vector<112x12xf32>
    %168 = vector.shape_cast %147 : vector<12xf32> to vector<1x12xf32>
    %169 = vector.broadcast %168 : vector<1x12xf32> to vector<112x12xf32>
    %170 = arith.mulf %167, %169 : vector<112x12xf32>
    %171 = vector.shape_cast %149 : vector<12xf32> to vector<1x12xf32>
    %172 = vector.broadcast %171 : vector<1x12xf32> to vector<112x12xf32>
    %173 = arith.addf %170, %172 : vector<112x12xf32>
    %c1_67 = arith.constant 1 : index
    %c0_68 = arith.constant 0 : index
    %c0_69 = arith.constant 0 : index
    %174 = vector.load %arg2[%c1_67, %c0_68, %c0_69] : memref<2x12x36xf32, #tpu.memory_space<vmem>>, vector<1x12x36xf32>
    %175 = vector.shape_cast %174 : vector<1x12x36xf32> to vector<12x36xf32>
    %cst_70 = arith.constant dense<0.000000e+00> : vector<112x36xf32>
    %176 = tpu.matmul %173, %175, %cst_70 {dimension_numbers = #tpu.dot_dimension_numbers<[1], [0], [0], [1], [0, 0, 1, 1], [], []>} : vector<112x12xf32>, vector<12x36xf32>, vector<112x36xf32> -> vector<112x36xf32>
    %c1_71 = arith.constant 1 : index
    %c0_72 = arith.constant 0 : index
    %177 = vector.load %arg3[%c1_71, %c0_72] : memref<2x36xf32, #tpu.memory_space<vmem>>, vector<1x36xf32>
    %178 = vector.shape_cast %177 : vector<1x36xf32> to vector<36xf32>
    %179 = vector.shape_cast %178 : vector<36xf32> to vector<1x36xf32>
    %180 = vector.broadcast %179 : vector<1x36xf32> to vector<112x36xf32>
    %181 = arith.addf %176, %180 : vector<112x36xf32>
    %182 = vector.shape_cast %181 : vector<112x36xf32> to vector<7x16x36xf32>
    %183 = vector.extract_strided_slice %182 {offsets = [0, 0, 0], sizes = [7, 16, 12], strides = [1, 1, 1]} : vector<7x16x36xf32> to vector<7x16x12xf32>
    %184 = vector.extract_strided_slice %182 {offsets = [0, 0, 12], sizes = [7, 16, 12], strides = [1, 1, 1]} : vector<7x16x36xf32> to vector<7x16x12xf32>
    %185 = vector.extract_strided_slice %182 {offsets = [0, 0, 24], sizes = [7, 16, 12], strides = [1, 1, 1]} : vector<7x16x36xf32> to vector<7x16x12xf32>
    %186 = vector.shape_cast %183 : vector<7x16x12xf32> to vector<7x1x16x12xf32>
    %187 = vector.shape_cast %184 : vector<7x16x12xf32> to vector<1x7x16x12xf32>
    %188 = vector.broadcast %186 : vector<7x1x16x12xf32> to vector<7x7x16x12xf32>
    %189 = vector.broadcast %187 : vector<1x7x16x12xf32> to vector<7x7x16x12xf32>
    %190 = arith.mulf %188, %189 : vector<7x7x16x12xf32>
    %cst_73 = arith.constant dense<0.000000e+00> : vector<7x7x16xf32>
    %191 = vector.multi_reduction <add>, %190, %cst_73 [3] : vector<7x7x16x12xf32> to vector<7x7x16xf32>
    %192 = vector.shape_cast %191 : vector<7x7x16xf32> to vector<7x7x16x1xf32>
    %cst_74 = arith.constant 0.288675129 : f32
    %193 = vector.broadcast %cst_74 : f32 to vector<7x7x16x1xf32>
    %194 = arith.mulf %192, %193 : vector<7x7x16x1xf32>
    %cst_75 = arith.constant dense<0xFF800000> : vector<7x16x1xf32>
    %195 = vector.multi_reduction <maximumf>, %194, %cst_75 [1] : vector<7x7x16x1xf32> to vector<7x16x1xf32>
    %196 = vector.shape_cast %195 : vector<7x16x1xf32> to vector<7x1x16x1xf32>
    %197 = vector.broadcast %196 : vector<7x1x16x1xf32> to vector<7x7x16x1xf32>
    %198 = arith.subf %194, %197 : vector<7x7x16x1xf32>
    %199 = math.exp %198 : vector<7x7x16x1xf32>
    %cst_76 = arith.constant dense<0.000000e+00> : vector<7x16x1xf32>
    %200 = vector.multi_reduction <add>, %199, %cst_76 [1] : vector<7x7x16x1xf32> to vector<7x16x1xf32>
    %201 = vector.shape_cast %200 : vector<7x16x1xf32> to vector<7x1x16x1xf32>
    %202 = tpu.reciprocal %201 {approx = true} : vector<7x1x16x1xf32> -> vector<7x1x16x1xf32>
    %203 = vector.broadcast %202 : vector<7x1x16x1xf32> to vector<7x7x16x1xf32>
    %204 = arith.mulf %199, %203 : vector<7x7x16x1xf32>
    %205 = vector.shape_cast %185 : vector<7x16x12xf32> to vector<1x7x16x12xf32>
    %206 = vector.broadcast %204 : vector<7x7x16x1xf32> to vector<7x7x16x12xf32>
    %207 = vector.broadcast %205 : vector<1x7x16x12xf32> to vector<7x7x16x12xf32>
    %208 = arith.mulf %206, %207 : vector<7x7x16x12xf32>
    %cst_77 = arith.constant dense<0.000000e+00> : vector<7x16x12xf32>
    %209 = vector.multi_reduction <add>, %208, %cst_77 [1] : vector<7x7x16x12xf32> to vector<7x16x12xf32>
    %210 = vector.shape_cast %209 : vector<7x16x12xf32> to vector<112x12xf32>
    %c1_78 = arith.constant 1 : index
    %c0_79 = arith.constant 0 : index
    %c0_80 = arith.constant 0 : index
    %211 = vector.load %arg4[%c1_78, %c0_79, %c0_80] : memref<2x12x12xf32, #tpu.memory_space<vmem>>, vector<1x12x12xf32>
    %212 = vector.shape_cast %211 : vector<1x12x12xf32> to vector<12x12xf32>
    %cst_81 = arith.constant dense<0.000000e+00> : vector<112x12xf32>
    %213 = tpu.matmul %210, %212, %cst_81 {dimension_numbers = #tpu.dot_dimension_numbers<[1], [0], [0], [1], [0, 0, 1, 1], [], []>} : vector<112x12xf32>, vector<12x12xf32>, vector<112x12xf32> -> vector<112x12xf32>
    %c1_82 = arith.constant 1 : index
    %c0_83 = arith.constant 0 : index
    %214 = vector.load %arg5[%c1_82, %c0_83] : memref<2x12xf32, #tpu.memory_space<vmem>>, vector<1x12xf32>
    %215 = vector.shape_cast %214 : vector<1x12xf32> to vector<12xf32>
    %216 = vector.shape_cast %215 : vector<12xf32> to vector<1x12xf32>
    %217 = vector.broadcast %216 : vector<1x12xf32> to vector<112x12xf32>
    %218 = arith.addf %213, %217 : vector<112x12xf32>
    %219 = arith.addf %145, %218 : vector<112x12xf32>
    %c1_84 = arith.constant 1 : index
    %c0_85 = arith.constant 0 : index
    %c0_86 = arith.constant 0 : index
    %220 = vector.load %arg7[%c1_84, %c0_85, %c0_86] : memref<2x2x12xf32, #tpu.memory_space<vmem>>, vector<1x1x12xf32>
    %221 = vector.shape_cast %220 : vector<1x1x12xf32> to vector<12xf32>
    %c1_87 = arith.constant 1 : index
    %c1_88 = arith.constant 1 : index
    %c0_89 = arith.constant 0 : index
    %222 = vector.load %arg7[%c1_87, %c1_88, %c0_89] : memref<2x2x12xf32, #tpu.memory_space<vmem>>, vector<1x1x12xf32>
    %223 = vector.shape_cast %222 : vector<1x1x12xf32> to vector<12xf32>
    %cst_90 = arith.constant dense<0.000000e+00> : vector<112xf32>
    %224 = vector.multi_reduction <add>, %219, %cst_90 [1] : vector<112x12xf32> to vector<112xf32>
    %225 = vector.shape_cast %224 : vector<112xf32> to vector<112x1xf32>
    %cst_91 = arith.constant 1.200000e+01 : f32
    %226 = vector.broadcast %cst_91 : f32 to vector<112x1xf32>
    %227 = arith.divf %225, %226 : vector<112x1xf32>
    %228 = vector.broadcast %227 : vector<112x1xf32> to vector<112x12xf32>
    %229 = arith.subf %219, %228 : vector<112x12xf32>
    %230 = arith.mulf %229, %229 : vector<112x12xf32>
    %cst_92 = arith.constant dense<0.000000e+00> : vector<112xf32>
    %231 = vector.multi_reduction <add>, %230, %cst_92 [1] : vector<112x12xf32> to vector<112xf32>
    %232 = vector.shape_cast %231 : vector<112xf32> to vector<112x1xf32>
    %cst_93 = arith.constant 1.200000e+01 : f32
    %233 = vector.broadcast %cst_93 : f32 to vector<112x1xf32>
    %234 = arith.divf %232, %233 : vector<112x1xf32>
    %235 = vector.broadcast %227 : vector<112x1xf32> to vector<112x12xf32>
    %236 = arith.subf %219, %235 : vector<112x12xf32>
    %cst_94 = arith.constant 9.99999974E-6 : f32
    %237 = vector.broadcast %cst_94 : f32 to vector<112x1xf32>
    %238 = arith.addf %234, %237 : vector<112x1xf32>
    %239 = math.rsqrt %238 : vector<112x1xf32>
    %240 = vector.broadcast %239 : vector<112x1xf32> to vector<112x12xf32>
    %241 = arith.mulf %236, %240 : vector<112x12xf32>
    %242 = vector.shape_cast %221 : vector<12xf32> to vector<1x12xf32>
    %243 = vector.broadcast %242 : vector<1x12xf32> to vector<112x12xf32>
    %244 = arith.mulf %241, %243 : vector<112x12xf32>
    %245 = vector.shape_cast %223 : vector<12xf32> to vector<1x12xf32>
    %246 = vector.broadcast %245 : vector<1x12xf32> to vector<112x12xf32>
    %247 = arith.addf %244, %246 : vector<112x12xf32>
    %c1_95 = arith.constant 1 : index
    %c0_96 = arith.constant 0 : index
    %c0_97 = arith.constant 0 : index
    %248 = vector.load %arg8[%c1_95, %c0_96, %c0_97] : memref<2x12x48xf32, #tpu.memory_space<vmem>>, vector<1x12x48xf32>
    %249 = vector.shape_cast %248 : vector<1x12x48xf32> to vector<12x48xf32>
    %cst_98 = arith.constant dense<0.000000e+00> : vector<112x48xf32>
    %250 = tpu.matmul %247, %249, %cst_98 {dimension_numbers = #tpu.dot_dimension_numbers<[1], [0], [0], [1], [0, 0, 1, 1], [], []>} : vector<112x12xf32>, vector<12x48xf32>, vector<112x48xf32> -> vector<112x48xf32>
    %c1_99 = arith.constant 1 : index
    %c0_100 = arith.constant 0 : index
    %251 = vector.load %arg9[%c1_99, %c0_100] : memref<2x48xf32, #tpu.memory_space<vmem>>, vector<1x48xf32>
    %252 = vector.shape_cast %251 : vector<1x48xf32> to vector<48xf32>
    %253 = vector.shape_cast %252 : vector<48xf32> to vector<1x48xf32>
    %254 = vector.broadcast %253 : vector<1x48xf32> to vector<112x48xf32>
    %255 = arith.addf %250, %254 : vector<112x48xf32>
    %cst_101 = arith.constant 0.000000e+00 : f32
    %256 = vector.broadcast %cst_101 : f32 to vector<112x48xf32>
    %257 = arith.maximumf %255, %256 : vector<112x48xf32>
    %cst_102 = arith.constant 0.000000e+00 : f32
    %258 = vector.broadcast %cst_102 : f32 to vector<112x48xf32>
    %259 = arith.cmpf ole, %257, %258 : vector<112x48xf32>
    %260 = arith.extui %259 : vector<112x48xi1> to vector<112x48xi32>
    %261 = arith.sitofp %260 : vector<112x48xi32> to vector<112x48xf32>
    %cst_103 = arith.constant dense<0.000000e+00> : vector<112xf32>
    %262 = vector.multi_reduction <add>, %261, %cst_103 [1] : vector<112x48xf32> to vector<112xf32>
    %263 = vector.shape_cast %262 : vector<112xf32> to vector<112x1xf32>
    %cst_104 = arith.constant 4.800000e+01 : f32
    %264 = vector.broadcast %cst_104 : f32 to vector<112x1xf32>
    %265 = arith.divf %263, %264 : vector<112x1xf32>
    %266 = vector.extract_strided_slice %265 {offsets = [0, 0], sizes = [16, 1], strides = [1, 1]} : vector<112x1xf32> to vector<16x1xf32>
    %267 = vector.extract_strided_slice %265 {offsets = [16, 0], sizes = [16, 1], strides = [1, 1]} : vector<112x1xf32> to vector<16x1xf32>
    %268 = arith.addf %266, %267 : vector<16x1xf32>
    %269 = vector.extract_strided_slice %265 {offsets = [32, 0], sizes = [16, 1], strides = [1, 1]} : vector<112x1xf32> to vector<16x1xf32>
    %270 = arith.addf %268, %269 : vector<16x1xf32>
    %271 = vector.extract_strided_slice %265 {offsets = [48, 0], sizes = [16, 1], strides = [1, 1]} : vector<112x1xf32> to vector<16x1xf32>
    %272 = arith.addf %270, %271 : vector<16x1xf32>
    %273 = vector.extract_strided_slice %265 {offsets = [64, 0], sizes = [16, 1], strides = [1, 1]} : vector<112x1xf32> to vector<16x1xf32>
    %274 = arith.addf %272, %273 : vector<16x1xf32>
    %275 = vector.extract_strided_slice %265 {offsets = [80, 0], sizes = [16, 1], strides = [1, 1]} : vector<112x1xf32> to vector<16x1xf32>
    %276 = arith.addf %274, %275 : vector<16x1xf32>
    %277 = vector.extract_strided_slice %265 {offsets = [96, 0], sizes = [16, 1], strides = [1, 1]} : vector<112x1xf32> to vector<16x1xf32>
    %278 = arith.addf %276, %277 : vector<16x1xf32>
    %cst_105 = arith.constant 0.142857149 : f32
    %279 = vector.broadcast %cst_105 : f32 to vector<16x1xf32>
    %280 = arith.mulf %278, %279 : vector<16x1xf32>
    %c1_106 = arith.constant 1 : index
    %c0_107 = arith.constant 0 : index
    %c0_108 = arith.constant 0 : index
    %281 = vector.load %arg10[%c1_106, %c0_107, %c0_108] : memref<2x48x12xf32, #tpu.memory_space<vmem>>, vector<1x48x12xf32>
    %282 = vector.shape_cast %281 : vector<1x48x12xf32> to vector<48x12xf32>
    %cst_109 = arith.constant dense<0.000000e+00> : vector<112x12xf32>
    %283 = tpu.matmul %257, %282, %cst_109 {dimension_numbers = #tpu.dot_dimension_numbers<[1], [0], [0], [1], [0, 0, 1, 1], [], []>} : vector<112x48xf32>, vector<48x12xf32>, vector<112x12xf32> -> vector<112x12xf32>
    %c1_110 = arith.constant 1 : index
    %c0_111 = arith.constant 0 : index
    %284 = vector.load %arg11[%c1_110, %c0_111] : memref<2x12xf32, #tpu.memory_space<vmem>>, vector<1x12xf32>
    %285 = vector.shape_cast %284 : vector<1x12xf32> to vector<12xf32>
    %286 = vector.shape_cast %285 : vector<12xf32> to vector<1x12xf32>
    %287 = vector.broadcast %286 : vector<1x12xf32> to vector<112x12xf32>
    %288 = arith.addf %283, %287 : vector<112x12xf32>
    %289 = arith.addf %219, %288 : vector<112x12xf32>
    %c0_112 = arith.constant 0 : index
    %c0_113 = arith.constant 0 : index
    %290 = vector.load %arg12[%c0_112, %c0_113] : memref<2x12xf32, #tpu.memory_space<vmem>>, vector<1x12xf32>
    %291 = vector.shape_cast %290 : vector<1x12xf32> to vector<12xf32>
    %c1_114 = arith.constant 1 : index
    %c0_115 = arith.constant 0 : index
    %292 = vector.load %arg12[%c1_114, %c0_115] : memref<2x12xf32, #tpu.memory_space<vmem>>, vector<1x12xf32>
    %293 = vector.shape_cast %292 : vector<1x12xf32> to vector<12xf32>
    %cst_116 = arith.constant dense<0.000000e+00> : vector<112xf32>
    %294 = vector.multi_reduction <add>, %289, %cst_116 [1] : vector<112x12xf32> to vector<112xf32>
    %295 = vector.shape_cast %294 : vector<112xf32> to vector<112x1xf32>
    %cst_117 = arith.constant 1.200000e+01 : f32
    %296 = vector.broadcast %cst_117 : f32 to vector<112x1xf32>
    %297 = arith.divf %295, %296 : vector<112x1xf32>
    %298 = vector.broadcast %297 : vector<112x1xf32> to vector<112x12xf32>
    %299 = arith.subf %289, %298 : vector<112x12xf32>
    %300 = arith.mulf %299, %299 : vector<112x12xf32>
    %cst_118 = arith.constant dense<0.000000e+00> : vector<112xf32>
    %301 = vector.multi_reduction <add>, %300, %cst_118 [1] : vector<112x12xf32> to vector<112xf32>
    %302 = vector.shape_cast %301 : vector<112xf32> to vector<112x1xf32>
    %cst_119 = arith.constant 1.200000e+01 : f32
    %303 = vector.broadcast %cst_119 : f32 to vector<112x1xf32>
    %304 = arith.divf %302, %303 : vector<112x1xf32>
    %305 = vector.broadcast %297 : vector<112x1xf32> to vector<112x12xf32>
    %306 = arith.subf %289, %305 : vector<112x12xf32>
    %cst_120 = arith.constant 9.99999974E-6 : f32
    %307 = vector.broadcast %cst_120 : f32 to vector<112x1xf32>
    %308 = arith.addf %304, %307 : vector<112x1xf32>
    %309 = math.rsqrt %308 : vector<112x1xf32>
    %310 = vector.broadcast %309 : vector<112x1xf32> to vector<112x12xf32>
    %311 = arith.mulf %306, %310 : vector<112x12xf32>
    %312 = vector.shape_cast %291 : vector<12xf32> to vector<1x12xf32>
    %313 = vector.broadcast %312 : vector<1x12xf32> to vector<112x12xf32>
    %314 = arith.mulf %311, %313 : vector<112x12xf32>
    %315 = vector.shape_cast %293 : vector<12xf32> to vector<1x12xf32>
    %316 = vector.broadcast %315 : vector<1x12xf32> to vector<112x12xf32>
    %317 = arith.addf %314, %316 : vector<112x12xf32>
    %318 = vector.shape_cast %317 : vector<112x12xf32> to vector<7x16x12xf32>
    %319 = vector.extract_strided_slice %318 {offsets = [0, 0, 0], sizes = [1, 16, 12], strides = [1, 1, 1]} : vector<7x16x12xf32> to vector<1x16x12xf32>
    %320 = vector.shape_cast %319 : vector<1x16x12xf32> to vector<16x12xf32>
    %321 = vector.extract_strided_slice %318 {offsets = [1, 0, 0], sizes = [1, 16, 12], strides = [1, 1, 1]} : vector<7x16x12xf32> to vector<1x16x12xf32>
    %322 = vector.shape_cast %321 : vector<1x16x12xf32> to vector<16x12xf32>
    %323 = vector.extract_strided_slice %318 {offsets = [2, 0, 0], sizes = [1, 16, 12], strides = [1, 1, 1]} : vector<7x16x12xf32> to vector<1x16x12xf32>
    %324 = vector.shape_cast %323 : vector<1x16x12xf32> to vector<16x12xf32>
    %325 = vector.extract_strided_slice %318 {offsets = [3, 0, 0], sizes = [1, 16, 12], strides = [1, 1, 1]} : vector<7x16x12xf32> to vector<1x16x12xf32>
    %326 = vector.shape_cast %325 : vector<1x16x12xf32> to vector<16x12xf32>
    %327 = vector.extract_strided_slice %318 {offsets = [4, 0, 0], sizes = [1, 16, 12], strides = [1, 1, 1]} : vector<7x16x12xf32> to vector<1x16x12xf32>
    %328 = vector.shape_cast %327 : vector<1x16x12xf32> to vector<16x12xf32>
    %329 = vector.extract_strided_slice %318 {offsets = [5, 0, 0], sizes = [1, 16, 12], strides = [1, 1, 1]} : vector<7x16x12xf32> to vector<1x16x12xf32>
    %330 = vector.shape_cast %329 : vector<1x16x12xf32> to vector<16x12xf32>
    %331 = vector.extract_strided_slice %318 {offsets = [6, 0, 0], sizes = [1, 16, 12], strides = [1, 1, 1]} : vector<7x16x12xf32> to vector<1x16x12xf32>
    %332 = vector.shape_cast %331 : vector<1x16x12xf32> to vector<16x12xf32>
    %cst_121 = arith.constant 0.000000e+00 : f32
    %333 = vector.broadcast %cst_121 : f32 to vector<16x42xf32>
    %334 = tpu.concatenate %320, %322, %324, %326, %328, %330, %332, %136, %280, %333 in 1 : vector<16x12xf32>, vector<16x12xf32>, vector<16x12xf32>, vector<16x12xf32>, vector<16x12xf32>, vector<16x12xf32>, vector<16x12xf32>, vector<16x1xf32>, vector<16x1xf32>, vector<16x42xf32> -> vector<16x128xf32>
    %c0_122 = arith.constant 0 : index
    %c0_123 = arith.constant 0 : index
    %335 = vector.load %arg13[%c0_122, %c0_123] : memref<16x128xf32, #tpu.memory_space<vmem>>, vector<16x128xf32>
    tpu.vector_store %arg13[%c0_122, %c0_123], %334 {strides = array<i32>} : memref<16x128xf32, #tpu.memory_space<vmem>>, vector<16x128xf32>,
    return
  }
  func.func @transform_0(%arg0: i32) -> (i32, i32, i32) {
    %c0_i32 = arith.constant 0 : i32
    %c0_i32_0 = arith.constant 0 : i32
    %c0_i32_1 = arith.constant 0 : i32
    return %c0_i32, %arg0, %c0_i32_0 : i32, i32, i32
  }
  func.func @transform_1(%arg0: i32) -> (i32, i32, i32) {
    %c0_i32 = arith.constant 0 : i32
    %c0_i32_0 = arith.constant 0 : i32
    %c0_i32_1 = arith.constant 0 : i32
    %c0_i32_2 = arith.constant 0 : i32
    return %c0_i32, %c0_i32_0, %c0_i32_1 : i32, i32, i32
  }
  func.func @transform_2(%arg0: i32) -> (i32, i32) {
    %c0_i32 = arith.constant 0 : i32
    %c0_i32_0 = arith.constant 0 : i32
    %c0_i32_1 = arith.constant 0 : i32
    return %c0_i32, %c0_i32_0 : i32, i32
  }
  func.func @transform_3(%arg0: i32) -> (i32, i32, i32) {
    %c0_i32 = arith.constant 0 : i32
    %c0_i32_0 = arith.constant 0 : i32
    %c0_i32_1 = arith.constant 0 : i32
    %c0_i32_2 = arith.constant 0 : i32
    return %c0_i32, %c0_i32_0, %c0_i32_1 : i32, i32, i32
  }
  func.func @transform_4(%arg0: i32) -> (i32, i32) {
    %c0_i32 = arith.constant 0 : i32
    %c0_i32_0 = arith.constant 0 : i32
    %c0_i32_1 = arith.constant 0 : i32
    return %c0_i32, %c0_i32_0 : i32, i32
  }
  func.func @transform_5(%arg0: i32) -> (i32, i32, i32) {
    %c0_i32 = arith.constant 0 : i32
    %c0_i32_0 = arith.constant 0 : i32
    %c0_i32_1 = arith.constant 0 : i32
    %c0_i32_2 = arith.constant 0 : i32
    return %c0_i32, %c0_i32_0, %c0_i32_1 : i32, i32, i32
  }
  func.func @transform_6(%arg0: i32) -> (i32, i32, i32) {
    %c0_i32 = arith.constant 0 : i32
    %c0_i32_0 = arith.constant 0 : i32
    %c0_i32_1 = arith.constant 0 : i32
    %c0_i32_2 = arith.constant 0 : i32
    return %c0_i32, %c0_i32_0, %c0_i32_1 : i32, i32, i32
  }
  func.func @transform_7(%arg0: i32) -> (i32, i32, i32) {
    %c0_i32 = arith.constant 0 : i32
    %c0_i32_0 = arith.constant 0 : i32
    %c0_i32_1 = arith.constant 0 : i32
    %c0_i32_2 = arith.constant 0 : i32
    return %c0_i32, %c0_i32_0, %c0_i32_1 : i32, i32, i32
  }
  func.func @transform_8(%arg0: i32) -> (i32, i32) {
    %c0_i32 = arith.constant 0 : i32
    %c0_i32_0 = arith.constant 0 : i32
    %c0_i32_1 = arith.constant 0 : i32
    return %c0_i32, %c0_i32_0 : i32, i32
  }
  func.func @transform_9(%arg0: i32) -> (i32, i32, i32) {
    %c0_i32 = arith.constant 0 : i32
    %c0_i32_0 = arith.constant 0 : i32
    %c0_i32_1 = arith.constant 0 : i32
    %c0_i32_2 = arith.constant 0 : i32
    return %c0_i32, %c0_i32_0, %c0_i32_1 : i32, i32, i32
  }
  func.func @transform_10(%arg0: i32) -> (i32, i32) {
    %c0_i32 = arith.constant 0 : i32
    %c0_i32_0 = arith.constant 0 : i32
    %c0_i32_1 = arith.constant 0 : i32
    return %c0_i32, %c0_i32_0 : i32, i32
  }
  func.func @transform_11(%arg0: i32) -> (i32, i32) {
    %c0_i32 = arith.constant 0 : i32
    %c0_i32_0 = arith.constant 0 : i32
    %c0_i32_1 = arith.constant 0 : i32
    return %c0_i32, %c0_i32_0 : i32, i32
  }
  func.func @transform_12(%arg0: i32) -> (i32, i32) {
    %c0_i32 = arith.constant 0 : i32
    %c0_i32_0 = arith.constant 0 : i32
    return %arg0, %c0_i32 : i32, i32
  }
}

</mosaic_0001>

<llo_original>
// kernel: card_enc_forward.1
$region0: #{card_enc_forward.1}
  #allocation0 [shape = 'u32[]', space=smem, size = 0x4, offset = 0x4, fixed_abs, tag = 'smem constant byte address 0x4 - core index']
  #allocation1 [shape = 'u32[144,128]{1,0:T(1,128)}', space=vmem, size = 0x12000, scoped, tag = 'internal scratch']
  %s0 = inlined_call_operand.vmem [shape: f32[7,16,12], index: 0, kind: input, shape index: {}]
  %s1 = inlined_call_operand.vmem [shape: f32[2,12,36], index: 1, kind: input, shape index: {}]
  %s2 = inlined_call_operand.vmem [shape: f32[2,36], index: 2, kind: input, shape index: {}]
  %s3 = inlined_call_operand.vmem [shape: f32[2,12,12], index: 3, kind: input, shape index: {}]
  %s4 = inlined_call_operand.vmem [shape: f32[2,12], index: 4, kind: input, shape index: {}]
  %s5 = inlined_call_operand.vmem [shape: f32[2,2,12], index: 5, kind: input, shape index: {}]
  %s6 = inlined_call_operand.vmem [shape: f32[2,2,12], index: 6, kind: input, shape index: {}]
  %s7 = inlined_call_operand.vmem [shape: f32[2,12,48], index: 7, kind: input, shape index: {}]
  %s8 = inlined_call_operand.vmem [shape: f32[2,48], index: 8, kind: input, shape index: {}]
  %s9 = inlined_call_operand.vmem [shape: f32[2,48,12], index: 9, kind: input, shape index: {}]
  %s10 = inlined_call_operand.vmem [shape: f32[2,12], index: 10, kind: input, shape index: {}]
  %s11 = inlined_call_operand.vmem [shape: f32[2,12], index: 11, kind: input, shape index: {}]
  %s12 = inlined_call_operand.vmem [shape: f32[16,128], index: 12, kind: output, shape index: {}]
  %s13 = sld [smem:[#allocation0]]
  $region58: #{card_enc_forward.1} parent=0
    _
  %s15 = ssub.s32 1, %s13
  %s16 = scalar_select 0, %s15, %s13
  // Predicated region
  $region2: #{card_enc_forward.1} parent=0 // pred_check
    _
  $region3: #{card_enc_forward.1} parent=0 // pred_check_branch
    %18 = sbr.rel (0) target = $region5
  $region4: #{card_enc_forward.1} parent=0 // pred_region
    _
  $region5: #{card_enc_forward.1} parent=0 // pred_fallthru
    _
  // Predicated region
  $region6: #{card_enc_forward.1} parent=0 // pred_check
    _
  $region7: #{card_enc_forward.1} parent=0 // pred_check_branch
    %20 = sbr.rel (0) target = $region9
  $region8: #{card_enc_forward.1} parent=0 // pred_region
    _
  $region9: #{card_enc_forward.1} parent=0 // pred_fallthru
    _
  // Predicated region
  $region10: #{card_enc_forward.1} parent=0 // pred_check
    _
  $region11: #{card_enc_forward.1} parent=0 // pred_check_branch
    %22 = sbr.rel (0) target = $region13
  $region12: #{card_enc_forward.1} parent=0 // pred_region
    _
  $region13: #{card_enc_forward.1} parent=0 // pred_fallthru
    _
  // Predicated region
  $region14: #{card_enc_forward.1} parent=0 // pred_check
    _
  $region15: #{card_enc_forward.1} parent=0 // pred_check_branch
    %24 = sbr.rel (0) target = $region17
  $region16: #{card_enc_forward.1} parent=0 // pred_region
    _
  $region17: #{card_enc_forward.1} parent=0 // pred_fallthru
    _
  // Predicated region
  $region18: #{card_enc_forward.1} parent=0 // pred_check
    _
  $region19: #{card_enc_forward.1} parent=0 // pred_check_branch
    %26 = sbr.rel (0) target = $region21
  $region20: #{card_enc_forward.1} parent=0 // pred_region
    _
  $region21: #{card_enc_forward.1} parent=0 // pred_fallthru
    _
  // Predicated region
  $region22: #{card_enc_forward.1} parent=0 // pred_check
    _
  $region23: #{card_enc_forward.1} parent=0 // pred_check_branch
    %28 = sbr.rel (0) target = $region25
  $region24: #{card_enc_forward.1} parent=0 // pred_region
    _
  $region25: #{card_enc_forward.1} parent=0 // pred_fallthru
    _
  // Predicated region
  $region26: #{card_enc_forward.1} parent=0 // pred_check
    _
  $region27: #{card_enc_forward.1} parent=0 // pred_check_branch
    %30 = sbr.rel (0) target = $region29
  $region28: #{card_enc_forward.1} parent=0 // pred_region
    _
  $region29: #{card_enc_forward.1} parent=0 // pred_fallthru
    _
  // Predicated region
  $region30: #{card_enc_forward.1} parent=0 // pred_check
    _
  $region31: #{card_enc_forward.1} parent=0 // pred_check_branch
    %32 = sbr.rel (0) target = $region33
  $region32: #{card_enc_forward.1} parent=0 // pred_region
    _
  $region33: #{card_enc_forward.1} parent=0 // pred_fallthru
    _
  // Predicated region
  $region34: #{card_enc_forward.1} parent=0 // pred_check
    _
  $region35: #{card_enc_forward.1} parent=0 // pred_check_branch
    %34 = sbr.rel (0) target = $region37
  $region36: #{card_enc_forward.1} parent=0 // pred_region
    _
  $region37: #{card_enc_forward.1} parent=0 // pred_fallthru
    _
  // Predicated region
  $region38: #{card_enc_forward.1} parent=0 // pred_check
    _
  $region39: #{card_enc_forward.1} parent=0 // pred_check_branch
    %36 = sbr.rel (0) target = $region41
  $region40: #{card_enc_forward.1} parent=0 // pred_region
    _
  $region41: #{card_enc_forward.1} parent=0 // pred_fallthru
    _
  // Predicated region
  $region42: #{card_enc_forward.1} parent=0 // pred_check
    _
  $region43: #{card_enc_forward.1} parent=0 // pred_check_branch
    %38 = sbr.rel (0) target = $region45
  $region44: #{card_enc_forward.1} parent=0 // pred_region
    _
  $region45: #{card_enc_forward.1} parent=0 // pred_fallthru
    _
  // Predicated region
  $region46: #{card_enc_forward.1} parent=0 // pred_check
    _
  $region47: #{card_enc_forward.1} parent=0 // pred_check_branch
    %40 = sbr.rel (0) target = $region49
  $region48: #{card_enc_forward.1} parent=0 // pred_region
    _
  $region49: #{card_enc_forward.1} parent=0 // pred_fallthru
    _
  %v41 = vld [vmem:[%s0] sm:$0xff]
  %v42 = vld [vmem:[%s0 + $0x8] sm:$0xff]
  %v43 = vld [vmem:[%s0 + $0x10] sm:$0xff]
  %v44 = vld [vmem:[%s0 + $0x18] sm:$0xff]
  %v45 = vld [vmem:[%s0 + $0x20] sm:$0xff]
  %v46 = vld [vmem:[%s0 + $0x28] sm:$0xff]
  %v47 = vld [vmem:[%s0 + $0x30] sm:$0xff]
  %v48 = vld [vmem:[%s0 + $0x38] sm:$0xff]
  %v49 = vld [vmem:[%s0 + $0x40] sm:$0xff]
  %v50 = vld [vmem:[%s0 + $0x48] sm:$0xff]
  %v51 = vld [vmem:[%s0 + $0x50] sm:$0xff]
  %v52 = vld [vmem:[%s0 + $0x58] sm:$0xff]
  %v53 = vld [vmem:[%s0 + $0x60] sm:$0xff]
  %v54 = vld [vmem:[%s0 + $0x68] sm:$0xff]
  %v55 = vld [vmem:[%s5] sm:$0x1]
  %v56 = vld [vmem:[%s5 + $0x1] sm:$0x1]
  %vm57 = vcmask 97280
  %v58 = vsel %vm57, %v41, 0.0
  %59 = vadd.xlane.f32.xlu0 %v58
  %v60 = vpop.xlane.xlu0 %59
  %v61 = vsel %vm57, %v42, 0.0
  %62 = vadd.xlane.f32.xlu0 %v61
  %v63 = vpop.xlane.xlu0 %62
  %v64 = vsel %vm57, %v43, 0.0
  %65 = vadd.xlane.f32.xlu0 %v64
  %v66 = vpop.xlane.xlu0 %65
  %v67 = vsel %vm57, %v44, 0.0
  %68 = vadd.xlane.f32.xlu0 %v67
  %v69 = vpop.xlane.xlu0 %68
  %v70 = vsel %vm57, %v45, 0.0
  %71 = vadd.xlane.f32.xlu0 %v70
  %v72 = vpop.xlane.xlu0 %71
  %v73 = vsel %vm57, %v46, 0.0
  %74 = vadd.xlane.f32.xlu0 %v73
  %v75 = vpop.xlane.xlu0 %74
  %v76 = vsel %vm57, %v47, 0.0
  %77 = vadd.xlane.f32.xlu0 %v76
  %v78 = vpop.xlane.xlu0 %77
  %v79 = vsel %vm57, %v48, 0.0
  %80 = vadd.xlane.f32.xlu0 %v79
  %v81 = vpop.xlane.xlu0 %80
  %v82 = vsel %vm57, %v49, 0.0
  %83 = vadd.xlane.f32.xlu0 %v82
  %v84 = vpop.xlane.xlu0 %83
  %v85 = vsel %vm57, %v50, 0.0
  %86 = vadd.xlane.f32.xlu0 %v85
  %v87 = vpop.xlane.xlu0 %86
  %v88 = vsel %vm57, %v51, 0.0
  %89 = vadd.xlane.f32.xlu0 %v88
  %v90 = vpop.xlane.xlu0 %89
  %v91 = vsel %vm57, %v52, 0.0
  %92 = vadd.xlane.f32.xlu0 %v91
  %v93 = vpop.xlane.xlu0 %92
  %v94 = vsel %vm57, %v53, 0.0
  %95 = vadd.xlane.f32.xlu0 %v94
  %v96 = vpop.xlane.xlu0 %95
  %v97 = vsel %vm57, %v54, 0.0
  %98 = vadd.xlane.f32.xlu0 %v97
  %v99 = vpop.xlane.xlu0 %98
  %v100 = vrcp.pop 12.0
  %v101 = vmul.f32 %v60, %v100
  %v102 = vmul.f32 %v63, %v100
  %v103 = vmul.f32 %v66, %v100
  %v104 = vmul.f32 %v69, %v100
  %v105 = vmul.f32 %v72, %v100
  %v106 = vmul.f32 %v75, %v100
  %v107 = vmul.f32 %v78, %v100
  %v108 = vmul.f32 %v81, %v100
  %v109 = vmul.f32 %v84, %v100
  %v110 = vmul.f32 %v87, %v100
  %v111 = vmul.f32 %v90, %v100
  %v112 = vmul.f32 %v93, %v100
  %v113 = vmul.f32 %v96, %v100
  %v114 = vmul.f32 %v99, %v100
  %v115 = vsub.f32 %v41, %v101
  %v116 = vsub.f32 %v42, %v102
  %v117 = vsub.f32 %v43, %v103
  %v118 = vsub.f32 %v44, %v104
  %v119 = vsub.f32 %v45, %v105
  %v120 = vsub.f32 %v46, %v106
  %v121 = vsub.f32 %v47, %v107
  %v122 = vsub.f32 %v48, %v108
  %v123 = vsub.f32 %v49, %v109
  %v124 = vsub.f32 %v50, %v110
  %v125 = vsub.f32 %v51, %v111
  %v126 = vsub.f32 %v52, %v112
  %v127 = vsub.f32 %v53, %v113
  %v128 = vsub.f32 %v54, %v114
  %v129 = vmul.f32 %v115, %v115
  %v130 = vmul.f32 %v116, %v116
  %v131 = vmul.f32 %v117, %v117
  %v132 = vmul.f32 %v118, %v118
  %v133 = vmul.f32 %v119, %v119
  %v134 = vmul.f32 %v120, %v120
  %v135 = vmul.f32 %v121, %v121
  %v136 = vmul.f32 %v122, %v122
  %v137 = vmul.f32 %v123, %v123
  %v138 = vmul.f32 %v124, %v124
  %v139 = vmul.f32 %v125, %v125
  %v140 = vmul.f32 %v126, %v126
  %v141 = vmul.f32 %v127, %v127
  %v142 = vmul.f32 %v128, %v128
  %v143 = vsel %vm57, %v129, 0.0
  %144 = vadd.xlane.f32.xlu0 %v143
  %v145 = vpop.xlane.xlu0 %144
  %v146 = vsel %vm57, %v130, 0.0
  %147 = vadd.xlane.f32.xlu0 %v146
  %v148 = vpop.xlane.xlu0 %147
  %v149 = vsel %vm57, %v131, 0.0
  %150 = vadd.xlane.f32.xlu0 %v149
  %v151 = vpop.xlane.xlu0 %150
  %v152 = vsel %vm57, %v132, 0.0
  %153 = vadd.xlane.f32.xlu0 %v152
  %v154 = vpop.xlane.xlu0 %153
  %v155 = vsel %vm57, %v133, 0.0
  %156 = vadd.xlane.f32.xlu0 %v155
  %v157 = vpop.xlane.xlu0 %156
  %v158 = vsel %vm57, %v134, 0.0
  %159 = vadd.xlane.f32.xlu0 %v158
  %v160 = vpop.xlane.xlu0 %159
  %v161 = vsel %vm57, %v135, 0.0
  %162 = vadd.xlane.f32.xlu0 %v161
  %v163 = vpop.xlane.xlu0 %162
  %v164 = vsel %vm57, %v136, 0.0
  %165 = vadd.xlane.f32.xlu0 %v164
  %v166 = vpop.xlane.xlu0 %165
  %v167 = vsel %vm57, %v137, 0.0
  %168 = vadd.xlane.f32.xlu0 %v167
  %v169 = vpop.xlane.xlu0 %168
  %v170 = vsel %vm57, %v138, 0.0
  %171 = vadd.xlane.f32.xlu0 %v170
  %v172 = vpop.xlane.xlu0 %171
  %v173 = vsel %vm57, %v139, 0.0
  %174 = vadd.xlane.f32.xlu0 %v173
  %v175 = vpop.xlane.xlu0 %174
  %v176 = vsel %vm57, %v140, 0.0
  %177 = vadd.xlane.f32.xlu0 %v176
  %v178 = vpop.xlane.xlu0 %177
  %v179 = vsel %vm57, %v141, 0.0
  %180 = vadd.xlane.f32.xlu0 %v179
  %v181 = vpop.xlane.xlu0 %180
  %v182 = vsel %vm57, %v142, 0.0
  %183 = vadd.xlane.f32.xlu0 %v182
  %v184 = vpop.xlane.xlu0 %183
  %v185 = vmul.f32 %v145, %v100
  %v186 = vmul.f32 %v148, %v100
  %v187 = vmul.f32 %v151, %v100
  %v188 = vmul.f32 %v154, %v100
  %v189 = vmul.f32 %v157, %v100
  %v190 = vmul.f32 %v160, %v100
  %v191 = vmul.f32 %v163, %v100
  %v192 = vmul.f32 %v166, %v100
  %v193 = vmul.f32 %v169, %v100
  %v194 = vmul.f32 %v172, %v100
  %v195 = vmul.f32 %v175, %v100
  %v196 = vmul.f32 %v178, %v100
  %v197 = vmul.f32 %v181, %v100
  %v198 = vmul.f32 %v184, %v100
  %v199 = vadd.f32 %v185, 1e-05
  %v200 = vadd.f32 %v186, 1e-05
  %v201 = vadd.f32 %v187, 1e-05
  %v202 = vadd.f32 %v188, 1e-05
  %v203 = vadd.f32 %v189, 1e-05
  %v204 = vadd.f32 %v190, 1e-05
  %v205 = vadd.f32 %v191, 1e-05
  %v206 = vadd.f32 %v192, 1e-05
  %v207 = vadd.f32 %v193, 1e-05
  %v208 = vadd.f32 %v194, 1e-05
  %v209 = vadd.f32 %v195, 1e-05
  %v210 = vadd.f32 %v196, 1e-05
  %v211 = vadd.f32 %v197, 1e-05
  %v212 = vadd.f32 %v198, 1e-05
  %v213 = vrsqrt.pop %v199
  %v214 = vrsqrt.pop %v200
  %v215 = vrsqrt.pop %v201
  %v216 = vrsqrt.pop %v202
  %v217 = vrsqrt.pop %v203
  %v218 = vrsqrt.pop %v204
  %v219 = vrsqrt.pop %v205
  %v220 = vrsqrt.pop %v206
  %v221 = vrsqrt.pop %v207
  %v222 = vrsqrt.pop %v208
  %v223 = vrsqrt.pop %v209
  %v224 = vrsqrt.pop %v210
  %v225 = vrsqrt.pop %v211
  %v226 = vrsqrt.pop %v212
  %v227 = vmul.f32 %v115, %v213
  %v228 = vmul.f32 %v116, %v214
  %v229 = vmul.f32 %v117, %v215
  %v230 = vmul.f32 %v118, %v216
  %v231 = vmul.f32 %v119, %v217
  %v232 = vmul.f32 %v120, %v218
  %v233 = vmul.f32 %v121, %v219
  %v234 = vmul.f32 %v122, %v220
  %v235 = vmul.f32 %v123, %v221
  %v236 = vmul.f32 %v124, %v222
  %v237 = vmul.f32 %v125, %v223
  %v238 = vmul.f32 %v126, %v224
  %v239 = vmul.f32 %v127, %v225
  %v240 = vmul.f32 %v128, %v226
  %v241 = vlaneseq
  %v242 = vshrl.u32 %v241, 7
  %v243 = vsub.s32 0, %v242
  %v244 = vrot.slane %v55, %v243
  %v245 = vmul.f32 %v227, %v244
  %v246 = vmul.f32 %v228, %v244
  %v247 = vmul.f32 %v229, %v244
  %v248 = vmul.f32 %v230, %v244
  %v249 = vmul.f32 %v231, %v244
  %v250 = vmul.f32 %v232, %v244
  %v251 = vmul.f32 %v233, %v244
  %v252 = vmul.f32 %v234, %v244
  %v253 = vmul.f32 %v235, %v244
  %v254 = vmul.f32 %v236, %v244
  %v255 = vmul.f32 %v237, %v244
  %v256 = vmul.f32 %v238, %v244
  %v257 = vmul.f32 %v239, %v244
  %v258 = vmul.f32 %v240, %v244
  %v259 = vlaneseq
  %v260 = vshrl.u32 %v259, 7
  %v261 = vsub.s32 0, %v260
  %v262 = vrot.slane %v56, %v261
  %v263 = vadd.f32 %v245, %v262
  %v264 = vadd.f32 %v246, %v262
  %v265 = vadd.f32 %v247, %v262
  %v266 = vadd.f32 %v248, %v262
  %v267 = vadd.f32 %v249, %v262
  %v268 = vadd.f32 %v250, %v262
  %v269 = vadd.f32 %v251, %v262
  %v270 = vadd.f32 %v252, %v262
  %v271 = vadd.f32 %v253, %v262
  %v272 = vadd.f32 %v254, %v262
  %v273 = vadd.f32 %v255, %v262
  %v274 = vadd.f32 %v256, %v262
  %v275 = vadd.f32 %v257, %v262
  %v276 = vadd.f32 %v258, %v262
  %v277 = vld [vmem:[%s1] sm:$0xff]
  %v278 = vld [vmem:[%s1 + $0x8] sm:$0xf]
  %v279 = vld [vmem:[%s2] sm:$0x1]
  %v280 = vlaneseq
  %v281 = vshrl.u32 %v280, 7
  %v282 = vsub.s32 0, %v281
  %v283 = vrot.slane %v279, %v282
  %v285 = vsel %vm57, %v263, 0
  %v288 = vsel %vm57, %v264, 0
  %v291 = vsel %vm57, %v265, 0
  %v294 = vsel %vm57, %v266, 0
  %v297 = vsel %vm57, %v267, 0
  %v300 = vsel %vm57, %v268, 0
  %v303 = vsel %vm57, %v269, 0
  %v306 = vsel %vm57, %v270, 0
  %v309 = vsel %vm57, %v271, 0
  %v312 = vsel %vm57, %v272, 0
  %v315 = vsel %vm57, %v273, 0
  %v318 = vsel %vm57, %v274, 0
  %v321 = vsel %vm57, %v275, 0
  %v324 = vsel %vm57, %v276, 0
  %vm326 = vcmask 1043456
  %v328 = vsel %vm326, %v278, 0
  %330 = vmatprep.subr.mxu0 0.0
  %331 = vmatpush1.msra.mxu0 %v277
  %332 = vmatprep.subr.mxu0 0.0
  %333 = vmatpush1.msra.mxu0 %v328
  %334 = vmatprep.subr.mxu0 0.0
  %335 = vmatpush1.msra.mxu0 0.0
  %336 = vmatprep.subr.mxu0 0.0
  %337 = vmatpush1.msra.mxu0 0.0
  %338 = vmatprep.subr.mxu0 0.0
  %339 = vmatpush1.msra.mxu0 0.0
  %340 = vmatprep.subr.mxu0 0.0
  %341 = vmatpush1.msra.mxu0 0.0
  %342 = vmatprep.subr.mxu0 0.0
  %343 = vmatpush1.msra.mxu0 0.0
  %344 = vmatprep.subr.mxu0 0.0
  %345 = vmatpush1.msra.mxu0 0.0
  %346 = vmatprep.subr.mxu0 0.0
  %347 = vmatpush1.msra.mxu0 0.0
  %348 = vmatprep.subr.mxu0 0.0
  %349 = vmatpush1.msra.mxu0 0.0
  %350 = vmatprep.subr.mxu0 0.0
  %351 = vmatpush1.msra.mxu0 0.0
  %352 = vmatprep.subr.mxu0 0.0
  %353 = vmatpush1.msra.mxu0 0.0
  %354 = vmatprep.subr.mxu0 0.0
  %355 = vmatpush1.msra.mxu0 0.0
  %356 = vmatprep.subr.mxu0 0.0
  %357 = vmatpush1.msra.mxu0 0.0
  %358 = vmatprep.subr.mxu0 0.0
  %359 = vmatpush1.msra.mxu0 0.0
  %360 = vmatprep.subr.mxu0 0.0
  %361 = vmatpush1.msra.mxu0 0.0
  %362 = vmatprep.subr.mxu0 0.0
  %363 = vmatpush1.msra.mxu0 0.0
  %364 = vmatprep.subr.mxu0 0.0
  %365 = vmatpush1.msra.mxu0 0.0
  %366 = vmatprep.subr.mxu0 0.0
  %367 = vmatpush1.msra.mxu0 0.0
  %368 = vmatprep.subr.mxu0 0.0
  %369 = vmatpush1.msra.mxu0 0.0
  %370 = vmatprep.subr.mxu0 0.0
  %371 = vmatpush1.msra.mxu0 0.0
  %372 = vmatprep.subr.mxu0 0.0
  %373 = vmatpush1.msra.mxu0 0.0
  %374 = vmatprep.subr.mxu0 0.0
  %375 = vmatpush1.msra.mxu0 0.0
  %376 = vmatprep.subr.mxu0 0.0
  %377 = vmatpush1.msra.mxu0 0.0
  %378 = vmatprep.subr.mxu0 0.0
  %379 = vmatpush1.msra.mxu0 0.0
  %380 = vmatprep.subr.mxu0 0.0
  %381 = vmatpush1.msra.mxu0 0.0
  %382 = vmatprep.subr.mxu0 0.0
  %383 = vmatpush1.msra.mxu0 0.0
  %384 = vmatprep.subr.mxu0 0.0
  %385 = vmatpush1.msra.mxu0 0.0
  %386 = vmatprep.subr.mxu0 0.0
  %387 = vmatpush1.msra.mxu0 0.0
  %388 = vmatprep.subr.mxu0 0.0
  %389 = vmatpush1.msra.mxu0 0.0
  %390 = vmatprep.subr.mxu0 0.0
  %391 = vmatpush1.msra.mxu0 0.0
  %392 = vmatprep.subr.mxu0 0.0
  %393 = vmatpush1.msra.mxu0 0.0
  %394 = vmatprep.mubr.f32.mxu0 0.0
  %395 = vmatmul.mubr.f32.gmra.mrb[0].mxu0 %v285
  %v396 = vpop.f32.mrb[0].mxu0
  %v397 = vadd.f32 %v283, %v396
  %v398 = vpop.f32.mrb[0].mxu0
  %399 = vmatprep.mubr.f32.mxu0 0.0
  %400 = vmatmul.mubr.f32.gmra.mrb[0].mxu0 %v288
  %v401 = vpop.f32.mrb[0].mxu0
  %v402 = vadd.f32 %v283, %v401
  %v403 = vpop.f32.mrb[0].mxu0
  %404 = vmatprep.mubr.f32.mxu0 0.0
  %405 = vmatmul.mubr.f32.gmra.mrb[0].mxu0 %v291
  %v406 = vpop.f32.mrb[0].mxu0
  %v407 = vadd.f32 %v283, %v406
  %v408 = vpop.f32.mrb[0].mxu0
  %409 = vmatprep.mubr.f32.mxu0 0.0
  %410 = vmatmul.mubr.f32.gmra.mrb[0].mxu0 %v294
  %v411 = vpop.f32.mrb[0].mxu0
  %v412 = vadd.f32 %v283, %v411
  %v413 = vpop.f32.mrb[0].mxu0
  %414 = vmatprep.mubr.f32.mxu0 0.0
  %415 = vmatmul.mubr.f32.gmra.mrb[0].mxu0 %v297
  %v416 = vpop.f32.mrb[0].mxu0
  %v417 = vadd.f32 %v283, %v416
  %v418 = vpop.f32.mrb[0].mxu0
  %419 = vmatprep.mubr.f32.mxu0 0.0
  %420 = vmatmul.mubr.f32.gmra.mrb[0].mxu0 %v300
  %v421 = vpop.f32.mrb[0].mxu0
  %v422 = vadd.f32 %v283, %v421
  %v423 = vpop.f32.mrb[0].mxu0
  %424 = vmatprep.mubr.f32.mxu0 0.0
  %425 = vmatmul.mubr.f32.gmra.mrb[0].mxu0 %v303
  %v426 = vpop.f32.mrb[0].mxu0
  %v427 = vadd.f32 %v283, %v426
  %v428 = vpop.f32.mrb[0].mxu0
  %429 = vmatprep.mubr.f32.mxu0 0.0
  %430 = vmatmul.mubr.f32.gmra.mrb[0].mxu0 %v306
  %v431 = vpop.f32.mrb[0].mxu0
  %v432 = vadd.f32 %v283, %v431
  %v433 = vpop.f32.mrb[0].mxu0
  %434 = vmatprep.mubr.f32.mxu0 0.0
  %435 = vmatmul.mubr.f32.gmra.mrb[0].mxu0 %v309
  %v436 = vpop.f32.mrb[0].mxu0
  %v437 = vadd.f32 %v283, %v436
  %v438 = vpop.f32.mrb[0].mxu0
  %439 = vmatprep.mubr.f32.mxu0 0.0
  %440 = vmatmul.mubr.f32.gmra.mrb[0].mxu0 %v312
  %v441 = vpop.f32.mrb[0].mxu0
  %v442 = vadd.f32 %v283, %v441
  %v443 = vpop.f32.mrb[0].mxu0
  %444 = vmatprep.mubr.f32.mxu0 0.0
  %445 = vmatmul.mubr.f32.gmra.mrb[0].mxu0 %v315
  %v446 = vpop.f32.mrb[0].mxu0
  %v447 = vadd.f32 %v283, %v446
  %v448 = vpop.f32.mrb[0].mxu0
  %449 = vmatprep.mubr.f32.mxu0 0.0
  %450 = vmatmul.mubr.f32.gmra.mrb[0].mxu0 %v318
  %v451 = vpop.f32.mrb[0].mxu0
  %v452 = vadd.f32 %v283, %v451
  %v453 = vpop.f32.mrb[0].mxu0
  %454 = vmatprep.mubr.f32.mxu0 0.0
  %455 = vmatmul.mubr.f32.gmra.mrb[0].mxu0 %v321
  %v456 = vpop.f32.mrb[0].mxu0
  %v457 = vadd.f32 %v283, %v456
  %v458 = vpop.f32.mrb[0].mxu0
  %459 = vmatprep.mubr.f32.mxu0 0.0
  %460 = vmatmul.mubr.f32.gmra.mrb[0].mxu0 %v324
  %v461 = vpop.f32.mrb[0].mxu0
  %v462 = vadd.f32 %v283, %v461
  %v463 = vpop.f32.mrb[0].mxu0
  %464 = vdwg.mxu0
  %479 = vrot.lane.b32.xlu0 %v397, 116
  %v480 = vpop.permute.xlu0 %479
  %481 = vrot.lane.b32.xlu0 %v402, 116
  %v482 = vpop.permute.xlu0 %481
  %483 = vrot.lane.b32.xlu0 %v407, 116
  %v484 = vpop.permute.xlu0 %483
  %485 = vrot.lane.b32.xlu0 %v412, 116
  %v486 = vpop.permute.xlu0 %485
  %487 = vrot.lane.b32.xlu0 %v417, 116
  %v488 = vpop.permute.xlu0 %487
  %489 = vrot.lane.b32.xlu0 %v422, 116
  %v490 = vpop.permute.xlu0 %489
  %491 = vrot.lane.b32.xlu0 %v427, 116
  %v492 = vpop.permute.xlu0 %491
  %493 = vrot.lane.b32.xlu0 %v432, 116
  %v494 = vpop.permute.xlu0 %493
  %495 = vrot.lane.b32.xlu0 %v437, 116
  %v496 = vpop.permute.xlu0 %495
  %497 = vrot.lane.b32.xlu0 %v442, 116
  %v498 = vpop.permute.xlu0 %497
  %499 = vrot.lane.b32.xlu0 %v447, 116
  %v500 = vpop.permute.xlu0 %499
  %501 = vrot.lane.b32.xlu0 %v452, 116
  %v502 = vpop.permute.xlu0 %501
  %503 = vrot.lane.b32.xlu0 %v457, 116
  %v504 = vpop.permute.xlu0 %503
  %505 = vrot.lane.b32.xlu0 %v462, 116
  %v506 = vpop.permute.xlu0 %505
  %v521 = vmul.f32 %v397, %v480
  %v522 = vmul.f32 %v402, %v482
  %v523 = vmul.f32 %v397, %v484
  %v524 = vmul.f32 %v402, %v486
  %v525 = vmul.f32 %v397, %v488
  %v526 = vmul.f32 %v402, %v490
  %v527 = vmul.f32 %v397, %v492
  %v528 = vmul.f32 %v402, %v494
  %v529 = vmul.f32 %v397, %v496
  %v530 = vmul.f32 %v402, %v498
  %v531 = vmul.f32 %v397, %v500
  %v532 = vmul.f32 %v402, %v502
  %v533 = vmul.f32 %v397, %v504
  %v534 = vmul.f32 %v402, %v506
  %v535 = vmul.f32 %v407, %v480
  %v536 = vmul.f32 %v412, %v482
  %v537 = vmul.f32 %v407, %v484
  %v538 = vmul.f32 %v412, %v486
  %v539 = vmul.f32 %v407, %v488
  %v540 = vmul.f32 %v412, %v490
  %v541 = vmul.f32 %v407, %v492
  %v542 = vmul.f32 %v412, %v494
  %v543 = vmul.f32 %v407, %v496
  %v544 = vmul.f32 %v412, %v498
  %v545 = vmul.f32 %v407, %v500
  %v546 = vmul.f32 %v412, %v502
  %v547 = vmul.f32 %v407, %v504
  %v548 = vmul.f32 %v412, %v506
  %v549 = vmul.f32 %v417, %v480
  %v550 = vmul.f32 %v422, %v482
  %v551 = vmul.f32 %v417, %v484
  %v552 = vmul.f32 %v422, %v486
  %v553 = vmul.f32 %v417, %v488
  %v554 = vmul.f32 %v422, %v490
  %v555 = vmul.f32 %v417, %v492
  %v556 = vmul.f32 %v422, %v494
  %v557 = vmul.f32 %v417, %v496
  %v558 = vmul.f32 %v422, %v498
  %v559 = vmul.f32 %v417, %v500
  %v560 = vmul.f32 %v422, %v502
  %v561 = vmul.f32 %v417, %v504
  %v562 = vmul.f32 %v422, %v506
  %v563 = vmul.f32 %v427, %v480
  %v564 = vmul.f32 %v432, %v482
  %v565 = vmul.f32 %v427, %v484
  %v566 = vmul.f32 %v432, %v486
  %v567 = vmul.f32 %v427, %v488
  %v568 = vmul.f32 %v432, %v490
  %v569 = vmul.f32 %v427, %v492
  %v570 = vmul.f32 %v432, %v494
  %v571 = vmul.f32 %v427, %v496
  %v572 = vmul.f32 %v432, %v498
  %v573 = vmul.f32 %v427, %v500
  %v574 = vmul.f32 %v432, %v502
  %v575 = vmul.f32 %v427, %v504
  %v576 = vmul.f32 %v432, %v506
  %v577 = vmul.f32 %v437, %v480
  %v578 = vmul.f32 %v442, %v482
  %v579 = vmul.f32 %v437, %v484
  %v580 = vmul.f32 %v442, %v486
  %v581 = vmul.f32 %v437, %v488
  %v582 = vmul.f32 %v442, %v490
  %v583 = vmul.f32 %v437, %v492
  %v584 = vmul.f32 %v442, %v494
  %v585 = vmul.f32 %v437, %v496
  %v586 = vmul.f32 %v442, %v498
  %v587 = vmul.f32 %v437, %v500
  %v588 = vmul.f32 %v442, %v502
  %v589 = vmul.f32 %v437, %v504
  %v590 = vmul.f32 %v442, %v506
  %v591 = vmul.f32 %v447, %v480
  %v592 = vmul.f32 %v452, %v482
  %v593 = vmul.f32 %v447, %v484
  %v594 = vmul.f32 %v452, %v486
  %v595 = vmul.f32 %v447, %v488
  %v596 = vmul.f32 %v452, %v490
  %v597 = vmul.f32 %v447, %v492
  %v598 = vmul.f32 %v452, %v494
  %v599 = vmul.f32 %v447, %v496
  %v600 = vmul.f32 %v452, %v498
  %v601 = vmul.f32 %v447, %v500
  %v602 = vmul.f32 %v452, %v502
  %v603 = vmul.f32 %v447, %v504
  %v604 = vmul.f32 %v452, %v506
  %v605 = vmul.f32 %v457, %v480
  %v606 = vmul.f32 %v462, %v482
  %v607 = vmul.f32 %v457, %v484
  %v608 = vmul.f32 %v462, %v486
  %v609 = vmul.f32 %v457, %v488
  %v610 = vmul.f32 %v462, %v490
  %v611 = vmul.f32 %v457, %v492
  %v612 = vmul.f32 %v462, %v494
  %v613 = vmul.f32 %v457, %v496
  %v614 = vmul.f32 %v462, %v498
  %v615 = vmul.f32 %v457, %v500
  %v616 = vmul.f32 %v462, %v502
  %v617 = vmul.f32 %v457, %v504
  %v618 = vmul.f32 %v462, %v506
  %v619 = vsel %vm57, %v521, 0.0
  %620 = vadd.xlane.f32.xlu0 %v619
  %v621 = vpop.xlane.xlu0 %620
  %v622 = vsel %vm57, %v522, 0.0
  %623 = vadd.xlane.f32.xlu0 %v622
  %v624 = vpop.xlane.xlu0 %623
  %v625 = vsel %vm57, %v523, 0.0
  %626 = vadd.xlane.f32.xlu0 %v625
  %v627 = vpop.xlane.xlu0 %626
  %v628 = vsel %vm57, %v524, 0.0
  %629 = vadd.xlane.f32.xlu0 %v628
  %v630 = vpop.xlane.xlu0 %629
  %v631 = vsel %vm57, %v525, 0.0
  %632 = vadd.xlane.f32.xlu0 %v631
  %v633 = vpop.xlane.xlu0 %632
  %v634 = vsel %vm57, %v526, 0.0
  %635 = vadd.xlane.f32.xlu0 %v634
  %v636 = vpop.xlane.xlu0 %635
  %v637 = vsel %vm57, %v527, 0.0
  %638 = vadd.xlane.f32.xlu0 %v637
  %v639 = vpop.xlane.xlu0 %638
  %v640 = vsel %vm57, %v528, 0.0
  %641 = vadd.xlane.f32.xlu0 %v640
  %v642 = vpop.xlane.xlu0 %641
  %v643 = vsel %vm57, %v529, 0.0
  %644 = vadd.xlane.f32.xlu0 %v643
  %v645 = vpop.xlane.xlu0 %644
  %v646 = vsel %vm57, %v530, 0.0
  %647 = vadd.xlane.f32.xlu0 %v646
  %v648 = vpop.xlane.xlu0 %647
  %v649 = vsel %vm57, %v531, 0.0
  %650 = vadd.xlane.f32.xlu0 %v649
  %v651 = vpop.xlane.xlu0 %650
  %v652 = vsel %vm57, %v532, 0.0
  %653 = vadd.xlane.f32.xlu0 %v652
  %v654 = vpop.xlane.xlu0 %653
  %v655 = vsel %vm57, %v533, 0.0
  %656 = vadd.xlane.f32.xlu0 %v655
  %v657 = vpop.xlane.xlu0 %656
  %v658 = vsel %vm57, %v534, 0.0
  %659 = vadd.xlane.f32.xlu0 %v658
  %v660 = vpop.xlane.xlu0 %659
  %v661 = vsel %vm57, %v535, 0.0
  %662 = vadd.xlane.f32.xlu0 %v661
  %v663 = vpop.xlane.xlu0 %662
  %v664 = vsel %vm57, %v536, 0.0
  %665 = vadd.xlane.f32.xlu0 %v664
  %v666 = vpop.xlane.xlu0 %665
  %v667 = vsel %vm57, %v537, 0.0
  %668 = vadd.xlane.f32.xlu0 %v667
  %v669 = vpop.xlane.xlu0 %668
  %v670 = vsel %vm57, %v538, 0.0
  %671 = vadd.xlane.f32.xlu0 %v670
  %v672 = vpop.xlane.xlu0 %671
  %v673 = vsel %vm57, %v539, 0.0
  %674 = vadd.xlane.f32.xlu0 %v673
  %v675 = vpop.xlane.xlu0 %674
  %v676 = vsel %vm57, %v540, 0.0
  %677 = vadd.xlane.f32.xlu0 %v676
  %v678 = vpop.xlane.xlu0 %677
  %v679 = vsel %vm57, %v541, 0.0
  %680 = vadd.xlane.f32.xlu0 %v679
  %v681 = vpop.xlane.xlu0 %680
  %v682 = vsel %vm57, %v542, 0.0
  %683 = vadd.xlane.f32.xlu0 %v682
  %v684 = vpop.xlane.xlu0 %683
  %v685 = vsel %vm57, %v543, 0.0
  %686 = vadd.xlane.f32.xlu0 %v685
  %v687 = vpop.xlane.xlu0 %686
  %v688 = vsel %vm57, %v544, 0.0
  %689 = vadd.xlane.f32.xlu0 %v688
  %v690 = vpop.xlane.xlu0 %689
  %v691 = vsel %vm57, %v545, 0.0
  %692 = vadd.xlane.f32.xlu0 %v691
  %v693 = vpop.xlane.xlu0 %692
  %v694 = vsel %vm57, %v546, 0.0
  %695 = vadd.xlane.f32.xlu0 %v694
  %v696 = vpop.xlane.xlu0 %695
  %v697 = vsel %vm57, %v547, 0.0
  %698 = vadd.xlane.f32.xlu0 %v697
  %v699 = vpop.xlane.xlu0 %698
  %v700 = vsel %vm57, %v548, 0.0
  %701 = vadd.xlane.f32.xlu0 %v700
  %v702 = vpop.xlane.xlu0 %701
  %v703 = vsel %vm57, %v549, 0.0
  %704 = vadd.xlane.f32.xlu0 %v703
  %v705 = vpop.xlane.xlu0 %704
  %v706 = vsel %vm57, %v550, 0.0
  %707 = vadd.xlane.f32.xlu0 %v706
  %v708 = vpop.xlane.xlu0 %707
  %v709 = vsel %vm57, %v551, 0.0
  %710 = vadd.xlane.f32.xlu0 %v709
  %v711 = vpop.xlane.xlu0 %710
  %v712 = vsel %vm57, %v552, 0.0
  %713 = vadd.xlane.f32.xlu0 %v712
  %v714 = vpop.xlane.xlu0 %713
  %v715 = vsel %vm57, %v553, 0.0
  %716 = vadd.xlane.f32.xlu0 %v715
  %v717 = vpop.xlane.xlu0 %716
  %v718 = vsel %vm57, %v554, 0.0
  %719 = vadd.xlane.f32.xlu0 %v718
  %v720 = vpop.xlane.xlu0 %719
  %v721 = vsel %vm57, %v555, 0.0
  %722 = vadd.xlane.f32.xlu0 %v721
  %v723 = vpop.xlane.xlu0 %722
  %v724 = vsel %vm57, %v556, 0.0
  %725 = vadd.xlane.f32.xlu0 %v724
  %v726 = vpop.xlane.xlu0 %725
  %v727 = vsel %vm57, %v557, 0.0
  %728 = vadd.xlane.f32.xlu0 %v727
  %v729 = vpop.xlane.xlu0 %728
  %v730 = vsel %vm57, %v558, 0.0
  %731 = vadd.xlane.f32.xlu0 %v730
  %v732 = vpop.xlane.xlu0 %731
  %v733 = vsel %vm57, %v559, 0.0
  %734 = vadd.xlane.f32.xlu0 %v733
  %v735 = vpop.xlane.xlu0 %734
  %v736 = vsel %vm57, %v560, 0.0
  %737 = vadd.xlane.f32.xlu0 %v736
  %v738 = vpop.xlane.xlu0 %737
  %v739 = vsel %vm57, %v561, 0.0
  %740 = vadd.xlane.f32.xlu0 %v739
  %v741 = vpop.xlane.xlu0 %740
  %v742 = vsel %vm57, %v562, 0.0
  %743 = vadd.xlane.f32.xlu0 %v742
  %v744 = vpop.xlane.xlu0 %743
  %v745 = vsel %vm57, %v563, 0.0
  %746 = vadd.xlane.f32.xlu0 %v745
  %v747 = vpop.xlane.xlu0 %746
  %v748 = vsel %vm57, %v564, 0.0
  %749 = vadd.xlane.f32.xlu0 %v748
  %v750 = vpop.xlane.xlu0 %749
  %v751 = vsel %vm57, %v565, 0.0
  %752 = vadd.xlane.f32.xlu0 %v751
  %v753 = vpop.xlane.xlu0 %752
  %v754 = vsel %vm57, %v566, 0.0
  %755 = vadd.xlane.f32.xlu0 %v754
  %v756 = vpop.xlane.xlu0 %755
  %v757 = vsel %vm57, %v567, 0.0
  %758 = vadd.xlane.f32.xlu0 %v757
  %v759 = vpop.xlane.xlu0 %758
  %v760 = vsel %vm57, %v568, 0.0
  %761 = vadd.xlane.f32.xlu0 %v760
  %v762 = vpop.xlane.xlu0 %761
  %v763 = vsel %vm57, %v569, 0.0
  %764 = vadd.xlane.f32.xlu0 %v763
  %v765 = vpop.xlane.xlu0 %764
  %v766 = vsel %vm57, %v570, 0.0
  %767 = vadd.xlane.f32.xlu0 %v766
  %v768 = vpop.xlane.xlu0 %767
  %v769 = vsel %vm57, %v571, 0.0
  %770 = vadd.xlane.f32.xlu0 %v769
  %v771 = vpop.xlane.xlu0 %770
  %v772 = vsel %vm57, %v572, 0.0
  %773 = vadd.xlane.f32.xlu0 %v772
  %v774 = vpop.xlane.xlu0 %773
  %v775 = vsel %vm57, %v573, 0.0
  %776 = vadd.xlane.f32.xlu0 %v775
  %v777 = vpop.xlane.xlu0 %776
  %v778 = vsel %vm57, %v574, 0.0
  %779 = vadd.xlane.f32.xlu0 %v778
  %v780 = vpop.xlane.xlu0 %779
  %v781 = vsel %vm57, %v575, 0.0
  %782 = vadd.xlane.f32.xlu0 %v781
  %v783 = vpop.xlane.xlu0 %782
  %v784 = vsel %vm57, %v576, 0.0
  %785 = vadd.xlane.f32.xlu0 %v784
  %v786 = vpop.xlane.xlu0 %785
  %v787 = vsel %vm57, %v577, 0.0
  %788 = vadd.xlane.f32.xlu0 %v787
  %v789 = vpop.xlane.xlu0 %788
  %v790 = vsel %vm57, %v578, 0.0
  %791 = vadd.xlane.f32.xlu0 %v790
  %v792 = vpop.xlane.xlu0 %791
  %v793 = vsel %vm57, %v579, 0.0
  %794 = vadd.xlane.f32.xlu0 %v793
  %v795 = vpop.xlane.xlu0 %794
  %v796 = vsel %vm57, %v580, 0.0
  %797 = vadd.xlane.f32.xlu0 %v796
  %v798 = vpop.xlane.xlu0 %797
  %v799 = vsel %vm57, %v581, 0.0
  %800 = vadd.xlane.f32.xlu0 %v799
  %v801 = vpop.xlane.xlu0 %800
  %v802 = vsel %vm57, %v582, 0.0
  %803 = vadd.xlane.f32.xlu0 %v802
  %v804 = vpop.xlane.xlu0 %803
  %v805 = vsel %vm57, %v583, 0.0
  %806 = vadd.xlane.f32.xlu0 %v805
  %v807 = vpop.xlane.xlu0 %806
  %v808 = vsel %vm57, %v584, 0.0
  %809 = vadd.xlane.f32.xlu0 %v808
  %v810 = vpop.xlane.xlu0 %809
  %v811 = vsel %vm57, %v585, 0.0
  %812 = vadd.xlane.f32.xlu0 %v811
  %v813 = vpop.xlane.xlu0 %812
  %v814 = vsel %vm57, %v586, 0.0
  %815 = vadd.xlane.f32.xlu0 %v814
  %v816 = vpop.xlane.xlu0 %815
  %v817 = vsel %vm57, %v587, 0.0
  %818 = vadd.xlane.f32.xlu0 %v817
  %v819 = vpop.xlane.xlu0 %818
  %v820 = vsel %vm57, %v588, 0.0
  %821 = vadd.xlane.f32.xlu0 %v820
  %v822 = vpop.xlane.xlu0 %821
  %v823 = vsel %vm57, %v589, 0.0
  %824 = vadd.xlane.f32.xlu0 %v823
  %v825 = vpop.xlane.xlu0 %824
  %v826 = vsel %vm57, %v590, 0.0
  %827 = vadd.xlane.f32.xlu0 %v826
  %v828 = vpop.xlane.xlu0 %827
  %v829 = vsel %vm57, %v591, 0.0
  %830 = vadd.xlane.f32.xlu0 %v829
  %v831 = vpop.xlane.xlu0 %830
  %v832 = vsel %vm57, %v592, 0.0
  %833 = vadd.xlane.f32.xlu0 %v832
  %v834 = vpop.xlane.xlu0 %833
  %v835 = vsel %vm57, %v593, 0.0
  %836 = vadd.xlane.f32.xlu0 %v835
  %v837 = vpop.xlane.xlu0 %836
  %v838 = vsel %vm57, %v594, 0.0
  %839 = vadd.xlane.f32.xlu0 %v838
  %v840 = vpop.xlane.xlu0 %839
  %v841 = vsel %vm57, %v595, 0.0
  %842 = vadd.xlane.f32.xlu0 %v841
  %v843 = vpop.xlane.xlu0 %842
  %v844 = vsel %vm57, %v596, 0.0
  %845 = vadd.xlane.f32.xlu0 %v844
  %v846 = vpop.xlane.xlu0 %845
  %v847 = vsel %vm57, %v597, 0.0
  %848 = vadd.xlane.f32.xlu0 %v847
  %v849 = vpop.xlane.xlu0 %848
  %v850 = vsel %vm57, %v598, 0.0
  %851 = vadd.xlane.f32.xlu0 %v850
  %v852 = vpop.xlane.xlu0 %851
  %v853 = vsel %vm57, %v599, 0.0
  %854 = vadd.xlane.f32.xlu0 %v853
  %v855 = vpop.xlane.xlu0 %854
  %v856 = vsel %vm57, %v600, 0.0
  %857 = vadd.xlane.f32.xlu0 %v856
  %v858 = vpop.xlane.xlu0 %857
  %v859 = vsel %vm57, %v601, 0.0
  %860 = vadd.xlane.f32.xlu0 %v859
  %v861 = vpop.xlane.xlu0 %860
  %v862 = vsel %vm57, %v602, 0.0
  %863 = vadd.xlane.f32.xlu0 %v862
  %v864 = vpop.xlane.xlu0 %863
  %v865 = vsel %vm57, %v603, 0.0
  %866 = vadd.xlane.f32.xlu0 %v865
  %v867 = vpop.xlane.xlu0 %866
  %v868 = vsel %vm57, %v604, 0.0
  %869 = vadd.xlane.f32.xlu0 %v868
  %v870 = vpop.xlane.xlu0 %869
  %v871 = vsel %vm57, %v605, 0.0
  %872 = vadd.xlane.f32.xlu0 %v871
  %v873 = vpop.xlane.xlu0 %872
  %v874 = vsel %vm57, %v606, 0.0
  %875 = vadd.xlane.f32.xlu0 %v874
  %v876 = vpop.xlane.xlu0 %875
  %v877 = vsel %vm57, %v607, 0.0
  %878 = vadd.xlane.f32.xlu0 %v877
  %v879 = vpop.xlane.xlu0 %878
  %v880 = vsel %vm57, %v608, 0.0
  %881 = vadd.xlane.f32.xlu0 %v880
  %v882 = vpop.xlane.xlu0 %881
  %v883 = vsel %vm57, %v609, 0.0
  %884 = vadd.xlane.f32.xlu0 %v883
  %v885 = vpop.xlane.xlu0 %884
  %v886 = vsel %vm57, %v610, 0.0
  %887 = vadd.xlane.f32.xlu0 %v886
  %v888 = vpop.xlane.xlu0 %887
  %v889 = vsel %vm57, %v611, 0.0
  %890 = vadd.xlane.f32.xlu0 %v889
  %v891 = vpop.xlane.xlu0 %890
  %v892 = vsel %vm57, %v612, 0.0
  %893 = vadd.xlane.f32.xlu0 %v892
  %v894 = vpop.xlane.xlu0 %893
  %v895 = vsel %vm57, %v613, 0.0
  %896 = vadd.xlane.f32.xlu0 %v895
  %v897 = vpop.xlane.xlu0 %896
  %v898 = vsel %vm57, %v614, 0.0
  %899 = vadd.xlane.f32.xlu0 %v898
  %v900 = vpop.xlane.xlu0 %899
  %v901 = vsel %vm57, %v615, 0.0
  %902 = vadd.xlane.f32.xlu0 %v901
  %v903 = vpop.xlane.xlu0 %902
  %v904 = vsel %vm57, %v616, 0.0
  %905 = vadd.xlane.f32.xlu0 %v904
  %v906 = vpop.xlane.xlu0 %905
  %v907 = vsel %vm57, %v617, 0.0
  %908 = vadd.xlane.f32.xlu0 %v907
  %v909 = vpop.xlane.xlu0 %908
  %v910 = vsel %vm57, %v618, 0.0
  %911 = vadd.xlane.f32.xlu0 %v910
  %v912 = vpop.xlane.xlu0 %911
  %v913 = vmul.f32 %v621, 0.28867513
  %v914 = vmul.f32 %v624, 0.28867513
  %v915 = vmul.f32 %v627, 0.28867513
  %v916 = vmul.f32 %v630, 0.28867513
  %v917 = vmul.f32 %v633, 0.28867513
  %v918 = vmul.f32 %v636, 0.28867513
  %v919 = vmul.f32 %v639, 0.28867513
  %v920 = vmul.f32 %v642, 0.28867513
  %v921 = vmul.f32 %v645, 0.28867513
  %v922 = vmul.f32 %v648, 0.28867513
  %v923 = vmul.f32 %v651, 0.28867513
  %v924 = vmul.f32 %v654, 0.28867513
  %v925 = vmul.f32 %v657, 0.28867513
  %v926 = vmul.f32 %v660, 0.28867513
  %v927 = vmul.f32 %v663, 0.28867513
  %v928 = vmul.f32 %v666, 0.28867513
  %v929 = vmul.f32 %v669, 0.28867513
  %v930 = vmul.f32 %v672, 0.28867513
  %v931 = vmul.f32 %v675, 0.28867513
  %v932 = vmul.f32 %v678, 0.28867513
  %v933 = vmul.f32 %v681, 0.28867513
  %v934 = vmul.f32 %v684, 0.28867513
  %v935 = vmul.f32 %v687, 0.28867513
  %v936 = vmul.f32 %v690, 0.28867513
  %v937 = vmul.f32 %v693, 0.28867513
  %v938 = vmul.f32 %v696, 0.28867513
  %v939 = vmul.f32 %v699, 0.28867513
  %v940 = vmul.f32 %v702, 0.28867513
  %v941 = vmul.f32 %v705, 0.28867513
  %v942 = vmul.f32 %v708, 0.28867513
  %v943 = vmul.f32 %v711, 0.28867513
  %v944 = vmul.f32 %v714, 0.28867513
  %v945 = vmul.f32 %v717, 0.28867513
  %v946 = vmul.f32 %v720, 0.28867513
  %v947 = vmul.f32 %v723, 0.28867513
  %v948 = vmul.f32 %v726, 0.28867513
  %v949 = vmul.f32 %v729, 0.28867513
  %v950 = vmul.f32 %v732, 0.28867513
  %v951 = vmul.f32 %v735, 0.28867513
  %v952 = vmul.f32 %v738, 0.28867513
  %v953 = vmul.f32 %v741, 0.28867513
  %v954 = vmul.f32 %v744, 0.28867513
  %v955 = vmul.f32 %v747, 0.28867513
  %v956 = vmul.f32 %v750, 0.28867513
  %v957 = vmul.f32 %v753, 0.28867513
  %v958 = vmul.f32 %v756, 0.28867513
  %v959 = vmul.f32 %v759, 0.28867513
  %v960 = vmul.f32 %v762, 0.28867513
  %v961 = vmul.f32 %v765, 0.28867513
  %v962 = vmul.f32 %v768, 0.28867513
  %v963 = vmul.f32 %v771, 0.28867513
  %v964 = vmul.f32 %v774, 0.28867513
  %v965 = vmul.f32 %v777, 0.28867513
  %v966 = vmul.f32 %v780, 0.28867513
  %v967 = vmul.f32 %v783, 0.28867513
  %v968 = vmul.f32 %v786, 0.28867513
  %v969 = vmul.f32 %v789, 0.28867513
  %v970 = vmul.f32 %v792, 0.28867513
  %v971 = vmul.f32 %v795, 0.28867513
  %v972 = vmul.f32 %v798, 0.28867513
  %v973 = vmul.f32 %v801, 0.28867513
  %v974 = vmul.f32 %v804, 0.28867513
  %v975 = vmul.f32 %v807, 0.28867513
  %v976 = vmul.f32 %v810, 0.28867513
  %v977 = vmul.f32 %v813, 0.28867513
  %v978 = vmul.f32 %v816, 0.28867513
  %v979 = vmul.f32 %v819, 0.28867513
  %v980 = vmul.f32 %v822, 0.28867513
  %v981 = vmul.f32 %v825, 0.28867513
  %v982 = vmul.f32 %v828, 0.28867513
  %v983 = vmul.f32 %v831, 0.28867513
  %v984 = vmul.f32 %v834, 0.28867513
  %v985 = vmul.f32 %v837, 0.28867513
  %v986 = vmul.f32 %v840, 0.28867513
  %v987 = vmul.f32 %v843, 0.28867513
  %v988 = vmul.f32 %v846, 0.28867513
  %v989 = vmul.f32 %v849, 0.28867513
  %v990 = vmul.f32 %v852, 0.28867513
  %v991 = vmul.f32 %v855, 0.28867513
  %v992 = vmul.f32 %v858, 0.28867513
  %v993 = vmul.f32 %v861, 0.28867513
  %v994 = vmul.f32 %v864, 0.28867513
  %v995 = vmul.f32 %v867, 0.28867513
  %v996 = vmul.f32 %v870, 0.28867513
  %v997 = vmul.f32 %v873, 0.28867513
  %v998 = vmul.f32 %v876, 0.28867513
  %v999 = vmul.f32 %v879, 0.28867513
  %v1000 = vmul.f32 %v882, 0.28867513
  %v1001 = vmul.f32 %v885, 0.28867513
  %v1002 = vmul.f32 %v888, 0.28867513
  %v1003 = vmul.f32 %v891, 0.28867513
  %v1004 = vmul.f32 %v894, 0.28867513
  %v1005 = vmul.f32 %v897, 0.28867513
  %v1006 = vmul.f32 %v900, 0.28867513
  %v1007 = vmul.f32 %v903, 0.28867513
  %v1008 = vmul.f32 %v906, 0.28867513
  %v1009 = vmul.f32 %v909, 0.28867513
  %v1010 = vmul.f32 %v912, 0.28867513
  %v1011 = vmax.f32 %v913, %v915
  %v1012 = vmax.f32 %v1011, %v917
  %v1013 = vmax.f32 %v1012, %v919
  %v1014 = vmax.f32 %v1013, %v921
  %v1015 = vmax.f32 %v1014, %v923
  %v1016 = vmax.f32 %v1015, %v925
  %v1017 = vmax.f32 %v914, %v916
  %v1018 = vmax.f32 %v1017, %v918
  %v1019 = vmax.f32 %v1018, %v920
  %v1020 = vmax.f32 %v1019, %v922
  %v1021 = vmax.f32 %v1020, %v924
  %v1022 = vmax.f32 %v1021, %v926
  %v1023 = vmax.f32 %v927, %v929
  %v1024 = vmax.f32 %v1023, %v931
  %v1025 = vmax.f32 %v1024, %v933
  %v1026 = vmax.f32 %v1025, %v935
  %v1027 = vmax.f32 %v1026, %v937
  %v1028 = vmax.f32 %v1027, %v939
  %v1029 = vmax.f32 %v928, %v930
  %v1030 = vmax.f32 %v1029, %v932
  %v1031 = vmax.f32 %v1030, %v934
  %v1032 = vmax.f32 %v1031, %v936
  %v1033 = vmax.f32 %v1032, %v938
  %v1034 = vmax.f32 %v1033, %v940
  %v1035 = vmax.f32 %v941, %v943
  %v1036 = vmax.f32 %v1035, %v945
  %v1037 = vmax.f32 %v1036, %v947
  %v1038 = vmax.f32 %v1037, %v949
  %v1039 = vmax.f32 %v1038, %v951
  %v1040 = vmax.f32 %v1039, %v953
  %v1041 = vmax.f32 %v942, %v944
  %v1042 = vmax.f32 %v1041, %v946
  %v1043 = vmax.f32 %v1042, %v948
  %v1044 = vmax.f32 %v1043, %v950
  %v1045 = vmax.f32 %v1044, %v952
  %v1046 = vmax.f32 %v1045, %v954
  %v1047 = vmax.f32 %v955, %v957
  %v1048 = vmax.f32 %v1047, %v959
  %v1049 = vmax.f32 %v1048, %v961
  %v1050 = vmax.f32 %v1049, %v963
  %v1051 = vmax.f32 %v1050, %v965
  %v1052 = vmax.f32 %v1051, %v967
  %v1053 = vmax.f32 %v956, %v958
  %v1054 = vmax.f32 %v1053, %v960
  %v1055 = vmax.f32 %v1054, %v962
  %v1056 = vmax.f32 %v1055, %v964
  %v1057 = vmax.f32 %v1056, %v966
  %v1058 = vmax.f32 %v1057, %v968
  %v1059 = vmax.f32 %v969, %v971
  %v1060 = vmax.f32 %v1059, %v973
  %v1061 = vmax.f32 %v1060, %v975
  %v1062 = vmax.f32 %v1061, %v977
  %v1063 = vmax.f32 %v1062, %v979
  %v1064 = vmax.f32 %v1063, %v981
  %v1065 = vmax.f32 %v970, %v972
  %v1066 = vmax.f32 %v1065, %v974
  %v1067 = vmax.f32 %v1066, %v976
  %v1068 = vmax.f32 %v1067, %v978
  %v1069 = vmax.f32 %v1068, %v980
  %v1070 = vmax.f32 %v1069, %v982
  %v1071 = vmax.f32 %v983, %v985
  %v1072 = vmax.f32 %v1071, %v987
  %v1073 = vmax.f32 %v1072, %v989
  %v1074 = vmax.f32 %v1073, %v991
  %v1075 = vmax.f32 %v1074, %v993
  %v1076 = vmax.f32 %v1075, %v995
  %v1077 = vmax.f32 %v984, %v986
  %v1078 = vmax.f32 %v1077, %v988
  %v1079 = vmax.f32 %v1078, %v990
  %v1080 = vmax.f32 %v1079, %v992
  %v1081 = vmax.f32 %v1080, %v994
  %v1082 = vmax.f32 %v1081, %v996
  %v1083 = vmax.f32 %v997, %v999
  %v1084 = vmax.f32 %v1083, %v1001
  %v1085 = vmax.f32 %v1084, %v1003
  %v1086 = vmax.f32 %v1085, %v1005
  %v1087 = vmax.f32 %v1086, %v1007
  %v1088 = vmax.f32 %v1087, %v1009
  %v1089 = vmax.f32 %v998, %v1000
  %v1090 = vmax.f32 %v1089, %v1002
  %v1091 = vmax.f32 %v1090, %v1004
  %v1092 = vmax.f32 %v1091, %v1006
  %v1093 = vmax.f32 %v1092, %v1008
  %v1094 = vmax.f32 %v1093, %v1010
  %v1095 = vsub.f32 %v913, %v1016
  %v1096 = vsub.f32 %v914, %v1022
  %v1097 = vsub.f32 %v915, %v1016
  %v1098 = vsub.f32 %v916, %v1022
  %v1099 = vsub.f32 %v917, %v1016
  %v1100 = vsub.f32 %v918, %v1022
  %v1101 = vsub.f32 %v919, %v1016
  %v1102 = vsub.f32 %v920, %v1022
  %v1103 = vsub.f32 %v921, %v1016
  %v1104 = vsub.f32 %v922, %v1022
  %v1105 = vsub.f32 %v923, %v1016
  %v1106 = vsub.f32 %v924, %v1022
  %v1107 = vsub.f32 %v925, %v1016
  %v1108 = vsub.f32 %v926, %v1022
  %v1109 = vsub.f32 %v927, %v1028
  %v1110 = vsub.f32 %v928, %v1034
  %v1111 = vsub.f32 %v929, %v1028
  %v1112 = vsub.f32 %v930, %v1034
  %v1113 = vsub.f32 %v931, %v1028
  %v1114 = vsub.f32 %v932, %v1034
  %v1115 = vsub.f32 %v933, %v1028
  %v1116 = vsub.f32 %v934, %v1034
  %v1117 = vsub.f32 %v935, %v1028
  %v1118 = vsub.f32 %v936, %v1034
  %v1119 = vsub.f32 %v937, %v1028
  %v1120 = vsub.f32 %v938, %v1034
  %v1121 = vsub.f32 %v939, %v1028
  %v1122 = vsub.f32 %v940, %v1034
  %v1123 = vsub.f32 %v941, %v1040
  %v1124 = vsub.f32 %v942, %v1046
  %v1125 = vsub.f32 %v943, %v1040
  %v1126 = vsub.f32 %v944, %v1046
  %v1127 = vsub.f32 %v945, %v1040
  %v1128 = vsub.f32 %v946, %v1046
  %v1129 = vsub.f32 %v947, %v1040
  %v1130 = vsub.f32 %v948, %v1046
  %v1131 = vsub.f32 %v949, %v1040
  %v1132 = vsub.f32 %v950, %v1046
  %v1133 = vsub.f32 %v951, %v1040
  %v1134 = vsub.f32 %v952, %v1046
  %v1135 = vsub.f32 %v953, %v1040
  %v1136 = vsub.f32 %v954, %v1046
  %v1137 = vsub.f32 %v955, %v1052
  %v1138 = vsub.f32 %v956, %v1058
  %v1139 = vsub.f32 %v957, %v1052
  %v1140 = vsub.f32 %v958, %v1058
  %v1141 = vsub.f32 %v959, %v1052
  %v1142 = vsub.f32 %v960, %v1058
  %v1143 = vsub.f32 %v961, %v1052
  %v1144 = vsub.f32 %v962, %v1058
  %v1145 = vsub.f32 %v963, %v1052
  %v1146 = vsub.f32 %v964, %v1058
  %v1147 = vsub.f32 %v965, %v1052
  %v1148 = vsub.f32 %v966, %v1058
  %v1149 = vsub.f32 %v967, %v1052
  %v1150 = vsub.f32 %v968, %v1058
  %v1151 = vsub.f32 %v969, %v1064
  %v1152 = vsub.f32 %v970, %v1070
  %v1153 = vsub.f32 %v971, %v1064
  %v1154 = vsub.f32 %v972, %v1070
  %v1155 = vsub.f32 %v973, %v1064
  %v1156 = vsub.f32 %v974, %v1070
  %v1157 = vsub.f32 %v975, %v1064
  %v1158 = vsub.f32 %v976, %v1070
  %v1159 = vsub.f32 %v977, %v1064
  %v1160 = vsub.f32 %v978, %v1070
  %v1161 = vsub.f32 %v979, %v1064
  %v1162 = vsub.f32 %v980, %v1070
  %v1163 = vsub.f32 %v981, %v1064
  %v1164 = vsub.f32 %v982, %v1070
  %v1165 = vsub.f32 %v983, %v1076
  %v1166 = vsub.f32 %v984, %v1082
  %v1167 = vsub.f32 %v985, %v1076
  %v1168 = vsub.f32 %v986, %v1082
  %v1169 = vsub.f32 %v987, %v1076
  %v1170 = vsub.f32 %v988, %v1082
  %v1171 = vsub.f32 %v989, %v1076
  %v1172 = vsub.f32 %v990, %v1082
  %v1173 = vsub.f32 %v991, %v1076
  %v1174 = vsub.f32 %v992, %v1082
  %v1175 = vsub.f32 %v993, %v1076
  %v1176 = vsub.f32 %v994, %v1082
  %v1177 = vsub.f32 %v995, %v1076
  %v1178 = vsub.f32 %v996, %v1082
  %v1179 = vsub.f32 %v997, %v1088
  %v1180 = vsub.f32 %v998, %v1094
  %v1181 = vsub.f32 %v999, %v1088
  %v1182 = vsub.f32 %v1000, %v1094
  %v1183 = vsub.f32 %v1001, %v1088
  %v1184 = vsub.f32 %v1002, %v1094
  %v1185 = vsub.f32 %v1003, %v1088
  %v1186 = vsub.f32 %v1004, %v1094
  %v1187 = vsub.f32 %v1005, %v1088
  %v1188 = vsub.f32 %v1006, %v1094
  %v1189 = vsub.f32 %v1007, %v1088
  %v1190 = vsub.f32 %v1008, %v1094
  %v1191 = vsub.f32 %v1009, %v1088
  %v1192 = vsub.f32 %v1010, %v1094
  %v1193 = vmul.f32 %v1095, 1.442695
  %v1194 = vpow.pop %v1193
  %v1195 = vmul.f32 %v1096, 1.442695
  %v1196 = vpow.pop %v1195
  %v1197 = vmul.f32 %v1097, 1.442695
  %v1198 = vpow.pop %v1197
  %v1199 = vmul.f32 %v1098, 1.442695
  %v1200 = vpow.pop %v1199
  %v1201 = vmul.f32 %v1099, 1.442695
  %v1202 = vpow.pop %v1201
  %v1203 = vmul.f32 %v1100, 1.442695
  %v1204 = vpow.pop %v1203
  %v1205 = vmul.f32 %v1101, 1.442695
  %v1206 = vpow.pop %v1205
  %v1207 = vmul.f32 %v1102, 1.442695
  %v1208 = vpow.pop %v1207
  %v1209 = vmul.f32 %v1103, 1.442695
  %v1210 = vpow.pop %v1209
  %v1211 = vmul.f32 %v1104, 1.442695
  %v1212 = vpow.pop %v1211
  %v1213 = vmul.f32 %v1105, 1.442695
  %v1214 = vpow.pop %v1213
  %v1215 = vmul.f32 %v1106, 1.442695
  %v1216 = vpow.pop %v1215
  %v1217 = vmul.f32 %v1107, 1.442695
  %v1218 = vpow.pop %v1217
  %v1219 = vmul.f32 %v1108, 1.442695
  %v1220 = vpow.pop %v1219
  %v1221 = vmul.f32 %v1109, 1.442695
  %v1222 = vpow.pop %v1221
  %v1223 = vmul.f32 %v1110, 1.442695
  %v1224 = vpow.pop %v1223
  %v1225 = vmul.f32 %v1111, 1.442695
  %v1226 = vpow.pop %v1225
  %v1227 = vmul.f32 %v1112, 1.442695
  %v1228 = vpow.pop %v1227
  %v1229 = vmul.f32 %v1113, 1.442695
  %v1230 = vpow.pop %v1229
  %v1231 = vmul.f32 %v1114, 1.442695
  %v1232 = vpow.pop %v1231
  %v1233 = vmul.f32 %v1115, 1.442695
  %v1234 = vpow.pop %v1233
  %v1235 = vmul.f32 %v1116, 1.442695
  %v1236 = vpow.pop %v1235
  %v1237 = vmul.f32 %v1117, 1.442695
  %v1238 = vpow.pop %v1237
  %v1239 = vmul.f32 %v1118, 1.442695
  %v1240 = vpow.pop %v1239
  %v1241 = vmul.f32 %v1119, 1.442695
  %v1242 = vpow.pop %v1241
  %v1243 = vmul.f32 %v1120, 1.442695
  %v1244 = vpow.pop %v1243
  %v1245 = vmul.f32 %v1121, 1.442695
  %v1246 = vpow.pop %v1245
  %v1247 = vmul.f32 %v1122, 1.442695
  %v1248 = vpow.pop %v1247
  %v1249 = vmul.f32 %v1123, 1.442695
  %v1250 = vpow.pop %v1249
  %v1251 = vmul.f32 %v1124, 1.442695
  %v1252 = vpow.pop %v1251
  %v1253 = vmul.f32 %v1125, 1.442695
  %v1254 = vpow.pop %v1253
  %v1255 = vmul.f32 %v1126, 1.442695
  %v1256 = vpow.pop %v1255
  %v1257 = vmul.f32 %v1127, 1.442695
  %v1258 = vpow.pop %v1257
  %v1259 = vmul.f32 %v1128, 1.442695
  %v1260 = vpow.pop %v1259
  %v1261 = vmul.f32 %v1129, 1.442695
  %v1262 = vpow.pop %v1261
  %v1263 = vmul.f32 %v1130, 1.442695
  %v1264 = vpow.pop %v1263
  %v1265 = vmul.f32 %v1131, 1.442695
  %v1266 = vpow.pop %v1265
  %v1267 = vmul.f32 %v1132, 1.442695
  %v1268 = vpow.pop %v1267
  %v1269 = vmul.f32 %v1133, 1.442695
  %v1270 = vpow.pop %v1269
  %v1271 = vmul.f32 %v1134, 1.442695
  %v1272 = vpow.pop %v1271
  %v1273 = vmul.f32 %v1135, 1.442695
  %v1274 = vpow.pop %v1273
  %v1275 = vmul.f32 %v1136, 1.442695
  %v1276 = vpow.pop %v1275
  %v1277 = vmul.f32 %v1137, 1.442695
  %v1278 = vpow.pop %v1277
  %v1279 = vmul.f32 %v1138, 1.442695
  %v1280 = vpow.pop %v1279
  %v1281 = vmul.f32 %v1139, 1.442695
  %v1282 = vpow.pop %v1281
  %v1283 = vmul.f32 %v1140, 1.442695
  %v1284 = vpow.pop %v1283
  %v1285 = vmul.f32 %v1141, 1.442695
  %v1286 = vpow.pop %v1285
  %v1287 = vmul.f32 %v1142, 1.442695
  %v1288 = vpow.pop %v1287
  %v1289 = vmul.f32 %v1143, 1.442695
  %v1290 = vpow.pop %v1289
  %v1291 = vmul.f32 %v1144, 1.442695
  %v1292 = vpow.pop %v1291
  %v1293 = vmul.f32 %v1145, 1.442695
  %v1294 = vpow.pop %v1293
  %v1295 = vmul.f32 %v1146, 1.442695
  %v1296 = vpow.pop %v1295
  %v1297 = vmul.f32 %v1147, 1.442695
  %v1298 = vpow.pop %v1297
  %v1299 = vmul.f32 %v1148, 1.442695
  %v1300 = vpow.pop %v1299
  %v1301 = vmul.f32 %v1149, 1.442695
  %v1302 = vpow.pop %v1301
  %v1303 = vmul.f32 %v1150, 1.442695
  %v1304 = vpow.pop %v1303
  %v1305 = vmul.f32 %v1151, 1.442695
  %v1306 = vpow.pop %v1305
  %v1307 = vmul.f32 %v1152, 1.442695
  %v1308 = vpow.pop %v1307
  %v1309 = vmul.f32 %v1153, 1.442695
  %v1310 = vpow.pop %v1309
  %v1311 = vmul.f32 %v1154, 1.442695
  %v1312 = vpow.pop %v1311
  %v1313 = vmul.f32 %v1155, 1.442695
  %v1314 = vpow.pop %v1313
  %v1315 = vmul.f32 %v1156, 1.442695
  %v1316 = vpow.pop %v1315
  %v1317 = vmul.f32 %v1157, 1.442695
  %v1318 = vpow.pop %v1317
  %v1319 = vmul.f32 %v1158, 1.442695
  %v1320 = vpow.pop %v1319
  %v1321 = vmul.f32 %v1159, 1.442695
  %v1322 = vpow.pop %v1321
  %v1323 = vmul.f32 %v1160, 1.442695
  %v1324 = vpow.pop %v1323
  %v1325 = vmul.f32 %v1161, 1.442695
  %v1326 = vpow.pop %v1325
  %v1327 = vmul.f32 %v1162, 1.442695
  %v1328 = vpow.pop %v1327
  %v1329 = vmul.f32 %v1163, 1.442695
  %v1330 = vpow.pop %v1329
  %v1331 = vmul.f32 %v1164, 1.442695
  %v1332 = vpow.pop %v1331
  %v1333 = vmul.f32 %v1165, 1.442695
  %v1334 = vpow.pop %v1333
  %v1335 = vmul.f32 %v1166, 1.442695
  %v1336 = vpow.pop %v1335
  %v1337 = vmul.f32 %v1167, 1.442695
  %v1338 = vpow.pop %v1337
  %v1339 = vmul.f32 %v1168, 1.442695
  %v1340 = vpow.pop %v1339
  %v1341 = vmul.f32 %v1169, 1.442695
  %v1342 = vpow.pop %v1341
  %v1343 = vmul.f32 %v1170, 1.442695
  %v1344 = vpow.pop %v1343
  %v1345 = vmul.f32 %v1171, 1.442695
  %v1346 = vpow.pop %v1345
  %v1347 = vmul.f32 %v1172, 1.442695
  %v1348 = vpow.pop %v1347
  %v1349 = vmul.f32 %v1173, 1.442695
  %v1350 = vpow.pop %v1349
  %v1351 = vmul.f32 %v1174, 1.442695
  %v1352 = vpow.pop %v1351
  %v1353 = vmul.f32 %v1175, 1.442695
  %v1354 = vpow.pop %v1353
  %v1355 = vmul.f32 %v1176, 1.442695
  %v1356 = vpow.pop %v1355
  %v1357 = vmul.f32 %v1177, 1.442695
  %v1358 = vpow.pop %v1357
  %v1359 = vmul.f32 %v1178, 1.442695
  %v1360 = vpow.pop %v1359
  %v1361 = vmul.f32 %v1179, 1.442695
  %v1362 = vpow.pop %v1361
  %v1363 = vmul.f32 %v1180, 1.442695
  %v1364 = vpow.pop %v1363
  %v1365 = vmul.f32 %v1181, 1.442695
  %v1366 = vpow.pop %v1365
  %v1367 = vmul.f32 %v1182, 1.442695
  %v1368 = vpow.pop %v1367
  %v1369 = vmul.f32 %v1183, 1.442695
  %v1370 = vpow.pop %v1369
  %v1371 = vmul.f32 %v1184, 1.442695
  %v1372 = vpow.pop %v1371
  %v1373 = vmul.f32 %v1185, 1.442695
  %v1374 = vpow.pop %v1373
  %v1375 = vmul.f32 %v1186, 1.442695
  %v1376 = vpow.pop %v1375
  %v1377 = vmul.f32 %v1187, 1.442695
  %v1378 = vpow.pop %v1377
  %v1379 = vmul.f32 %v1188, 1.442695
  %v1380 = vpow.pop %v1379
  %v1381 = vmul.f32 %v1189, 1.442695
  %v1382 = vpow.pop %v1381
  %v1383 = vmul.f32 %v1190, 1.442695
  %v1384 = vpow.pop %v1383
  %v1385 = vmul.f32 %v1191, 1.442695
  %v1386 = vpow.pop %v1385
  %v1387 = vmul.f32 %v1192, 1.442695
  %v1388 = vpow.pop %v1387
  %v1389 = vadd.f32 %v1194, %v1198
  %v1390 = vadd.f32 %v1389, %v1202
  %v1391 = vadd.f32 %v1390, %v1206
  %v1392 = vadd.f32 %v1391, %v1210
  %v1393 = vadd.f32 %v1392, %v1214
  %v1394 = vadd.f32 %v1393, %v1218
  %v1395 = vadd.f32 %v1196, %v1200
  %v1396 = vadd.f32 %v1395, %v1204
  %v1397 = vadd.f32 %v1396, %v1208
  %v1398 = vadd.f32 %v1397, %v1212
  %v1399 = vadd.f32 %v1398, %v1216
  %v1400 = vadd.f32 %v1399, %v1220
  %v1401 = vadd.f32 %v1222, %v1226
  %v1402 = vadd.f32 %v1401, %v1230
  %v1403 = vadd.f32 %v1402, %v1234
  %v1404 = vadd.f32 %v1403, %v1238
  %v1405 = vadd.f32 %v1404, %v1242
  %v1406 = vadd.f32 %v1405, %v1246
  %v1407 = vadd.f32 %v1224, %v1228
  %v1408 = vadd.f32 %v1407, %v1232
  %v1409 = vadd.f32 %v1408, %v1236
  %v1410 = vadd.f32 %v1409, %v1240
  %v1411 = vadd.f32 %v1410, %v1244
  %v1412 = vadd.f32 %v1411, %v1248
  %v1413 = vadd.f32 %v1250, %v1254
  %v1414 = vadd.f32 %v1413, %v1258
  %v1415 = vadd.f32 %v1414, %v1262
  %v1416 = vadd.f32 %v1415, %v1266
  %v1417 = vadd.f32 %v1416, %v1270
  %v1418 = vadd.f32 %v1417, %v1274
  %v1419 = vadd.f32 %v1252, %v1256
  %v1420 = vadd.f32 %v1419, %v1260
  %v1421 = vadd.f32 %v1420, %v1264
  %v1422 = vadd.f32 %v1421, %v1268
  %v1423 = vadd.f32 %v1422, %v1272
  %v1424 = vadd.f32 %v1423, %v1276
  %v1425 = vadd.f32 %v1278, %v1282
  %v1426 = vadd.f32 %v1425, %v1286
  %v1427 = vadd.f32 %v1426, %v1290
  %v1428 = vadd.f32 %v1427, %v1294
  %v1429 = vadd.f32 %v1428, %v1298
  %v1430 = vadd.f32 %v1429, %v1302
  %v1431 = vadd.f32 %v1280, %v1284
  %v1432 = vadd.f32 %v1431, %v1288
  %v1433 = vadd.f32 %v1432, %v1292
  %v1434 = vadd.f32 %v1433, %v1296
  %v1435 = vadd.f32 %v1434, %v1300
  %v1436 = vadd.f32 %v1435, %v1304
  %v1437 = vadd.f32 %v1306, %v1310
  %v1438 = vadd.f32 %v1437, %v1314
  %v1439 = vadd.f32 %v1438, %v1318
  %v1440 = vadd.f32 %v1439, %v1322
  %v1441 = vadd.f32 %v1440, %v1326
  %v1442 = vadd.f32 %v1441, %v1330
  %v1443 = vadd.f32 %v1308, %v1312
  %v1444 = vadd.f32 %v1443, %v1316
  %v1445 = vadd.f32 %v1444, %v1320
  %v1446 = vadd.f32 %v1445, %v1324
  %v1447 = vadd.f32 %v1446, %v1328
  %v1448 = vadd.f32 %v1447, %v1332
  %v1449 = vadd.f32 %v1334, %v1338
  %v1450 = vadd.f32 %v1449, %v1342
  %v1451 = vadd.f32 %v1450, %v1346
  %v1452 = vadd.f32 %v1451, %v1350
  %v1453 = vadd.f32 %v1452, %v1354
  %v1454 = vadd.f32 %v1453, %v1358
  %v1455 = vadd.f32 %v1336, %v1340
  %v1456 = vadd.f32 %v1455, %v1344
  %v1457 = vadd.f32 %v1456, %v1348
  %v1458 = vadd.f32 %v1457, %v1352
  %v1459 = vadd.f32 %v1458, %v1356
  %v1460 = vadd.f32 %v1459, %v1360
  %v1461 = vadd.f32 %v1362, %v1366
  %v1462 = vadd.f32 %v1461, %v1370
  %v1463 = vadd.f32 %v1462, %v1374
  %v1464 = vadd.f32 %v1463, %v1378
  %v1465 = vadd.f32 %v1464, %v1382
  %v1466 = vadd.f32 %v1465, %v1386
  %v1467 = vadd.f32 %v1364, %v1368
  %v1468 = vadd.f32 %v1467, %v1372
  %v1469 = vadd.f32 %v1468, %v1376
  %v1470 = vadd.f32 %v1469, %v1380
  %v1471 = vadd.f32 %v1470, %v1384
  %v1472 = vadd.f32 %v1471, %v1388
  %v1473 = vrcp.pop %v1394
  %v1474 = vrcp.pop %v1400
  %v1475 = vrcp.pop %v1406
  %v1476 = vrcp.pop %v1412
  %v1477 = vrcp.pop %v1418
  %v1478 = vrcp.pop %v1424
  %v1479 = vrcp.pop %v1430
  %v1480 = vrcp.pop %v1436
  %v1481 = vrcp.pop %v1442
  %v1482 = vrcp.pop %v1448
  %v1483 = vrcp.pop %v1454
  %v1484 = vrcp.pop %v1460
  %v1485 = vrcp.pop %v1466
  %v1486 = vrcp.pop %v1472
  %v1487 = vmul.f32 %v1194, %v1473
  %v1488 = vmul.f32 %v1196, %v1474
  %v1489 = vmul.f32 %v1198, %v1473
  %v1490 = vmul.f32 %v1200, %v1474
  %v1491 = vmul.f32 %v1202, %v1473
  %v1492 = vmul.f32 %v1204, %v1474
  %v1493 = vmul.f32 %v1206, %v1473
  %v1494 = vmul.f32 %v1208, %v1474
  %v1495 = vmul.f32 %v1210, %v1473
  %v1496 = vmul.f32 %v1212, %v1474
  %v1497 = vmul.f32 %v1214, %v1473
  %v1498 = vmul.f32 %v1216, %v1474
  %v1499 = vmul.f32 %v1218, %v1473
  %v1500 = vmul.f32 %v1220, %v1474
  %v1501 = vmul.f32 %v1222, %v1475
  %v1502 = vmul.f32 %v1224, %v1476
  %v1503 = vmul.f32 %v1226, %v1475
  %v1504 = vmul.f32 %v1228, %v1476
  %v1505 = vmul.f32 %v1230, %v1475
  %v1506 = vmul.f32 %v1232, %v1476
  %v1507 = vmul.f32 %v1234, %v1475
  %v1508 = vmul.f32 %v1236, %v1476
  %v1509 = vmul.f32 %v1238, %v1475
  %v1510 = vmul.f32 %v1240, %v1476
  %v1511 = vmul.f32 %v1242, %v1475
  %v1512 = vmul.f32 %v1244, %v1476
  %v1513 = vmul.f32 %v1246, %v1475
  %v1514 = vmul.f32 %v1248, %v1476
  %v1515 = vmul.f32 %v1250, %v1477
  %v1516 = vmul.f32 %v1252, %v1478
  %v1517 = vmul.f32 %v1254, %v1477
  %v1518 = vmul.f32 %v1256, %v1478
  %v1519 = vmul.f32 %v1258, %v1477
  %v1520 = vmul.f32 %v1260, %v1478
  %v1521 = vmul.f32 %v1262, %v1477
  %v1522 = vmul.f32 %v1264, %v1478
  %v1523 = vmul.f32 %v1266, %v1477
  %v1524 = vmul.f32 %v1268, %v1478
  %v1525 = vmul.f32 %v1270, %v1477
  %v1526 = vmul.f32 %v1272, %v1478
  %v1527 = vmul.f32 %v1274, %v1477
  %v1528 = vmul.f32 %v1276, %v1478
  %v1529 = vmul.f32 %v1278, %v1479
  %v1530 = vmul.f32 %v1280, %v1480
  %v1531 = vmul.f32 %v1282, %v1479
  %v1532 = vmul.f32 %v1284, %v1480
  %v1533 = vmul.f32 %v1286, %v1479
  %v1534 = vmul.f32 %v1288, %v1480
  %v1535 = vmul.f32 %v1290, %v1479
  %v1536 = vmul.f32 %v1292, %v1480
  %v1537 = vmul.f32 %v1294, %v1479
  %v1538 = vmul.f32 %v1296, %v1480
  %v1539 = vmul.f32 %v1298, %v1479
  %v1540 = vmul.f32 %v1300, %v1480
  %v1541 = vmul.f32 %v1302, %v1479
  %v1542 = vmul.f32 %v1304, %v1480
  %v1543 = vmul.f32 %v1306, %v1481
  %v1544 = vmul.f32 %v1308, %v1482
  %v1545 = vmul.f32 %v1310, %v1481
  %v1546 = vmul.f32 %v1312, %v1482
  %v1547 = vmul.f32 %v1314, %v1481
  %v1548 = vmul.f32 %v1316, %v1482
  %v1549 = vmul.f32 %v1318, %v1481
  %v1550 = vmul.f32 %v1320, %v1482
  %v1551 = vmul.f32 %v1322, %v1481
  %v1552 = vmul.f32 %v1324, %v1482
  %v1553 = vmul.f32 %v1326, %v1481
  %v1554 = vmul.f32 %v1328, %v1482
  %v1555 = vmul.f32 %v1330, %v1481
  %v1556 = vmul.f32 %v1332, %v1482
  %v1557 = vmul.f32 %v1334, %v1483
  %v1558 = vmul.f32 %v1336, %v1484
  %v1559 = vmul.f32 %v1338, %v1483
  %v1560 = vmul.f32 %v1340, %v1484
  %v1561 = vmul.f32 %v1342, %v1483
  %v1562 = vmul.f32 %v1344, %v1484
  %v1563 = vmul.f32 %v1346, %v1483
  %v1564 = vmul.f32 %v1348, %v1484
  %v1565 = vmul.f32 %v1350, %v1483
  %v1566 = vmul.f32 %v1352, %v1484
  %v1567 = vmul.f32 %v1354, %v1483
  %v1568 = vmul.f32 %v1356, %v1484
  %v1569 = vmul.f32 %v1358, %v1483
  %v1570 = vmul.f32 %v1360, %v1484
  %v1571 = vmul.f32 %v1362, %v1485
  %v1572 = vmul.f32 %v1364, %v1486
  %v1573 = vmul.f32 %v1366, %v1485
  %v1574 = vmul.f32 %v1368, %v1486
  %v1575 = vmul.f32 %v1370, %v1485
  %v1576 = vmul.f32 %v1372, %v1486
  %v1577 = vmul.f32 %v1374, %v1485
  %v1578 = vmul.f32 %v1376, %v1486
  %v1579 = vmul.f32 %v1378, %v1485
  %v1580 = vmul.f32 %v1380, %v1486
  %v1581 = vmul.f32 %v1382, %v1485
  %v1582 = vmul.f32 %v1384, %v1486
  %v1583 = vmul.f32 %v1386, %v1485
  %v1584 = vmul.f32 %v1388, %v1486
  %v1585 = vmul.f32 %v1487, %v397
  %v1586 = vmul.f32 %v1488, %v402
  %v1587 = vmul.f32 %v1489, %v407
  %v1588 = vmul.f32 %v1490, %v412
  %v1589 = vmul.f32 %v1491, %v417
  %v1590 = vmul.f32 %v1492, %v422
  %v1591 = vmul.f32 %v1493, %v427
  %v1592 = vmul.f32 %v1494, %v432
  %v1593 = vmul.f32 %v1495, %v437
  %v1594 = vmul.f32 %v1496, %v442
  %v1595 = vmul.f32 %v1497, %v447
  %v1596 = vmul.f32 %v1498, %v452
  %v1597 = vmul.f32 %v1499, %v457
  %v1598 = vmul.f32 %v1500, %v462
  %v1599 = vmul.f32 %v1501, %v397
  %v1600 = vmul.f32 %v1502, %v402
  %v1601 = vmul.f32 %v1503, %v407
  %v1602 = vmul.f32 %v1504, %v412
  %v1603 = vmul.f32 %v1505, %v417
  %v1604 = vmul.f32 %v1506, %v422
  %v1605 = vmul.f32 %v1507, %v427
  %v1606 = vmul.f32 %v1508, %v432
  %v1607 = vmul.f32 %v1509, %v437
  %v1608 = vmul.f32 %v1510, %v442
  %v1609 = vmul.f32 %v1511, %v447
  %v1610 = vmul.f32 %v1512, %v452
  %v1611 = vmul.f32 %v1513, %v457
  %v1612 = vmul.f32 %v1514, %v462
  %v1613 = vmul.f32 %v1515, %v397
  %v1614 = vmul.f32 %v1516, %v402
  %v1615 = vmul.f32 %v1517, %v407
  %v1616 = vmul.f32 %v1518, %v412
  %v1617 = vmul.f32 %v1519, %v417
  %v1618 = vmul.f32 %v1520, %v422
  %v1619 = vmul.f32 %v1521, %v427
  %v1620 = vmul.f32 %v1522, %v432
  %v1621 = vmul.f32 %v1523, %v437
  %v1622 = vmul.f32 %v1524, %v442
  %v1623 = vmul.f32 %v1525, %v447
  %v1624 = vmul.f32 %v1526, %v452
  %v1625 = vmul.f32 %v1527, %v457
  %v1626 = vmul.f32 %v1528, %v462
  %v1627 = vmul.f32 %v1529, %v397
  %v1628 = vmul.f32 %v1530, %v402
  %v1629 = vmul.f32 %v1531, %v407
  %v1630 = vmul.f32 %v1532, %v412
  %v1631 = vmul.f32 %v1533, %v417
  %v1632 = vmul.f32 %v1534, %v422
  %v1633 = vmul.f32 %v1535, %v427
  %v1634 = vmul.f32 %v1536, %v432
  %v1635 = vmul.f32 %v1537, %v437
  %v1636 = vmul.f32 %v1538, %v442
  %v1637 = vmul.f32 %v1539, %v447
  %v1638 = vmul.f32 %v1540, %v452
  %v1639 = vmul.f32 %v1541, %v457
  %v1640 = vmul.f32 %v1542, %v462
  %v1641 = vmul.f32 %v1543, %v397
  %v1642 = vmul.f32 %v1544, %v402
  %v1643 = vmul.f32 %v1545, %v407
  %v1644 = vmul.f32 %v1546, %v412
  %v1645 = vmul.f32 %v1547, %v417
  %v1646 = vmul.f32 %v1548, %v422
  %v1647 = vmul.f32 %v1549, %v427
  %v1648 = vmul.f32 %v1550, %v432
  %v1649 = vmul.f32 %v1551, %v437
  %v1650 = vmul.f32 %v1552, %v442
  %v1651 = vmul.f32 %v1553, %v447
  %v1652 = vmul.f32 %v1554, %v452
  %v1653 = vmul.f32 %v1555, %v457
  %v1654 = vmul.f32 %v1556, %v462
  %v1655 = vmul.f32 %v1557, %v397
  %v1656 = vmul.f32 %v1558, %v402
  %v1657 = vmul.f32 %v1559, %v407
  %v1658 = vmul.f32 %v1560, %v412
  %v1659 = vmul.f32 %v1561, %v417
  %v1660 = vmul.f32 %v1562, %v422
  %v1661 = vmul.f32 %v1563, %v427
  %v1662 = vmul.f32 %v1564, %v432
  %v1663 = vmul.f32 %v1565, %v437
  %v1664 = vmul.f32 %v1566, %v442
  %v1665 = vmul.f32 %v1567, %v447
  %v1666 = vmul.f32 %v1568, %v452
  %v1667 = vmul.f32 %v1569, %v457
  %v1668 = vmul.f32 %v1570, %v462
  %v1669 = vmul.f32 %v1571, %v397
  %v1670 = vmul.f32 %v1572, %v402
  %v1671 = vmul.f32 %v1573, %v407
  %v1672 = vmul.f32 %v1574, %v412
  %v1673 = vmul.f32 %v1575, %v417
  %v1674 = vmul.f32 %v1576, %v422
  %v1675 = vmul.f32 %v1577, %v427
  %v1676 = vmul.f32 %v1578, %v432
  %v1677 = vmul.f32 %v1579, %v437
  %v1678 = vmul.f32 %v1580, %v442
  %v1679 = vmul.f32 %v1581, %v447
  %v1680 = vmul.f32 %v1582, %v452
  %v1681 = vmul.f32 %v1583, %v457
  %v1682 = vmul.f32 %v1584, %v462
  %vm1683 = vcmask 294080
  %v1684 = vsel %vm1683, %v1585, 0.0
  %v1685 = vsel %vm1683, %v1587, 0.0
  %v1686 = vadd.f32 %v1684, %v1685
  %v1687 = vsel %vm1683, %v1589, 0.0
  %v1688 = vadd.f32 %v1686, %v1687
  %v1689 = vsel %vm1683, %v1591, 0.0
  %v1690 = vadd.f32 %v1688, %v1689
  %v1691 = vsel %vm1683, %v1593, 0.0
  %v1692 = vadd.f32 %v1690, %v1691
  %v1693 = vsel %vm1683, %v1595, 0.0
  %v1694 = vadd.f32 %v1692, %v1693
  %v1695 = vsel %vm1683, %v1597, 0.0
  %v1696 = vadd.f32 %v1694, %v1695
  %v1697 = vsel %vm1683, %v1586, 0.0
  %v1698 = vsel %vm1683, %v1588, 0.0
  %v1699 = vadd.f32 %v1697, %v1698
  %v1700 = vsel %vm1683, %v1590, 0.0
  %v1701 = vadd.f32 %v1699, %v1700
  %v1702 = vsel %vm1683, %v1592, 0.0
  %v1703 = vadd.f32 %v1701, %v1702
  %v1704 = vsel %vm1683, %v1594, 0.0
  %v1705 = vadd.f32 %v1703, %v1704
  %v1706 = vsel %vm1683, %v1596, 0.0
  %v1707 = vadd.f32 %v1705, %v1706
  %v1708 = vsel %vm1683, %v1598, 0.0
  %v1709 = vadd.f32 %v1707, %v1708
  %v1710 = vsel %vm1683, %v1599, 0.0
  %v1711 = vsel %vm1683, %v1601, 0.0
  %v1712 = vadd.f32 %v1710, %v1711
  %v1713 = vsel %vm1683, %v1603, 0.0
  %v1714 = vadd.f32 %v1712, %v1713
  %v1715 = vsel %vm1683, %v1605, 0.0
  %v1716 = vadd.f32 %v1714, %v1715
  %v1717 = vsel %vm1683, %v1607, 0.0
  %v1718 = vadd.f32 %v1716, %v1717
  %v1719 = vsel %vm1683, %v1609, 0.0
  %v1720 = vadd.f32 %v1718, %v1719
  %v1721 = vsel %vm1683, %v1611, 0.0
  %v1722 = vadd.f32 %v1720, %v1721
  %v1723 = vsel %vm1683, %v1600, 0.0
  %v1724 = vsel %vm1683, %v1602, 0.0
  %v1725 = vadd.f32 %v1723, %v1724
  %v1726 = vsel %vm1683, %v1604, 0.0
  %v1727 = vadd.f32 %v1725, %v1726
  %v1728 = vsel %vm1683, %v1606, 0.0
  %v1729 = vadd.f32 %v1727, %v1728
  %v1730 = vsel %vm1683, %v1608, 0.0
  %v1731 = vadd.f32 %v1729, %v1730
  %v1732 = vsel %vm1683, %v1610, 0.0
  %v1733 = vadd.f32 %v1731, %v1732
  %v1734 = vsel %vm1683, %v1612, 0.0
  %v1735 = vadd.f32 %v1733, %v1734
  %v1736 = vsel %vm1683, %v1613, 0.0
  %v1737 = vsel %vm1683, %v1615, 0.0
  %v1738 = vadd.f32 %v1736, %v1737
  %v1739 = vsel %vm1683, %v1617, 0.0
  %v1740 = vadd.f32 %v1738, %v1739
  %v1741 = vsel %vm1683, %v1619, 0.0
  %v1742 = vadd.f32 %v1740, %v1741
  %v1743 = vsel %vm1683, %v1621, 0.0
  %v1744 = vadd.f32 %v1742, %v1743
  %v1745 = vsel %vm1683, %v1623, 0.0
  %v1746 = vadd.f32 %v1744, %v1745
  %v1747 = vsel %vm1683, %v1625, 0.0
  %v1748 = vadd.f32 %v1746, %v1747
  %v1749 = vsel %vm1683, %v1614, 0.0
  %v1750 = vsel %vm1683, %v1616, 0.0
  %v1751 = vadd.f32 %v1749, %v1750
  %v1752 = vsel %vm1683, %v1618, 0.0
  %v1753 = vadd.f32 %v1751, %v1752
  %v1754 = vsel %vm1683, %v1620, 0.0
  %v1755 = vadd.f32 %v1753, %v1754
  %v1756 = vsel %vm1683, %v1622, 0.0
  %v1757 = vadd.f32 %v1755, %v1756
  %v1758 = vsel %vm1683, %v1624, 0.0
  %v1759 = vadd.f32 %v1757, %v1758
  %v1760 = vsel %vm1683, %v1626, 0.0
  %v1761 = vadd.f32 %v1759, %v1760
  %v1762 = vsel %vm1683, %v1627, 0.0
  %v1763 = vsel %vm1683, %v1629, 0.0
  %v1764 = vadd.f32 %v1762, %v1763
  %v1765 = vsel %vm1683, %v1631, 0.0
  %v1766 = vadd.f32 %v1764, %v1765
  %v1767 = vsel %vm1683, %v1633, 0.0
  %v1768 = vadd.f32 %v1766, %v1767
  %v1769 = vsel %vm1683, %v1635, 0.0
  %v1770 = vadd.f32 %v1768, %v1769
  %v1771 = vsel %vm1683, %v1637, 0.0
  %v1772 = vadd.f32 %v1770, %v1771
  %v1773 = vsel %vm1683, %v1639, 0.0
  %v1774 = vadd.f32 %v1772, %v1773
  %v1775 = vsel %vm1683, %v1628, 0.0
  %v1776 = vsel %vm1683, %v1630, 0.0
  %v1777 = vadd.f32 %v1775, %v1776
  %v1778 = vsel %vm1683, %v1632, 0.0
  %v1779 = vadd.f32 %v1777, %v1778
  %v1780 = vsel %vm1683, %v1634, 0.0
  %v1781 = vadd.f32 %v1779, %v1780
  %v1782 = vsel %vm1683, %v1636, 0.0
  %v1783 = vadd.f32 %v1781, %v1782
  %v1784 = vsel %vm1683, %v1638, 0.0
  %v1785 = vadd.f32 %v1783, %v1784
  %v1786 = vsel %vm1683, %v1640, 0.0
  %v1787 = vadd.f32 %v1785, %v1786
  %v1788 = vsel %vm1683, %v1641, 0.0
  %v1789 = vsel %vm1683, %v1643, 0.0
  %v1790 = vadd.f32 %v1788, %v1789
  %v1791 = vsel %vm1683, %v1645, 0.0
  %v1792 = vadd.f32 %v1790, %v1791
  %v1793 = vsel %vm1683, %v1647, 0.0
  %v1794 = vadd.f32 %v1792, %v1793
  %v1795 = vsel %vm1683, %v1649, 0.0
  %v1796 = vadd.f32 %v1794, %v1795
  %v1797 = vsel %vm1683, %v1651, 0.0
  %v1798 = vadd.f32 %v1796, %v1797
  %v1799 = vsel %vm1683, %v1653, 0.0
  %v1800 = vadd.f32 %v1798, %v1799
  %v1801 = vsel %vm1683, %v1642, 0.0
  %v1802 = vsel %vm1683, %v1644, 0.0
  %v1803 = vadd.f32 %v1801, %v1802
  %v1804 = vsel %vm1683, %v1646, 0.0
  %v1805 = vadd.f32 %v1803, %v1804
  %v1806 = vsel %vm1683, %v1648, 0.0
  %v1807 = vadd.f32 %v1805, %v1806
  %v1808 = vsel %vm1683, %v1650, 0.0
  %v1809 = vadd.f32 %v1807, %v1808
  %v1810 = vsel %vm1683, %v1652, 0.0
  %v1811 = vadd.f32 %v1809, %v1810
  %v1812 = vsel %vm1683, %v1654, 0.0
  %v1813 = vadd.f32 %v1811, %v1812
  %v1814 = vsel %vm1683, %v1655, 0.0
  %v1815 = vsel %vm1683, %v1657, 0.0
  %v1816 = vadd.f32 %v1814, %v1815
  %v1817 = vsel %vm1683, %v1659, 0.0
  %v1818 = vadd.f32 %v1816, %v1817
  %v1819 = vsel %vm1683, %v1661, 0.0
  %v1820 = vadd.f32 %v1818, %v1819
  %v1821 = vsel %vm1683, %v1663, 0.0
  %v1822 = vadd.f32 %v1820, %v1821
  %v1823 = vsel %vm1683, %v1665, 0.0
  %v1824 = vadd.f32 %v1822, %v1823
  %v1825 = vsel %vm1683, %v1667, 0.0
  %v1826 = vadd.f32 %v1824, %v1825
  %v1827 = vsel %vm1683, %v1656, 0.0
  %v1828 = vsel %vm1683, %v1658, 0.0
  %v1829 = vadd.f32 %v1827, %v1828
  %v1830 = vsel %vm1683, %v1660, 0.0
  %v1831 = vadd.f32 %v1829, %v1830
  %v1832 = vsel %vm1683, %v1662, 0.0
  %v1833 = vadd.f32 %v1831, %v1832
  %v1834 = vsel %vm1683, %v1664, 0.0
  %v1835 = vadd.f32 %v1833, %v1834
  %v1836 = vsel %vm1683, %v1666, 0.0
  %v1837 = vadd.f32 %v1835, %v1836
  %v1838 = vsel %vm1683, %v1668, 0.0
  %v1839 = vadd.f32 %v1837, %v1838
  %v1840 = vsel %vm1683, %v1669, 0.0
  %v1841 = vsel %vm1683, %v1671, 0.0
  %v1842 = vadd.f32 %v1840, %v1841
  %v1843 = vsel %vm1683, %v1673, 0.0
  %v1844 = vadd.f32 %v1842, %v1843
  %v1845 = vsel %vm1683, %v1675, 0.0
  %v1846 = vadd.f32 %v1844, %v1845
  %v1847 = vsel %vm1683, %v1677, 0.0
  %v1848 = vadd.f32 %v1846, %v1847
  %v1849 = vsel %vm1683, %v1679, 0.0
  %v1850 = vadd.f32 %v1848, %v1849
  %v1851 = vsel %vm1683, %v1681, 0.0
  %v1852 = vadd.f32 %v1850, %v1851
  %v1853 = vsel %vm1683, %v1670, 0.0
  %v1854 = vsel %vm1683, %v1672, 0.0
  %v1855 = vadd.f32 %v1853, %v1854
  %v1856 = vsel %vm1683, %v1674, 0.0
  %v1857 = vadd.f32 %v1855, %v1856
  %v1858 = vsel %vm1683, %v1676, 0.0
  %v1859 = vadd.f32 %v1857, %v1858
  %v1860 = vsel %vm1683, %v1678, 0.0
  %v1861 = vadd.f32 %v1859, %v1860
  %v1862 = vsel %vm1683, %v1680, 0.0
  %v1863 = vadd.f32 %v1861, %v1862
  %v1864 = vsel %vm1683, %v1682, 0.0
  %v1865 = vadd.f32 %v1863, %v1864
  %v1866 = vld [vmem:[%s3] sm:$0xff]
  %v1867 = vld [vmem:[%s3 + $0x8] sm:$0xf]
  %v1868 = vld [vmem:[%s4] sm:$0x1]
  %v1869 = vlaneseq
  %v1870 = vshrl.u32 %v1869, 7
  %v1871 = vsub.s32 0, %v1870
  %v1872 = vrot.slane %v1868, %v1871
  %1887 = vrot.lane.b32.xlu0 %v1696, 104
  %v1888 = vpop.permute.xlu0 %1887
  %1889 = vrot.lane.b32.xlu0 %v1709, 104
  %v1890 = vpop.permute.xlu0 %1889
  %1891 = vrot.lane.b32.xlu0 %v1722, 104
  %v1892 = vpop.permute.xlu0 %1891
  %1893 = vrot.lane.b32.xlu0 %v1735, 104
  %v1894 = vpop.permute.xlu0 %1893
  %1895 = vrot.lane.b32.xlu0 %v1748, 104
  %v1896 = vpop.permute.xlu0 %1895
  %1897 = vrot.lane.b32.xlu0 %v1761, 104
  %v1898 = vpop.permute.xlu0 %1897
  %1899 = vrot.lane.b32.xlu0 %v1774, 104
  %v1900 = vpop.permute.xlu0 %1899
  %1901 = vrot.lane.b32.xlu0 %v1787, 104
  %v1902 = vpop.permute.xlu0 %1901
  %1903 = vrot.lane.b32.xlu0 %v1800, 104
  %v1904 = vpop.permute.xlu0 %1903
  %1905 = vrot.lane.b32.xlu0 %v1813, 104
  %v1906 = vpop.permute.xlu0 %1905
  %1907 = vrot.lane.b32.xlu0 %v1826, 104
  %v1908 = vpop.permute.xlu0 %1907
  %1909 = vrot.lane.b32.xlu0 %v1839, 104
  %v1910 = vpop.permute.xlu0 %1909
  %1911 = vrot.lane.b32.xlu0 %v1852, 104
  %v1912 = vpop.permute.xlu0 %1911
  %1913 = vrot.lane.b32.xlu0 %v1865, 104
  %v1914 = vpop.permute.xlu0 %1913
  %v1915 = vsel %vm57, %v1888, 0
  %v1917 = vsel %vm57, %v1890, 0
  %v1919 = vsel %vm57, %v1892, 0
  %v1921 = vsel %vm57, %v1894, 0
  %v1923 = vsel %vm57, %v1896, 0
  %v1925 = vsel %vm57, %v1898, 0
  %v1927 = vsel %vm57, %v1900, 0
  %v1929 = vsel %vm57, %v1902, 0
  %v1931 = vsel %vm57, %v1904, 0
  %v1933 = vsel %vm57, %v1906, 0
  %v1935 = vsel %vm57, %v1908, 0
  %v1937 = vsel %vm57, %v1910, 0
  %v1939 = vsel %vm57, %v1912, 0
  %v1941 = vsel %vm57, %v1914, 0
  %v1944 = vsel %vm326, %v1867, 0
  %1946 = vmatprep.subr.mxu0 0.0
  %1947 = vmatpush1.msra.mxu0 %v1866
  %1948 = vmatprep.subr.mxu0 0.0
  %1949 = vmatpush1.msra.mxu0 %v1944
  %1950 = vmatprep.subr.mxu0 0.0
  %1951 = vmatpush1.msra.mxu0 0.0
  %1952 = vmatprep.subr.mxu0 0.0
  %1953 = vmatpush1.msra.mxu0 0.0
  %1954 = vmatprep.subr.mxu0 0.0
  %1955 = vmatpush1.msra.mxu0 0.0
  %1956 = vmatprep.subr.mxu0 0.0
  %1957 = vmatpush1.msra.mxu0 0.0
  %1958 = vmatprep.subr.mxu0 0.0
  %1959 = vmatpush1.msra.mxu0 0.0
  %1960 = vmatprep.subr.mxu0 0.0
  %1961 = vmatpush1.msra.mxu0 0.0
  %1962 = vmatprep.subr.mxu0 0.0
  %1963 = vmatpush1.msra.mxu0 0.0
  %1964 = vmatprep.subr.mxu0 0.0
  %1965 = vmatpush1.msra.mxu0 0.0
  %1966 = vmatprep.subr.mxu0 0.0
  %1967 = vmatpush1.msra.mxu0 0.0
  %1968 = vmatprep.subr.mxu0 0.0
  %1969 = vmatpush1.msra.mxu0 0.0
  %1970 = vmatprep.subr.mxu0 0.0
  %1971 = vmatpush1.msra.mxu0 0.0
  %1972 = vmatprep.subr.mxu0 0.0
  %1973 = vmatpush1.msra.mxu0 0.0
  %1974 = vmatprep.subr.mxu0 0.0
  %1975 = vmatpush1.msra.mxu0 0.0
  %1976 = vmatprep.subr.mxu0 0.0
  %1977 = vmatpush1.msra.mxu0 0.0
  %1978 = vmatprep.subr.mxu0 0.0
  %1979 = vmatpush1.msra.mxu0 0.0
  %1980 = vmatprep.subr.mxu0 0.0
  %1981 = vmatpush1.msra.mxu0 0.0
  %1982 = vmatprep.subr.mxu0 0.0
  %1983 = vmatpush1.msra.mxu0 0.0
  %1984 = vmatprep.subr.mxu0 0.0
  %1985 = vmatpush1.msra.mxu0 0.0
  %1986 = vmatprep.subr.mxu0 0.0
  %1987 = vmatpush1.msra.mxu0 0.0
  %1988 = vmatprep.subr.mxu0 0.0
  %1989 = vmatpush1.msra.mxu0 0.0
  %1990 = vmatprep.subr.mxu0 0.0
  %1991 = vmatpush1.msra.mxu0 0.0
  %1992 = vmatprep.subr.mxu0 0.0
  %1993 = vmatpush1.msra.mxu0 0.0
  %1994 = vmatprep.subr.mxu0 0.0
  %1995 = vmatpush1.msra.mxu0 0.0
  %1996 = vmatprep.subr.mxu0 0.0
  %1997 = vmatpush1.msra.mxu0 0.0
  %1998 = vmatprep.subr.mxu0 0.0
  %1999 = vmatpush1.msra.mxu0 0.0
  %2000 = vmatprep.subr.mxu0 0.0
  %2001 = vmatpush1.msra.mxu0 0.0
  %2002 = vmatprep.subr.mxu0 0.0
  %2003 = vmatpush1.msra.mxu0 0.0
  %2004 = vmatprep.subr.mxu0 0.0
  %2005 = vmatpush1.msra.mxu0 0.0
  %2006 = vmatprep.subr.mxu0 0.0
  %2007 = vmatpush1.msra.mxu0 0.0
  %2008 = vmatprep.subr.mxu0 0.0
  %2009 = vmatpush1.msra.mxu0 0.0
  %2010 = vmatprep.mubr.f32.mxu0 0.0
  %2011 = vmatmul.mubr.f32.gmra.mrb[0].mxu0 %v1915
  %v2012 = vpop.f32.mrb[0].mxu0
  %v2013 = vadd.f32 %v1872, %v2012
  %v2014 = vpop.f32.mrb[0].mxu0
  %2015 = vmatprep.mubr.f32.mxu0 0.0
  %2016 = vmatmul.mubr.f32.gmra.mrb[0].mxu0 %v1917
  %v2017 = vpop.f32.mrb[0].mxu0
  %v2018 = vadd.f32 %v1872, %v2017
  %v2019 = vpop.f32.mrb[0].mxu0
  %2020 = vmatprep.mubr.f32.mxu0 0.0
  %2021 = vmatmul.mubr.f32.gmra.mrb[0].mxu0 %v1919
  %v2022 = vpop.f32.mrb[0].mxu0
  %v2023 = vadd.f32 %v1872, %v2022
  %v2024 = vpop.f32.mrb[0].mxu0
  %2025 = vmatprep.mubr.f32.mxu0 0.0
  %2026 = vmatmul.mubr.f32.gmra.mrb[0].mxu0 %v1921
  %v2027 = vpop.f32.mrb[0].mxu0
  %v2028 = vadd.f32 %v1872, %v2027
  %v2029 = vpop.f32.mrb[0].mxu0
  %2030 = vmatprep.mubr.f32.mxu0 0.0
  %2031 = vmatmul.mubr.f32.gmra.mrb[0].mxu0 %v1923
  %v2032 = vpop.f32.mrb[0].mxu0
  %v2033 = vadd.f32 %v1872, %v2032
  %v2034 = vpop.f32.mrb[0].mxu0
  %2035 = vmatprep.mubr.f32.mxu0 0.0
  %2036 = vmatmul.mubr.f32.gmra.mrb[0].mxu0 %v1925
  %v2037 = vpop.f32.mrb[0].mxu0
  %v2038 = vadd.f32 %v1872, %v2037
  %v2039 = vpop.f32.mrb[0].mxu0
  %2040 = vmatprep.mubr.f32.mxu0 0.0
  %2041 = vmatmul.mubr.f32.gmra.mrb[0].mxu0 %v1927
  %v2042 = vpop.f32.mrb[0].mxu0
  %v2043 = vadd.f32 %v1872, %v2042
  %v2044 = vpop.f32.mrb[0].mxu0
  %2045 = vmatprep.mubr.f32.mxu0 0.0
  %2046 = vmatmul.mubr.f32.gmra.mrb[0].mxu0 %v1929
  %v2047 = vpop.f32.mrb[0].mxu0
  %v2048 = vadd.f32 %v1872, %v2047
  %v2049 = vpop.f32.mrb[0].mxu0
  %2050 = vmatprep.mubr.f32.mxu0 0.0
  %2051 = vmatmul.mubr.f32.gmra.mrb[0].mxu0 %v1931
  %v2052 = vpop.f32.mrb[0].mxu0
  %v2053 = vadd.f32 %v1872, %v2052
  %v2054 = vpop.f32.mrb[0].mxu0
  %2055 = vmatprep.mubr.f32.mxu0 0.0
  %2056 = vmatmul.mubr.f32.gmra.mrb[0].mxu0 %v1933
  %v2057 = vpop.f32.mrb[0].mxu0
  %v2058 = vadd.f32 %v1872, %v2057
  %v2059 = vpop.f32.mrb[0].mxu0
  %2060 = vmatprep.mubr.f32.mxu0 0.0
  %2061 = vmatmul.mubr.f32.gmra.mrb[0].mxu0 %v1935
  %v2062 = vpop.f32.mrb[0].mxu0
  %v2063 = vadd.f32 %v1872, %v2062
  %v2064 = vpop.f32.mrb[0].mxu0
  %2065 = vmatprep.mubr.f32.mxu0 0.0
  %2066 = vmatmul.mubr.f32.gmra.mrb[0].mxu0 %v1937
  %v2067 = vpop.f32.mrb[0].mxu0
  %v2068 = vadd.f32 %v1872, %v2067
  %v2069 = vpop.f32.mrb[0].mxu0
  %2070 = vmatprep.mubr.f32.mxu0 0.0
  %2071 = vmatmul.mubr.f32.gmra.mrb[0].mxu0 %v1939
  %v2072 = vpop.f32.mrb[0].mxu0
  %v2073 = vadd.f32 %v1872, %v2072
  %v2074 = vpop.f32.mrb[0].mxu0
  %2075 = vmatprep.mubr.f32.mxu0 0.0
  %2076 = vmatmul.mubr.f32.gmra.mrb[0].mxu0 %v1941
  %v2077 = vpop.f32.mrb[0].mxu0
  %v2078 = vadd.f32 %v1872, %v2077
  %v2079 = vpop.f32.mrb[0].mxu0
  %2080 = vdwg.mxu0
  %v2081 = vadd.f32 %v41, %v2013
  %v2082 = vadd.f32 %v42, %v2018
  %v2083 = vadd.f32 %v43, %v2023
  %v2084 = vadd.f32 %v44, %v2028
  %v2085 = vadd.f32 %v45, %v2033
  %v2086 = vadd.f32 %v46, %v2038
  %v2087 = vadd.f32 %v47, %v2043
  %v2088 = vadd.f32 %v48, %v2048
  %v2089 = vadd.f32 %v49, %v2053
  %v2090 = vadd.f32 %v50, %v2058
  %v2091 = vadd.f32 %v51, %v2063
  %v2092 = vadd.f32 %v52, %v2068
  %v2093 = vadd.f32 %v53, %v2073
  %v2094 = vadd.f32 %v54, %v2078
  %v2095 = vld [vmem:[%s6] sm:$0x1]
  %v2096 = vld [vmem:[%s6 + $0x1] sm:$0x1]
  %v2097 = vsel %vm57, %v2081, 0.0
  %2098 = vadd.xlane.f32.xlu0 %v2097
  %v2099 = vpop.xlane.xlu0 %2098
  %v2100 = vsel %vm57, %v2082, 0.0
  %2101 = vadd.xlane.f32.xlu0 %v2100
  %v2102 = vpop.xlane.xlu0 %2101
  %v2103 = vsel %vm57, %v2083, 0.0
  %2104 = vadd.xlane.f32.xlu0 %v2103
  %v2105 = vpop.xlane.xlu0 %2104
  %v2106 = vsel %vm57, %v2084, 0.0
  %2107 = vadd.xlane.f32.xlu0 %v2106
  %v2108 = vpop.xlane.xlu0 %2107
  %v2109 = vsel %vm57, %v2085, 0.0
  %2110 = vadd.xlane.f32.xlu0 %v2109
  %v2111 = vpop.xlane.xlu0 %2110
  %v2112 = vsel %vm57, %v2086, 0.0
  %2113 = vadd.xlane.f32.xlu0 %v2112
  %v2114 = vpop.xlane.xlu0 %2113
  %v2115 = vsel %vm57, %v2087, 0.0
  %2116 = vadd.xlane.f32.xlu0 %v2115
  %v2117 = vpop.xlane.xlu0 %2116
  %v2118 = vsel %vm57, %v2088, 0.0
  %2119 = vadd.xlane.f32.xlu0 %v2118
  %v2120 = vpop.xlane.xlu0 %2119
  %v2121 = vsel %vm57, %v2089, 0.0
  %2122 = vadd.xlane.f32.xlu0 %v2121
  %v2123 = vpop.xlane.xlu0 %2122
  %v2124 = vsel %vm57, %v2090, 0.0
  %2125 = vadd.xlane.f32.xlu0 %v2124
  %v2126 = vpop.xlane.xlu0 %2125
  %v2127 = vsel %vm57, %v2091, 0.0
  %2128 = vadd.xlane.f32.xlu0 %v2127
  %v2129 = vpop.xlane.xlu0 %2128
  %v2130 = vsel %vm57, %v2092, 0.0
  %2131 = vadd.xlane.f32.xlu0 %v2130
  %v2132 = vpop.xlane.xlu0 %2131
  %v2133 = vsel %vm57, %v2093, 0.0
  %2134 = vadd.xlane.f32.xlu0 %v2133
  %v2135 = vpop.xlane.xlu0 %2134
  %v2136 = vsel %vm57, %v2094, 0.0
  %2137 = vadd.xlane.f32.xlu0 %v2136
  %v2138 = vpop.xlane.xlu0 %2137
  %v2139 = vmul.f32 %v2099, %v100
  %v2140 = vmul.f32 %v2102, %v100
  %v2141 = vmul.f32 %v2105, %v100
  %v2142 = vmul.f32 %v2108, %v100
  %v2143 = vmul.f32 %v2111, %v100
  %v2144 = vmul.f32 %v2114, %v100
  %v2145 = vmul.f32 %v2117, %v100
  %v2146 = vmul.f32 %v2120, %v100
  %v2147 = vmul.f32 %v2123, %v100
  %v2148 = vmul.f32 %v2126, %v100
  %v2149 = vmul.f32 %v2129, %v100
  %v2150 = vmul.f32 %v2132, %v100
  %v2151 = vmul.f32 %v2135, %v100
  %v2152 = vmul.f32 %v2138, %v100
  %v2153 = vsub.f32 %v2081, %v2139
  %v2154 = vsub.f32 %v2082, %v2140
  %v2155 = vsub.f32 %v2083, %v2141
  %v2156 = vsub.f32 %v2084, %v2142
  %v2157 = vsub.f32 %v2085, %v2143
  %v2158 = vsub.f32 %v2086, %v2144
  %v2159 = vsub.f32 %v2087, %v2145
  %v2160 = vsub.f32 %v2088, %v2146
  %v2161 = vsub.f32 %v2089, %v2147
  %v2162 = vsub.f32 %v2090, %v2148
  %v2163 = vsub.f32 %v2091, %v2149
  %v2164 = vsub.f32 %v2092, %v2150
  %v2165 = vsub.f32 %v2093, %v2151
  %v2166 = vsub.f32 %v2094, %v2152
  %v2167 = vmul.f32 %v2153, %v2153
  %v2168 = vmul.f32 %v2154, %v2154
  %v2169 = vmul.f32 %v2155, %v2155
  %v2170 = vmul.f32 %v2156, %v2156
  %v2171 = vmul.f32 %v2157, %v2157
  %v2172 = vmul.f32 %v2158, %v2158
  %v2173 = vmul.f32 %v2159, %v2159
  %v2174 = vmul.f32 %v2160, %v2160
  %v2175 = vmul.f32 %v2161, %v2161
  %v2176 = vmul.f32 %v2162, %v2162
  %v2177 = vmul.f32 %v2163, %v2163
  %v2178 = vmul.f32 %v2164, %v2164
  %v2179 = vmul.f32 %v2165, %v2165
  %v2180 = vmul.f32 %v2166, %v2166
  %v2181 = vsel %vm57, %v2167, 0.0
  %2182 = vadd.xlane.f32.xlu0 %v2181
  %v2183 = vpop.xlane.xlu0 %2182
  %v2184 = vsel %vm57, %v2168, 0.0
  %2185 = vadd.xlane.f32.xlu0 %v2184
  %v2186 = vpop.xlane.xlu0 %2185
  %v2187 = vsel %vm57, %v2169, 0.0
  %2188 = vadd.xlane.f32.xlu0 %v2187
  %v2189 = vpop.xlane.xlu0 %2188
  %v2190 = vsel %vm57, %v2170, 0.0
  %2191 = vadd.xlane.f32.xlu0 %v2190
  %v2192 = vpop.xlane.xlu0 %2191
  %v2193 = vsel %vm57, %v2171, 0.0
  %2194 = vadd.xlane.f32.xlu0 %v2193
  %v2195 = vpop.xlane.xlu0 %2194
  %v2196 = vsel %vm57, %v2172, 0.0
  %2197 = vadd.xlane.f32.xlu0 %v2196
  %v2198 = vpop.xlane.xlu0 %2197
  %v2199 = vsel %vm57, %v2173, 0.0
  %2200 = vadd.xlane.f32.xlu0 %v2199
  %v2201 = vpop.xlane.xlu0 %2200
  %v2202 = vsel %vm57, %v2174, 0.0
  %2203 = vadd.xlane.f32.xlu0 %v2202
  %v2204 = vpop.xlane.xlu0 %2203
  %v2205 = vsel %vm57, %v2175, 0.0
  %2206 = vadd.xlane.f32.xlu0 %v2205
  %v2207 = vpop.xlane.xlu0 %2206
  %v2208 = vsel %vm57, %v2176, 0.0
  %2209 = vadd.xlane.f32.xlu0 %v2208
  %v2210 = vpop.xlane.xlu0 %2209
  %v2211 = vsel %vm57, %v2177, 0.0
  %2212 = vadd.xlane.f32.xlu0 %v2211
  %v2213 = vpop.xlane.xlu0 %2212
  %v2214 = vsel %vm57, %v2178, 0.0
  %2215 = vadd.xlane.f32.xlu0 %v2214
  %v2216 = vpop.xlane.xlu0 %2215
  %v2217 = vsel %vm57, %v2179, 0.0
  %2218 = vadd.xlane.f32.xlu0 %v2217
  %v2219 = vpop.xlane.xlu0 %2218
  %v2220 = vsel %vm57, %v2180, 0.0
  %2221 = vadd.xlane.f32.xlu0 %v2220
  %v2222 = vpop.xlane.xlu0 %2221
  %v2223 = vmul.f32 %v2183, %v100
  %v2224 = vmul.f32 %v2186, %v100
  %v2225 = vmul.f32 %v2189, %v100
  %v2226 = vmul.f32 %v2192, %v100
  %v2227 = vmul.f32 %v2195, %v100
  %v2228 = vmul.f32 %v2198, %v100
  %v2229 = vmul.f32 %v2201, %v100
  %v2230 = vmul.f32 %v2204, %v100
  %v2231 = vmul.f32 %v2207, %v100
  %v2232 = vmul.f32 %v2210, %v100
  %v2233 = vmul.f32 %v2213, %v100
  %v2234 = vmul.f32 %v2216, %v100
  %v2235 = vmul.f32 %v2219, %v100
  %v2236 = vmul.f32 %v2222, %v100
  %v2237 = vadd.f32 %v2223, 1e-05
  %v2238 = vadd.f32 %v2224, 1e-05
  %v2239 = vadd.f32 %v2225, 1e-05
  %v2240 = vadd.f32 %v2226, 1e-05
  %v2241 = vadd.f32 %v2227, 1e-05
  %v2242 = vadd.f32 %v2228, 1e-05
  %v2243 = vadd.f32 %v2229, 1e-05
  %v2244 = vadd.f32 %v2230, 1e-05
  %v2245 = vadd.f32 %v2231, 1e-05
  %v2246 = vadd.f32 %v2232, 1e-05
  %v2247 = vadd.f32 %v2233, 1e-05
  %v2248 = vadd.f32 %v2234, 1e-05
  %v2249 = vadd.f32 %v2235, 1e-05
  %v2250 = vadd.f32 %v2236, 1e-05
  %v2251 = vrsqrt.pop %v2237
  %v2252 = vrsqrt.pop %v2238
  %v2253 = vrsqrt.pop %v2239
  %v2254 = vrsqrt.pop %v2240
  %v2255 = vrsqrt.pop %v2241
  %v2256 = vrsqrt.pop %v2242
  %v2257 = vrsqrt.pop %v2243
  %v2258 = vrsqrt.pop %v2244
  %v2259 = vrsqrt.pop %v2245
  %v2260 = vrsqrt.pop %v2246
  %v2261 = vrsqrt.pop %v2247
  %v2262 = vrsqrt.pop %v2248
  %v2263 = vrsqrt.pop %v2249
  %v2264 = vrsqrt.pop %v2250
  %v2265 = vmul.f32 %v2153, %v2251
  %v2266 = vmul.f32 %v2154, %v2252
  %v2267 = vmul.f32 %v2155, %v2253
  %v2268 = vmul.f32 %v2156, %v2254
  %v2269 = vmul.f32 %v2157, %v2255
  %v2270 = vmul.f32 %v2158, %v2256
  %v2271 = vmul.f32 %v2159, %v2257
  %v2272 = vmul.f32 %v2160, %v2258
  %v2273 = vmul.f32 %v2161, %v2259
  %v2274 = vmul.f32 %v2162, %v2260
  %v2275 = vmul.f32 %v2163, %v2261
  %v2276 = vmul.f32 %v2164, %v2262
  %v2277 = vmul.f32 %v2165, %v2263
  %v2278 = vmul.f32 %v2166, %v2264
  %v2279 = vlaneseq
  %v2280 = vshrl.u32 %v2279, 7
  %v2281 = vsub.s32 0, %v2280
  %v2282 = vrot.slane %v2095, %v2281
  %v2283 = vmul.f32 %v2265, %v2282
  %v2284 = vmul.f32 %v2266, %v2282
  %v2285 = vmul.f32 %v2267, %v2282
  %v2286 = vmul.f32 %v2268, %v2282
  %v2287 = vmul.f32 %v2269, %v2282
  %v2288 = vmul.f32 %v2270, %v2282
  %v2289 = vmul.f32 %v2271, %v2282
  %v2290 = vmul.f32 %v2272, %v2282
  %v2291 = vmul.f32 %v2273, %v2282
  %v2292 = vmul.f32 %v2274, %v2282
  %v2293 = vmul.f32 %v2275, %v2282
  %v2294 = vmul.f32 %v2276, %v2282
  %v2295 = vmul.f32 %v2277, %v2282
  %v2296 = vmul.f32 %v2278, %v2282
  %v2297 = vlaneseq
  %v2298 = vshrl.u32 %v2297, 7
  %v2299 = vsub.s32 0, %v2298
  %v2300 = vrot.slane %v2096, %v2299
  %v2301 = vadd.f32 %v2283, %v2300
  %v2302 = vadd.f32 %v2284, %v2300
  %v2303 = vadd.f32 %v2285, %v2300
  %v2304 = vadd.f32 %v2286, %v2300
  %v2305 = vadd.f32 %v2287, %v2300
  %v2306 = vadd.f32 %v2288, %v2300
  %v2307 = vadd.f32 %v2289, %v2300
  %v2308 = vadd.f32 %v2290, %v2300
  %v2309 = vadd.f32 %v2291, %v2300
  %v2310 = vadd.f32 %v2292, %v2300
  %v2311 = vadd.f32 %v2293, %v2300
  %v2312 = vadd.f32 %v2294, %v2300
  %v2313 = vadd.f32 %v2295, %v2300
  %v2314 = vadd.f32 %v2296, %v2300
  %v2315 = vld [vmem:[%s7] sm:$0xff]
  %v2316 = vld [vmem:[%s7 + $0x8] sm:$0xf]
  %v2317 = vld [vmem:[%s8] sm:$0x1]
  %v2318 = vlaneseq
  %v2319 = vshrl.u32 %v2318, 7
  %v2320 = vsub.s32 0, %v2319
  %v2321 = vrot.slane %v2317, %v2320
  %v2323 = vsel %vm57, %v2301, 0
  %v2326 = vsel %vm57, %v2302, 0
  %v2329 = vsel %vm57, %v2303, 0
  %v2332 = vsel %vm57, %v2304, 0
  %v2335 = vsel %vm57, %v2305, 0
  %v2338 = vsel %vm57, %v2306, 0
  %v2341 = vsel %vm57, %v2307, 0
  %v2344 = vsel %vm57, %v2308, 0
  %v2347 = vsel %vm57, %v2309, 0
  %v2350 = vsel %vm57, %v2310, 0
  %v2353 = vsel %vm57, %v2311, 0
  %v2356 = vsel %vm57, %v2312, 0
  %v2359 = vsel %vm57, %v2313, 0
  %v2362 = vsel %vm57, %v2314, 0
  %v2365 = vsel %vm326, %v2316, 0
  %2367 = vmatprep.subr.mxu0 0.0
  %2368 = vmatpush1.msra.mxu0 %v2315
  %2369 = vmatprep.subr.mxu0 0.0
  %2370 = vmatpush1.msra.mxu0 %v2365
  %2371 = vmatprep.subr.mxu0 0.0
  %2372 = vmatpush1.msra.mxu0 0.0
  %2373 = vmatprep.subr.mxu0 0.0
  %2374 = vmatpush1.msra.mxu0 0.0
  %2375 = vmatprep.subr.mxu0 0.0
  %2376 = vmatpush1.msra.mxu0 0.0
  %2377 = vmatprep.subr.mxu0 0.0
  %2378 = vmatpush1.msra.mxu0 0.0
  %2379 = vmatprep.subr.mxu0 0.0
  %2380 = vmatpush1.msra.mxu0 0.0
  %2381 = vmatprep.subr.mxu0 0.0
  %2382 = vmatpush1.msra.mxu0 0.0
  %2383 = vmatprep.subr.mxu0 0.0
  %2384 = vmatpush1.msra.mxu0 0.0
  %2385 = vmatprep.subr.mxu0 0.0
  %2386 = vmatpush1.msra.mxu0 0.0
  %2387 = vmatprep.subr.mxu0 0.0
  %2388 = vmatpush1.msra.mxu0 0.0
  %2389 = vmatprep.subr.mxu0 0.0
  %2390 = vmatpush1.msra.mxu0 0.0
  %2391 = vmatprep.subr.mxu0 0.0
  %2392 = vmatpush1.msra.mxu0 0.0
  %2393 = vmatprep.subr.mxu0 0.0
  %2394 = vmatpush1.msra.mxu0 0.0
  %2395 = vmatprep.subr.mxu0 0.0
  %2396 = vmatpush1.msra.mxu0 0.0
  %2397 = vmatprep.subr.mxu0 0.0
  %2398 = vmatpush1.msra.mxu0 0.0
  %2399 = vmatprep.subr.mxu0 0.0
  %2400 = vmatpush1.msra.mxu0 0.0
  %2401 = vmatprep.subr.mxu0 0.0
  %2402 = vmatpush1.msra.mxu0 0.0
  %2403 = vmatprep.subr.mxu0 0.0
  %2404 = vmatpush1.msra.mxu0 0.0
  %2405 = vmatprep.subr.mxu0 0.0
  %2406 = vmatpush1.msra.mxu0 0.0
  %2407 = vmatprep.subr.mxu0 0.0
  %2408 = vmatpush1.msra.mxu0 0.0
  %2409 = vmatprep.subr.mxu0 0.0
  %2410 = vmatpush1.msra.mxu0 0.0
  %2411 = vmatprep.subr.mxu0 0.0
  %2412 = vmatpush1.msra.mxu0 0.0
  %2413 = vmatprep.subr.mxu0 0.0
  %2414 = vmatpush1.msra.mxu0 0.0
  %2415 = vmatprep.subr.mxu0 0.0
  %2416 = vmatpush1.msra.mxu0 0.0
  %2417 = vmatprep.subr.mxu0 0.0
  %2418 = vmatpush1.msra.mxu0 0.0
  %2419 = vmatprep.subr.mxu0 0.0
  %2420 = vmatpush1.msra.mxu0 0.0
  %2421 = vmatprep.subr.mxu0 0.0
  %2422 = vmatpush1.msra.mxu0 0.0
  %2423 = vmatprep.subr.mxu0 0.0
  %2424 = vmatpush1.msra.mxu0 0.0
  %2425 = vmatprep.subr.mxu0 0.0
  %2426 = vmatpush1.msra.mxu0 0.0
  %2427 = vmatprep.subr.mxu0 0.0
  %2428 = vmatpush1.msra.mxu0 0.0
  %2429 = vmatprep.subr.mxu0 0.0
  %2430 = vmatpush1.msra.mxu0 0.0
  %2431 = vmatprep.mubr.f32.mxu0 0.0
  %2432 = vmatmul.mubr.f32.gmra.mrb[0].mxu0 %v2323
  %v2433 = vpop.f32.mrb[0].mxu0
  %v2434 = vadd.f32 %v2321, %v2433
  %v2435 = vpop.f32.mrb[0].mxu0
  %2436 = vmatprep.mubr.f32.mxu0 0.0
  %2437 = vmatmul.mubr.f32.gmra.mrb[0].mxu0 %v2326
  %v2438 = vpop.f32.mrb[0].mxu0
  %v2439 = vadd.f32 %v2321, %v2438
  %v2440 = vpop.f32.mrb[0].mxu0
  %2441 = vmatprep.mubr.f32.mxu0 0.0
  %2442 = vmatmul.mubr.f32.gmra.mrb[0].mxu0 %v2329
  %v2443 = vpop.f32.mrb[0].mxu0
  %v2444 = vadd.f32 %v2321, %v2443
  %v2445 = vpop.f32.mrb[0].mxu0
  %2446 = vmatprep.mubr.f32.mxu0 0.0
  %2447 = vmatmul.mubr.f32.gmra.mrb[0].mxu0 %v2332
  %v2448 = vpop.f32.mrb[0].mxu0
  %v2449 = vadd.f32 %v2321, %v2448
  %v2450 = vpop.f32.mrb[0].mxu0
  %2451 = vmatprep.mubr.f32.mxu0 0.0
  %2452 = vmatmul.mubr.f32.gmra.mrb[0].mxu0 %v2335
  %v2453 = vpop.f32.mrb[0].mxu0
  %v2454 = vadd.f32 %v2321, %v2453
  %v2455 = vpop.f32.mrb[0].mxu0
  %2456 = vmatprep.mubr.f32.mxu0 0.0
  %2457 = vmatmul.mubr.f32.gmra.mrb[0].mxu0 %v2338
  %v2458 = vpop.f32.mrb[0].mxu0
  %v2459 = vadd.f32 %v2321, %v2458
  %v2460 = vpop.f32.mrb[0].mxu0
  %2461 = vmatprep.mubr.f32.mxu0 0.0
  %2462 = vmatmul.mubr.f32.gmra.mrb[0].mxu0 %v2341
  %v2463 = vpop.f32.mrb[0].mxu0
  %v2464 = vadd.f32 %v2321, %v2463
  %v2465 = vpop.f32.mrb[0].mxu0
  %2466 = vmatprep.mubr.f32.mxu0 0.0
  %2467 = vmatmul.mubr.f32.gmra.mrb[0].mxu0 %v2344
  %v2468 = vpop.f32.mrb[0].mxu0
  %v2469 = vadd.f32 %v2321, %v2468
  %v2470 = vpop.f32.mrb[0].mxu0
  %2471 = vmatprep.mubr.f32.mxu0 0.0
  %2472 = vmatmul.mubr.f32.gmra.mrb[0].mxu0 %v2347
  %v2473 = vpop.f32.mrb[0].mxu0
  %v2474 = vadd.f32 %v2321, %v2473
  %v2475 = vpop.f32.mrb[0].mxu0
  %2476 = vmatprep.mubr.f32.mxu0 0.0
  %2477 = vmatmul.mubr.f32.gmra.mrb[0].mxu0 %v2350
  %v2478 = vpop.f32.mrb[0].mxu0
  %v2479 = vadd.f32 %v2321, %v2478
  %v2480 = vpop.f32.mrb[0].mxu0
  %2481 = vmatprep.mubr.f32.mxu0 0.0
  %2482 = vmatmul.mubr.f32.gmra.mrb[0].mxu0 %v2353
  %v2483 = vpop.f32.mrb[0].mxu0
  %v2484 = vadd.f32 %v2321, %v2483
  %v2485 = vpop.f32.mrb[0].mxu0
  %2486 = vmatprep.mubr.f32.mxu0 0.0
  %2487 = vmatmul.mubr.f32.gmra.mrb[0].mxu0 %v2356
  %v2488 = vpop.f32.mrb[0].mxu0
  %v2489 = vadd.f32 %v2321, %v2488
  %v2490 = vpop.f32.mrb[0].mxu0
  %2491 = vmatprep.mubr.f32.mxu0 0.0
  %2492 = vmatmul.mubr.f32.gmra.mrb[0].mxu0 %v2359
  %v2493 = vpop.f32.mrb[0].mxu0
  %v2494 = vadd.f32 %v2321, %v2493
  %v2495 = vpop.f32.mrb[0].mxu0
  %2496 = vmatprep.mubr.f32.mxu0 0.0
  %2497 = vmatmul.mubr.f32.gmra.mrb[0].mxu0 %v2362
  %v2498 = vpop.f32.mrb[0].mxu0
  %v2499 = vadd.f32 %v2321, %v2498
  %v2500 = vpop.f32.mrb[0].mxu0
  %2501 = vdwg.mxu0
  %v2502 = vmax.f32 %v2434, 0.0
  %v2503 = vmax.f32 %v2439, 0.0
  %v2504 = vmax.f32 %v2444, 0.0
  %v2505 = vmax.f32 %v2449, 0.0
  %v2506 = vmax.f32 %v2454, 0.0
  %v2507 = vmax.f32 %v2459, 0.0
  %v2508 = vmax.f32 %v2464, 0.0
  %v2509 = vmax.f32 %v2469, 0.0
  %v2510 = vmax.f32 %v2474, 0.0
  %v2511 = vmax.f32 %v2479, 0.0
  %v2512 = vmax.f32 %v2484, 0.0
  %v2513 = vmax.f32 %v2489, 0.0
  %v2514 = vmax.f32 %v2494, 0.0
  %v2515 = vmax.f32 %v2499, 0.0
  %vm2516 = vcmp.le.f32.partialorder %v2502, 0.0
  %vm2517 = vcmp.le.f32.partialorder %v2503, 0.0
  %vm2518 = vcmp.le.f32.partialorder %v2504, 0.0
  %vm2519 = vcmp.le.f32.partialorder %v2505, 0.0
  %vm2520 = vcmp.le.f32.partialorder %v2506, 0.0
  %vm2521 = vcmp.le.f32.partialorder %v2507, 0.0
  %vm2522 = vcmp.le.f32.partialorder %v2508, 0.0
  %vm2523 = vcmp.le.f32.partialorder %v2509, 0.0
  %vm2524 = vcmp.le.f32.partialorder %v2510, 0.0
  %vm2525 = vcmp.le.f32.partialorder %v2511, 0.0
  %vm2526 = vcmp.le.f32.partialorder %v2512, 0.0
  %vm2527 = vcmp.le.f32.partialorder %v2513, 0.0
  %vm2528 = vcmp.le.f32.partialorder %v2514, 0.0
  %vm2529 = vcmp.le.f32.partialorder %v2515, 0.0
  %v2530 = vsel %vm2516, 1, 0
  %v2531 = vsel %vm2517, 1, 0
  %v2532 = vsel %vm2518, 1, 0
  %v2533 = vsel %vm2519, 1, 0
  %v2534 = vsel %vm2520, 1, 0
  %v2535 = vsel %vm2521, 1, 0
  %v2536 = vsel %vm2522, 1, 0
  %v2537 = vsel %vm2523, 1, 0
  %v2538 = vsel %vm2524, 1, 0
  %v2539 = vsel %vm2525, 1, 0
  %v2540 = vsel %vm2526, 1, 0
  %v2541 = vsel %vm2527, 1, 0
  %v2542 = vsel %vm2528, 1, 0
  %v2543 = vsel %vm2529, 1, 0
  %v2544 = vcvt.s32.f32 %v2530
  %v2545 = vcvt.s32.f32 %v2531
  %v2546 = vcvt.s32.f32 %v2532
  %v2547 = vcvt.s32.f32 %v2533
  %v2548 = vcvt.s32.f32 %v2534
  %v2549 = vcvt.s32.f32 %v2535
  %v2550 = vcvt.s32.f32 %v2536
  %v2551 = vcvt.s32.f32 %v2537
  %v2552 = vcvt.s32.f32 %v2538
  %v2553 = vcvt.s32.f32 %v2539
  %v2554 = vcvt.s32.f32 %v2540
  %v2555 = vcvt.s32.f32 %v2541
  %v2556 = vcvt.s32.f32 %v2542
  %v2557 = vcvt.s32.f32 %v2543
  %vm2558 = vcmask 392192
  %v2559 = vsel %vm2558, %v2544, 0.0
  %2560 = vadd.xlane.f32.xlu0 %v2559
  %v2561 = vpop.xlane.xlu0 %2560
  %v2562 = vsel %vm2558, %v2545, 0.0
  %2563 = vadd.xlane.f32.xlu0 %v2562
  %v2564 = vpop.xlane.xlu0 %2563
  %v2565 = vsel %vm2558, %v2546, 0.0
  %2566 = vadd.xlane.f32.xlu0 %v2565
  %v2567 = vpop.xlane.xlu0 %2566
  %v2568 = vsel %vm2558, %v2547, 0.0
  %2569 = vadd.xlane.f32.xlu0 %v2568
  %v2570 = vpop.xlane.xlu0 %2569
  %v2571 = vsel %vm2558, %v2548, 0.0
  %2572 = vadd.xlane.f32.xlu0 %v2571
  %v2573 = vpop.xlane.xlu0 %2572
  %v2574 = vsel %vm2558, %v2549, 0.0
  %2575 = vadd.xlane.f32.xlu0 %v2574
  %v2576 = vpop.xlane.xlu0 %2575
  %v2577 = vsel %vm2558, %v2550, 0.0
  %2578 = vadd.xlane.f32.xlu0 %v2577
  %v2579 = vpop.xlane.xlu0 %2578
  %v2580 = vsel %vm2558, %v2551, 0.0
  %2581 = vadd.xlane.f32.xlu0 %v2580
  %v2582 = vpop.xlane.xlu0 %2581
  %v2583 = vsel %vm2558, %v2552, 0.0
  %2584 = vadd.xlane.f32.xlu0 %v2583
  %v2585 = vpop.xlane.xlu0 %2584
  %v2586 = vsel %vm2558, %v2553, 0.0
  %2587 = vadd.xlane.f32.xlu0 %v2586
  %v2588 = vpop.xlane.xlu0 %2587
  %v2589 = vsel %vm2558, %v2554, 0.0
  %2590 = vadd.xlane.f32.xlu0 %v2589
  %v2591 = vpop.xlane.xlu0 %2590
  %v2592 = vsel %vm2558, %v2555, 0.0
  %2593 = vadd.xlane.f32.xlu0 %v2592
  %v2594 = vpop.xlane.xlu0 %2593
  %v2595 = vsel %vm2558, %v2556, 0.0
  %2596 = vadd.xlane.f32.xlu0 %v2595
  %v2597 = vpop.xlane.xlu0 %2596
  %v2598 = vsel %vm2558, %v2557, 0.0
  %2599 = vadd.xlane.f32.xlu0 %v2598
  %v2600 = vpop.xlane.xlu0 %2599
  %v2601 = vrcp.pop 48.0
  %v2602 = vmul.f32 %v2561, %v2601
  %v2603 = vmul.f32 %v2564, %v2601
  %v2604 = vmul.f32 %v2567, %v2601
  %v2605 = vmul.f32 %v2570, %v2601
  %v2606 = vmul.f32 %v2573, %v2601
  %v2607 = vmul.f32 %v2576, %v2601
  %v2608 = vmul.f32 %v2579, %v2601
  %v2609 = vmul.f32 %v2582, %v2601
  %v2610 = vmul.f32 %v2585, %v2601
  %v2611 = vmul.f32 %v2588, %v2601
  %v2612 = vmul.f32 %v2591, %v2601
  %v2613 = vmul.f32 %v2594, %v2601
  %v2614 = vmul.f32 %v2597, %v2601
  %v2615 = vmul.f32 %v2600, %v2601
  %v2616 = vadd.f32 %v2602, %v2604
  %v2617 = vadd.f32 %v2603, %v2605
  %v2618 = vadd.f32 %v2616, %v2606
  %v2619 = vadd.f32 %v2617, %v2607
  %v2620 = vadd.f32 %v2618, %v2608
  %v2621 = vadd.f32 %v2619, %v2609
  %v2622 = vadd.f32 %v2620, %v2610
  %v2623 = vadd.f32 %v2621, %v2611
  %v2624 = vadd.f32 %v2622, %v2612
  %v2625 = vadd.f32 %v2623, %v2613
  %v2626 = vadd.f32 %v2624, %v2614
  %v2627 = vadd.f32 %v2625, %v2615
  %v2628 = vmul.f32 %v2626, 0.14285715
  %v2629 = vmul.f32 %v2627, 0.14285715
  %v2630 = vld [vmem:[%s9] sm:$0xff]
  %v2631 = vld [vmem:[%s9 + $0x8] sm:$0xff]
  %v2632 = vld [vmem:[%s9 + $0x10] sm:$0xff]
  %v2633 = vld [vmem:[%s9 + $0x18] sm:$0xff]
  %v2634 = vld [vmem:[%s9 + $0x20] sm:$0xff]
  %v2635 = vld [vmem:[%s9 + $0x28] sm:$0xff]
  %v2636 = vld [vmem:[%s10] sm:$0x1]
  %v2637 = vlaneseq
  %v2638 = vshrl.u32 %v2637, 7
  %v2639 = vsub.s32 0, %v2638
  %v2640 = vrot.slane %v2636, %v2639
  %v2642 = vsel %vm2558, %v2502, 0
  %v2645 = vsel %vm2558, %v2503, 0
  %v2648 = vsel %vm2558, %v2504, 0
  %v2651 = vsel %vm2558, %v2505, 0
  %v2654 = vsel %vm2558, %v2506, 0
  %v2657 = vsel %vm2558, %v2507, 0
  %v2660 = vsel %vm2558, %v2508, 0
  %v2663 = vsel %vm2558, %v2509, 0
  %v2666 = vsel %vm2558, %v2510, 0
  %v2669 = vsel %vm2558, %v2511, 0
  %v2672 = vsel %vm2558, %v2512, 0
  %v2675 = vsel %vm2558, %v2513, 0
  %v2678 = vsel %vm2558, %v2514, 0
  %v2681 = vsel %vm2558, %v2515, 0
  %2683 = vmatprep.subr.mxu0 0.0
  %2684 = vmatpush1.msra.mxu0 %v2630
  %2685 = vmatprep.subr.mxu0 0.0
  %2686 = vmatpush1.msra.mxu0 %v2631
  %2687 = vmatprep.subr.mxu0 0.0
  %2688 = vmatpush1.msra.mxu0 %v2632
  %2689 = vmatprep.subr.mxu0 0.0
  %2690 = vmatpush1.msra.mxu0 %v2633
  %2691 = vmatprep.subr.mxu0 0.0
  %2692 = vmatpush1.msra.mxu0 %v2634
  %2693 = vmatprep.subr.mxu0 0.0
  %2694 = vmatpush1.msra.mxu0 %v2635
  %2695 = vmatprep.subr.mxu0 0.0
  %2696 = vmatpush1.msra.mxu0 0.0
  %2697 = vmatprep.subr.mxu0 0.0
  %2698 = vmatpush1.msra.mxu0 0.0
  %2699 = vmatprep.subr.mxu0 0.0
  %2700 = vmatpush1.msra.mxu0 0.0
  %2701 = vmatprep.subr.mxu0 0.0
  %2702 = vmatpush1.msra.mxu0 0.0
  %2703 = vmatprep.subr.mxu0 0.0
  %2704 = vmatpush1.msra.mxu0 0.0
  %2705 = vmatprep.subr.mxu0 0.0
  %2706 = vmatpush1.msra.mxu0 0.0
  %2707 = vmatprep.subr.mxu0 0.0
  %2708 = vmatpush1.msra.mxu0 0.0
  %2709 = vmatprep.subr.mxu0 0.0
  %2710 = vmatpush1.msra.mxu0 0.0
  %2711 = vmatprep.subr.mxu0 0.0
  %2712 = vmatpush1.msra.mxu0 0.0
  %2713 = vmatprep.subr.mxu0 0.0
  %2714 = vmatpush1.msra.mxu0 0.0
  %2715 = vmatprep.subr.mxu0 0.0
  %2716 = vmatpush1.msra.mxu0 0.0
  %2717 = vmatprep.subr.mxu0 0.0
  %2718 = vmatpush1.msra.mxu0 0.0
  %2719 = vmatprep.subr.mxu0 0.0
  %2720 = vmatpush1.msra.mxu0 0.0
  %2721 = vmatprep.subr.mxu0 0.0
  %2722 = vmatpush1.msra.mxu0 0.0
  %2723 = vmatprep.subr.mxu0 0.0
  %2724 = vmatpush1.msra.mxu0 0.0
  %2725 = vmatprep.subr.mxu0 0.0
  %2726 = vmatpush1.msra.mxu0 0.0
  %2727 = vmatprep.subr.mxu0 0.0
  %2728 = vmatpush1.msra.mxu0 0.0
  %2729 = vmatprep.subr.mxu0 0.0
  %2730 = vmatpush1.msra.mxu0 0.0
  %2731 = vmatprep.subr.mxu0 0.0
  %2732 = vmatpush1.msra.mxu0 0.0
  %2733 = vmatprep.subr.mxu0 0.0
  %2734 = vmatpush1.msra.mxu0 0.0
  %2735 = vmatprep.subr.mxu0 0.0
  %2736 = vmatpush1.msra.mxu0 0.0
  %2737 = vmatprep.subr.mxu0 0.0
  %2738 = vmatpush1.msra.mxu0 0.0
  %2739 = vmatprep.subr.mxu0 0.0
  %2740 = vmatpush1.msra.mxu0 0.0
  %2741 = vmatprep.subr.mxu0 0.0
  %2742 = vmatpush1.msra.mxu0 0.0
  %2743 = vmatprep.subr.mxu0 0.0
  %2744 = vmatpush1.msra.mxu0 0.0
  %2745 = vmatprep.subr.mxu0 0.0
  %2746 = vmatpush1.msra.mxu0 0.0
  %2747 = vmatprep.mubr.f32.mxu0 0.0
  %2748 = vmatmul.mubr.f32.gmra.mrb[0].mxu0 %v2642
  %v2749 = vpop.f32.mrb[0].mxu0
  %v2750 = vadd.f32 %v2640, %v2749
  %v2751 = vpop.f32.mrb[0].mxu0
  %2752 = vmatprep.mubr.f32.mxu0 0.0
  %2753 = vmatmul.mubr.f32.gmra.mrb[0].mxu0 %v2645
  %v2754 = vpop.f32.mrb[0].mxu0
  %v2755 = vadd.f32 %v2640, %v2754
  %v2756 = vpop.f32.mrb[0].mxu0
  %2757 = vmatprep.mubr.f32.mxu0 0.0
  %2758 = vmatmul.mubr.f32.gmra.mrb[0].mxu0 %v2648
  %v2759 = vpop.f32.mrb[0].mxu0
  %v2760 = vadd.f32 %v2640, %v2759
  %v2761 = vpop.f32.mrb[0].mxu0
  %2762 = vmatprep.mubr.f32.mxu0 0.0
  %2763 = vmatmul.mubr.f32.gmra.mrb[0].mxu0 %v2651
  %v2764 = vpop.f32.mrb[0].mxu0
  %v2765 = vadd.f32 %v2640, %v2764
  %v2766 = vpop.f32.mrb[0].mxu0
  %2767 = vmatprep.mubr.f32.mxu0 0.0
  %2768 = vmatmul.mubr.f32.gmra.mrb[0].mxu0 %v2654
  %v2769 = vpop.f32.mrb[0].mxu0
  %v2770 = vadd.f32 %v2640, %v2769
  %v2771 = vpop.f32.mrb[0].mxu0
  %2772 = vmatprep.mubr.f32.mxu0 0.0
  %2773 = vmatmul.mubr.f32.gmra.mrb[0].mxu0 %v2657
  %v2774 = vpop.f32.mrb[0].mxu0
  %v2775 = vadd.f32 %v2640, %v2774
  %v2776 = vpop.f32.mrb[0].mxu0
  %2777 = vmatprep.mubr.f32.mxu0 0.0
  %2778 = vmatmul.mubr.f32.gmra.mrb[0].mxu0 %v2660
  %v2779 = vpop.f32.mrb[0].mxu0
  %v2780 = vadd.f32 %v2640, %v2779
  %v2781 = vpop.f32.mrb[0].mxu0
  %2782 = vmatprep.mubr.f32.mxu0 0.0
  %2783 = vmatmul.mubr.f32.gmra.mrb[0].mxu0 %v2663
  %v2784 = vpop.f32.mrb[0].mxu0
  %v2785 = vadd.f32 %v2640, %v2784
  %v2786 = vpop.f32.mrb[0].mxu0
  %2787 = vmatprep.mubr.f32.mxu0 0.0
  %2788 = vmatmul.mubr.f32.gmra.mrb[0].mxu0 %v2666
  %v2789 = vpop.f32.mrb[0].mxu0
  %v2790 = vadd.f32 %v2640, %v2789
  %v2791 = vpop.f32.mrb[0].mxu0
  %2792 = vmatprep.mubr.f32.mxu0 0.0
  %2793 = vmatmul.mubr.f32.gmra.mrb[0].mxu0 %v2669
  %v2794 = vpop.f32.mrb[0].mxu0
  %v2795 = vadd.f32 %v2640, %v2794
  %v2796 = vpop.f32.mrb[0].mxu0
  %2797 = vmatprep.mubr.f32.mxu0 0.0
  %2798 = vmatmul.mubr.f32.gmra.mrb[0].mxu0 %v2672
  %v2799 = vpop.f32.mrb[0].mxu0
  %v2800 = vadd.f32 %v2640, %v2799
  %v2801 = vpop.f32.mrb[0].mxu0
  %2802 = vmatprep.mubr.f32.mxu0 0.0
  %2803 = vmatmul.mubr.f32.gmra.mrb[0].mxu0 %v2675
  %v2804 = vpop.f32.mrb[0].mxu0
  %v2805 = vadd.f32 %v2640, %v2804
  %v2806 = vpop.f32.mrb[0].mxu0
  %2807 = vmatprep.mubr.f32.mxu0 0.0
  %2808 = vmatmul.mubr.f32.gmra.mrb[0].mxu0 %v2678
  %v2809 = vpop.f32.mrb[0].mxu0
  %v2810 = vadd.f32 %v2640, %v2809
  %v2811 = vpop.f32.mrb[0].mxu0
  %2812 = vmatprep.mubr.f32.mxu0 0.0
  %2813 = vmatmul.mubr.f32.gmra.mrb[0].mxu0 %v2681
  %v2814 = vpop.f32.mrb[0].mxu0
  %v2815 = vadd.f32 %v2640, %v2814
  %v2816 = vpop.f32.mrb[0].mxu0
  %2817 = vdwg.mxu0
  %v2818 = vadd.f32 %v2081, %v2750
  %v2819 = vadd.f32 %v2082, %v2755
  %v2820 = vadd.f32 %v2083, %v2760
  %v2821 = vadd.f32 %v2084, %v2765
  %v2822 = vadd.f32 %v2085, %v2770
  %v2823 = vadd.f32 %v2086, %v2775
  %v2824 = vadd.f32 %v2087, %v2780
  %v2825 = vadd.f32 %v2088, %v2785
  %v2826 = vadd.f32 %v2089, %v2790
  %v2827 = vadd.f32 %v2090, %v2795
  %v2828 = vadd.f32 %v2091, %v2800
  %v2829 = vadd.f32 %v2092, %v2805
  %v2830 = vadd.f32 %v2093, %v2810
  %v2831 = vadd.f32 %v2094, %v2815
  %s2832 = scalar_lea.vmem %s5, 2
  %v2833 = vld [vmem:[%s2832] sm:$0x1]
  %v2834 = vld [vmem:[%s2832 + $0x1] sm:$0x1]
  %v2835 = vsel %vm57, %v2818, 0.0
  %2836 = vadd.xlane.f32.xlu0 %v2835
  %v2837 = vpop.xlane.xlu0 %2836
  %v2838 = vsel %vm57, %v2819, 0.0
  %2839 = vadd.xlane.f32.xlu0 %v2838
  %v2840 = vpop.xlane.xlu0 %2839
  %v2841 = vsel %vm57, %v2820, 0.0
  %2842 = vadd.xlane.f32.xlu0 %v2841
  %v2843 = vpop.xlane.xlu0 %2842
  %v2844 = vsel %vm57, %v2821, 0.0
  %2845 = vadd.xlane.f32.xlu0 %v2844
  %v2846 = vpop.xlane.xlu0 %2845
  %v2847 = vsel %vm57, %v2822, 0.0
  %2848 = vadd.xlane.f32.xlu0 %v2847
  %v2849 = vpop.xlane.xlu0 %2848
  %v2850 = vsel %vm57, %v2823, 0.0
  %2851 = vadd.xlane.f32.xlu0 %v2850
  %v2852 = vpop.xlane.xlu0 %2851
  %v2853 = vsel %vm57, %v2824, 0.0
  %2854 = vadd.xlane.f32.xlu0 %v2853
  %v2855 = vpop.xlane.xlu0 %2854
  %v2856 = vsel %vm57, %v2825, 0.0
  %2857 = vadd.xlane.f32.xlu0 %v2856
  %v2858 = vpop.xlane.xlu0 %2857
  %v2859 = vsel %vm57, %v2826, 0.0
  %2860 = vadd.xlane.f32.xlu0 %v2859
  %v2861 = vpop.xlane.xlu0 %2860
  %v2862 = vsel %vm57, %v2827, 0.0
  %2863 = vadd.xlane.f32.xlu0 %v2862
  %v2864 = vpop.xlane.xlu0 %2863
  %v2865 = vsel %vm57, %v2828, 0.0
  %2866 = vadd.xlane.f32.xlu0 %v2865
  %v2867 = vpop.xlane.xlu0 %2866
  %v2868 = vsel %vm57, %v2829, 0.0
  %2869 = vadd.xlane.f32.xlu0 %v2868
  %v2870 = vpop.xlane.xlu0 %2869
  %v2871 = vsel %vm57, %v2830, 0.0
  %2872 = vadd.xlane.f32.xlu0 %v2871
  %v2873 = vpop.xlane.xlu0 %2872
  %v2874 = vsel %vm57, %v2831, 0.0
  %2875 = vadd.xlane.f32.xlu0 %v2874
  %v2876 = vpop.xlane.xlu0 %2875
  %v2877 = vmul.f32 %v2837, %v100
  %v2878 = vmul.f32 %v2840, %v100
  %v2879 = vmul.f32 %v2843, %v100
  %v2880 = vmul.f32 %v2846, %v100
  %v2881 = vmul.f32 %v2849, %v100
  %v2882 = vmul.f32 %v2852, %v100
  %v2883 = vmul.f32 %v2855, %v100
  %v2884 = vmul.f32 %v2858, %v100
  %v2885 = vmul.f32 %v2861, %v100
  %v2886 = vmul.f32 %v2864, %v100
  %v2887 = vmul.f32 %v2867, %v100
  %v2888 = vmul.f32 %v2870, %v100
  %v2889 = vmul.f32 %v2873, %v100
  %v2890 = vmul.f32 %v2876, %v100
  %v2891 = vsub.f32 %v2818, %v2877
  %v2892 = vsub.f32 %v2819, %v2878
  %v2893 = vsub.f32 %v2820, %v2879
  %v2894 = vsub.f32 %v2821, %v2880
  %v2895 = vsub.f32 %v2822, %v2881
  %v2896 = vsub.f32 %v2823, %v2882
  %v2897 = vsub.f32 %v2824, %v2883
  %v2898 = vsub.f32 %v2825, %v2884
  %v2899 = vsub.f32 %v2826, %v2885
  %v2900 = vsub.f32 %v2827, %v2886
  %v2901 = vsub.f32 %v2828, %v2887
  %v2902 = vsub.f32 %v2829, %v2888
  %v2903 = vsub.f32 %v2830, %v2889
  %v2904 = vsub.f32 %v2831, %v2890
  %v2905 = vmul.f32 %v2891, %v2891
  %v2906 = vmul.f32 %v2892, %v2892
  %v2907 = vmul.f32 %v2893, %v2893
  %v2908 = vmul.f32 %v2894, %v2894
  %v2909 = vmul.f32 %v2895, %v2895
  %v2910 = vmul.f32 %v2896, %v2896
  %v2911 = vmul.f32 %v2897, %v2897
  %v2912 = vmul.f32 %v2898, %v2898
  %v2913 = vmul.f32 %v2899, %v2899
  %v2914 = vmul.f32 %v2900, %v2900
  %v2915 = vmul.f32 %v2901, %v2901
  %v2916 = vmul.f32 %v2902, %v2902
  %v2917 = vmul.f32 %v2903, %v2903
  %v2918 = vmul.f32 %v2904, %v2904
  %v2919 = vsel %vm57, %v2905, 0.0
  %2920 = vadd.xlane.f32.xlu0 %v2919
  %v2921 = vpop.xlane.xlu0 %2920
  %v2922 = vsel %vm57, %v2906, 0.0
  %2923 = vadd.xlane.f32.xlu0 %v2922
  %v2924 = vpop.xlane.xlu0 %2923
  %v2925 = vsel %vm57, %v2907, 0.0
  %2926 = vadd.xlane.f32.xlu0 %v2925
  %v2927 = vpop.xlane.xlu0 %2926
  %v2928 = vsel %vm57, %v2908, 0.0
  %2929 = vadd.xlane.f32.xlu0 %v2928
  %v2930 = vpop.xlane.xlu0 %2929
  %v2931 = vsel %vm57, %v2909, 0.0
  %2932 = vadd.xlane.f32.xlu0 %v2931
  %v2933 = vpop.xlane.xlu0 %2932
  %v2934 = vsel %vm57, %v2910, 0.0
  %2935 = vadd.xlane.f32.xlu0 %v2934
  %v2936 = vpop.xlane.xlu0 %2935
  %v2937 = vsel %vm57, %v2911, 0.0
  %2938 = vadd.xlane.f32.xlu0 %v2937
  %v2939 = vpop.xlane.xlu0 %2938
  %v2940 = vsel %vm57, %v2912, 0.0
  %2941 = vadd.xlane.f32.xlu0 %v2940
  %v2942 = vpop.xlane.xlu0 %2941
  %v2943 = vsel %vm57, %v2913, 0.0
  %2944 = vadd.xlane.f32.xlu0 %v2943
  %v2945 = vpop.xlane.xlu0 %2944
  %v2946 = vsel %vm57, %v2914, 0.0
  %2947 = vadd.xlane.f32.xlu0 %v2946
  %v2948 = vpop.xlane.xlu0 %2947
  %v2949 = vsel %vm57, %v2915, 0.0
  %2950 = vadd.xlane.f32.xlu0 %v2949
  %v2951 = vpop.xlane.xlu0 %2950
  %v2952 = vsel %vm57, %v2916, 0.0
  %2953 = vadd.xlane.f32.xlu0 %v2952
  %v2954 = vpop.xlane.xlu0 %2953
  %v2955 = vsel %vm57, %v2917, 0.0
  %2956 = vadd.xlane.f32.xlu0 %v2955
  %v2957 = vpop.xlane.xlu0 %2956
  %v2958 = vsel %vm57, %v2918, 0.0
  %2959 = vadd.xlane.f32.xlu0 %v2958
  %v2960 = vpop.xlane.xlu0 %2959
  %v2961 = vmul.f32 %v2921, %v100
  %v2962 = vmul.f32 %v2924, %v100
  %v2963 = vmul.f32 %v2927, %v100
  %v2964 = vmul.f32 %v2930, %v100
  %v2965 = vmul.f32 %v2933, %v100
  %v2966 = vmul.f32 %v2936, %v100
  %v2967 = vmul.f32 %v2939, %v100
  %v2968 = vmul.f32 %v2942, %v100
  %v2969 = vmul.f32 %v2945, %v100
  %v2970 = vmul.f32 %v2948, %v100
  %v2971 = vmul.f32 %v2951, %v100
  %v2972 = vmul.f32 %v2954, %v100
  %v2973 = vmul.f32 %v2957, %v100
  %v2974 = vmul.f32 %v2960, %v100
  %v2975 = vadd.f32 %v2961, 1e-05
  %v2976 = vadd.f32 %v2962, 1e-05
  %v2977 = vadd.f32 %v2963, 1e-05
  %v2978 = vadd.f32 %v2964, 1e-05
  %v2979 = vadd.f32 %v2965, 1e-05
  %v2980 = vadd.f32 %v2966, 1e-05
  %v2981 = vadd.f32 %v2967, 1e-05
  %v2982 = vadd.f32 %v2968, 1e-05
  %v2983 = vadd.f32 %v2969, 1e-05
  %v2984 = vadd.f32 %v2970, 1e-05
  %v2985 = vadd.f32 %v2971, 1e-05
  %v2986 = vadd.f32 %v2972, 1e-05
  %v2987 = vadd.f32 %v2973, 1e-05
  %v2988 = vadd.f32 %v2974, 1e-05
  %v2989 = vrsqrt.pop %v2975
  %v2990 = vrsqrt.pop %v2976
  %v2991 = vrsqrt.pop %v2977
  %v2992 = vrsqrt.pop %v2978
  %v2993 = vrsqrt.pop %v2979
  %v2994 = vrsqrt.pop %v2980
  %v2995 = vrsqrt.pop %v2981
  %v2996 = vrsqrt.pop %v2982
  %v2997 = vrsqrt.pop %v2983
  %v2998 = vrsqrt.pop %v2984
  %v2999 = vrsqrt.pop %v2985
  %v3000 = vrsqrt.pop %v2986
  %v3001 = vrsqrt.pop %v2987
  %v3002 = vrsqrt.pop %v2988
  %v3003 = vmul.f32 %v2891, %v2989
  %v3004 = vmul.f32 %v2892, %v2990
  %v3005 = vmul.f32 %v2893, %v2991
  %v3006 = vmul.f32 %v2894, %v2992
  %v3007 = vmul.f32 %v2895, %v2993
  %v3008 = vmul.f32 %v2896, %v2994
  %v3009 = vmul.f32 %v2897, %v2995
  %v3010 = vmul.f32 %v2898, %v2996
  %v3011 = vmul.f32 %v2899, %v2997
  %v3012 = vmul.f32 %v2900, %v2998
  %v3013 = vmul.f32 %v2901, %v2999
  %v3014 = vmul.f32 %v2902, %v3000
  %v3015 = vmul.f32 %v2903, %v3001
  %v3016 = vmul.f32 %v2904, %v3002
  %v3017 = vlaneseq
  %v3018 = vshrl.u32 %v3017, 7
  %v3019 = vsub.s32 0, %v3018
  %v3020 = vrot.slane %v2833, %v3019
  %v3021 = vmul.f32 %v3003, %v3020
  %v3022 = vmul.f32 %v3004, %v3020
  %v3023 = vmul.f32 %v3005, %v3020
  %v3024 = vmul.f32 %v3006, %v3020
  %v3025 = vmul.f32 %v3007, %v3020
  %v3026 = vmul.f32 %v3008, %v3020
  %v3027 = vmul.f32 %v3009, %v3020
  %v3028 = vmul.f32 %v3010, %v3020
  %v3029 = vmul.f32 %v3011, %v3020
  %v3030 = vmul.f32 %v3012, %v3020
  %v3031 = vmul.f32 %v3013, %v3020
  %v3032 = vmul.f32 %v3014, %v3020
  %v3033 = vmul.f32 %v3015, %v3020
  %v3034 = vmul.f32 %v3016, %v3020
  %v3035 = vlaneseq
  %v3036 = vshrl.u32 %v3035, 7
  %v3037 = vsub.s32 0, %v3036
  %v3038 = vrot.slane %v2834, %v3037
  %v3039 = vadd.f32 %v3021, %v3038
  %v3040 = vadd.f32 %v3022, %v3038
  %v3041 = vadd.f32 %v3023, %v3038
  %v3042 = vadd.f32 %v3024, %v3038
  %v3043 = vadd.f32 %v3025, %v3038
  %v3044 = vadd.f32 %v3026, %v3038
  %v3045 = vadd.f32 %v3027, %v3038
  %v3046 = vadd.f32 %v3028, %v3038
  %v3047 = vadd.f32 %v3029, %v3038
  %v3048 = vadd.f32 %v3030, %v3038
  %v3049 = vadd.f32 %v3031, %v3038
  %v3050 = vadd.f32 %v3032, %v3038
  %v3051 = vadd.f32 %v3033, %v3038
  %v3052 = vadd.f32 %v3034, %v3038
  %s3053 = scalar_lea.vmem %s1, 16
  %v3054 = vld [vmem:[%s3053] sm:$0xff]
  %v3055 = vld [vmem:[%s3053 + $0x8] sm:$0xf]
  %v3056 = vld [vmem:[%s2 + $0x1] sm:$0x1]
  %v3057 = vlaneseq
  %v3058 = vshrl.u32 %v3057, 7
  %v3059 = vsub.s32 0, %v3058
  %v3060 = vrot.slane %v3056, %v3059
  %v3062 = vsel %vm57, %v3039, 0
  %v3065 = vsel %vm57, %v3040, 0
  %v3068 = vsel %vm57, %v3041, 0
  %v3071 = vsel %vm57, %v3042, 0
  %v3074 = vsel %vm57, %v3043, 0
  %v3077 = vsel %vm57, %v3044, 0
  %v3080 = vsel %vm57, %v3045, 0
  %v3083 = vsel %vm57, %v3046, 0
  %v3086 = vsel %vm57, %v3047, 0
  %v3089 = vsel %vm57, %v3048, 0
  %v3092 = vsel %vm57, %v3049, 0
  %v3095 = vsel %vm57, %v3050, 0
  %v3098 = vsel %vm57, %v3051, 0
  %v3101 = vsel %vm57, %v3052, 0
  %v3104 = vsel %vm326, %v3055, 0
  %3106 = vmatprep.subr.mxu0 0.0
  %3107 = vmatpush1.msra.mxu0 %v3054
  %3108 = vmatprep.subr.mxu0 0.0
  %3109 = vmatpush1.msra.mxu0 %v3104
  %3110 = vmatprep.subr.mxu0 0.0
  %3111 = vmatpush1.msra.mxu0 0.0
  %3112 = vmatprep.subr.mxu0 0.0
  %3113 = vmatpush1.msra.mxu0 0.0
  %3114 = vmatprep.subr.mxu0 0.0
  %3115 = vmatpush1.msra.mxu0 0.0
  %3116 = vmatprep.subr.mxu0 0.0
  %3117 = vmatpush1.msra.mxu0 0.0
  %3118 = vmatprep.subr.mxu0 0.0
  %3119 = vmatpush1.msra.mxu0 0.0
  %3120 = vmatprep.subr.mxu0 0.0
  %3121 = vmatpush1.msra.mxu0 0.0
  %3122 = vmatprep.subr.mxu0 0.0
  %3123 = vmatpush1.msra.mxu0 0.0
  %3124 = vmatprep.subr.mxu0 0.0
  %3125 = vmatpush1.msra.mxu0 0.0
  %3126 = vmatprep.subr.mxu0 0.0
  %3127 = vmatpush1.msra.mxu0 0.0
  %3128 = vmatprep.subr.mxu0 0.0
  %3129 = vmatpush1.msra.mxu0 0.0
  %3130 = vmatprep.subr.mxu0 0.0
  %3131 = vmatpush1.msra.mxu0 0.0
  %3132 = vmatprep.subr.mxu0 0.0
  %3133 = vmatpush1.msra.mxu0 0.0
  %3134 = vmatprep.subr.mxu0 0.0
  %3135 = vmatpush1.msra.mxu0 0.0
  %3136 = vmatprep.subr.mxu0 0.0
  %3137 = vmatpush1.msra.mxu0 0.0
  %3138 = vmatprep.subr.mxu0 0.0
  %3139 = vmatpush1.msra.mxu0 0.0
  %3140 = vmatprep.subr.mxu0 0.0
  %3141 = vmatpush1.msra.mxu0 0.0
  %3142 = vmatprep.subr.mxu0 0.0
  %3143 = vmatpush1.msra.mxu0 0.0
  %3144 = vmatprep.subr.mxu0 0.0
  %3145 = vmatpush1.msra.mxu0 0.0
  %3146 = vmatprep.subr.mxu0 0.0
  %3147 = vmatpush1.msra.mxu0 0.0
  %3148 = vmatprep.subr.mxu0 0.0
  %3149 = vmatpush1.msra.mxu0 0.0
  %3150 = vmatprep.subr.mxu0 0.0
  %3151 = vmatpush1.msra.mxu0 0.0
  %3152 = vmatprep.subr.mxu0 0.0
  %3153 = vmatpush1.msra.mxu0 0.0
  %3154 = vmatprep.subr.mxu0 0.0
  %3155 = vmatpush1.msra.mxu0 0.0
  %3156 = vmatprep.subr.mxu0 0.0
  %3157 = vmatpush1.msra.mxu0 0.0
  %3158 = vmatprep.subr.mxu0 0.0
  %3159 = vmatpush1.msra.mxu0 0.0
  %3160 = vmatprep.subr.mxu0 0.0
  %3161 = vmatpush1.msra.mxu0 0.0
  %3162 = vmatprep.subr.mxu0 0.0
  %3163 = vmatpush1.msra.mxu0 0.0
  %3164 = vmatprep.subr.mxu0 0.0
  %3165 = vmatpush1.msra.mxu0 0.0
  %3166 = vmatprep.subr.mxu0 0.0
  %3167 = vmatpush1.msra.mxu0 0.0
  %3168 = vmatprep.subr.mxu0 0.0
  %3169 = vmatpush1.msra.mxu0 0.0
  %3170 = vmatprep.mubr.f32.mxu0 0.0
  %3171 = vmatmul.mubr.f32.gmra.mrb[0].mxu0 %v3062
  %v3172 = vpop.f32.mrb[0].mxu0
  %v3173 = vadd.f32 %v3060, %v3172
  %v3174 = vpop.f32.mrb[0].mxu0
  %3175 = vmatprep.mubr.f32.mxu0 0.0
  %3176 = vmatmul.mubr.f32.gmra.mrb[0].mxu0 %v3065
  %v3177 = vpop.f32.mrb[0].mxu0
  %v3178 = vadd.f32 %v3060, %v3177
  %v3179 = vpop.f32.mrb[0].mxu0
  %3180 = vmatprep.mubr.f32.mxu0 0.0
  %3181 = vmatmul.mubr.f32.gmra.mrb[0].mxu0 %v3068
  %v3182 = vpop.f32.mrb[0].mxu0
  %v3183 = vadd.f32 %v3060, %v3182
  %v3184 = vpop.f32.mrb[0].mxu0
  %3185 = vmatprep.mubr.f32.mxu0 0.0
  %3186 = vmatmul.mubr.f32.gmra.mrb[0].mxu0 %v3071
  %v3187 = vpop.f32.mrb[0].mxu0
  %v3188 = vadd.f32 %v3060, %v3187
  %v3189 = vpop.f32.mrb[0].mxu0
  %3190 = vmatprep.mubr.f32.mxu0 0.0
  %3191 = vmatmul.mubr.f32.gmra.mrb[0].mxu0 %v3074
  %v3192 = vpop.f32.mrb[0].mxu0
  %v3193 = vadd.f32 %v3060, %v3192
  %v3194 = vpop.f32.mrb[0].mxu0
  %3195 = vmatprep.mubr.f32.mxu0 0.0
  %3196 = vmatmul.mubr.f32.gmra.mrb[0].mxu0 %v3077
  %v3197 = vpop.f32.mrb[0].mxu0
  %v3198 = vadd.f32 %v3060, %v3197
  %v3199 = vpop.f32.mrb[0].mxu0
  %3200 = vmatprep.mubr.f32.mxu0 0.0
  %3201 = vmatmul.mubr.f32.gmra.mrb[0].mxu0 %v3080
  %v3202 = vpop.f32.mrb[0].mxu0
  %v3203 = vadd.f32 %v3060, %v3202
  %v3204 = vpop.f32.mrb[0].mxu0
  %3205 = vmatprep.mubr.f32.mxu0 0.0
  %3206 = vmatmul.mubr.f32.gmra.mrb[0].mxu0 %v3083
  %v3207 = vpop.f32.mrb[0].mxu0
  %v3208 = vadd.f32 %v3060, %v3207
  %v3209 = vpop.f32.mrb[0].mxu0
  %3210 = vmatprep.mubr.f32.mxu0 0.0
  %3211 = vmatmul.mubr.f32.gmra.mrb[0].mxu0 %v3086
  %v3212 = vpop.f32.mrb[0].mxu0
  %v3213 = vadd.f32 %v3060, %v3212
  %v3214 = vpop.f32.mrb[0].mxu0
  %3215 = vmatprep.mubr.f32.mxu0 0.0
  %3216 = vmatmul.mubr.f32.gmra.mrb[0].mxu0 %v3089
  %v3217 = vpop.f32.mrb[0].mxu0
  %v3218 = vadd.f32 %v3060, %v3217
  %v3219 = vpop.f32.mrb[0].mxu0
  %3220 = vmatprep.mubr.f32.mxu0 0.0
  %3221 = vmatmul.mubr.f32.gmra.mrb[0].mxu0 %v3092
  %v3222 = vpop.f32.mrb[0].mxu0
  %v3223 = vadd.f32 %v3060, %v3222
  %v3224 = vpop.f32.mrb[0].mxu0
  %3225 = vmatprep.mubr.f32.mxu0 0.0
  %3226 = vmatmul.mubr.f32.gmra.mrb[0].mxu0 %v3095
  %v3227 = vpop.f32.mrb[0].mxu0
  %v3228 = vadd.f32 %v3060, %v3227
  %v3229 = vpop.f32.mrb[0].mxu0
  %3230 = vmatprep.mubr.f32.mxu0 0.0
  %3231 = vmatmul.mubr.f32.gmra.mrb[0].mxu0 %v3098
  %v3232 = vpop.f32.mrb[0].mxu0
  %v3233 = vadd.f32 %v3060, %v3232
  %v3234 = vpop.f32.mrb[0].mxu0
  %3235 = vmatprep.mubr.f32.mxu0 0.0
  %3236 = vmatmul.mubr.f32.gmra.mrb[0].mxu0 %v3101
  %v3237 = vpop.f32.mrb[0].mxu0
  %v3238 = vadd.f32 %v3060, %v3237
  %v3239 = vpop.f32.mrb[0].mxu0
  %3240 = vdwg.mxu0
  %3255 = vrot.lane.b32.xlu0 %v3173, 116
  %v3256 = vpop.permute.xlu0 %3255
  %3257 = vrot.lane.b32.xlu0 %v3178, 116
  %v3258 = vpop.permute.xlu0 %3257
  %3259 = vrot.lane.b32.xlu0 %v3183, 116
  %v3260 = vpop.permute.xlu0 %3259
  %3261 = vrot.lane.b32.xlu0 %v3188, 116
  %v3262 = vpop.permute.xlu0 %3261
  %3263 = vrot.lane.b32.xlu0 %v3193, 116
  %v3264 = vpop.permute.xlu0 %3263
  %3265 = vrot.lane.b32.xlu0 %v3198, 116
  %v3266 = vpop.permute.xlu0 %3265
  %3267 = vrot.lane.b32.xlu0 %v3203, 116
  %v3268 = vpop.permute.xlu0 %3267
  %3269 = vrot.lane.b32.xlu0 %v3208, 116
  %v3270 = vpop.permute.xlu0 %3269
  %3271 = vrot.lane.b32.xlu0 %v3213, 116
  %v3272 = vpop.permute.xlu0 %3271
  %3273 = vrot.lane.b32.xlu0 %v3218, 116
  %v3274 = vpop.permute.xlu0 %3273
  %3275 = vrot.lane.b32.xlu0 %v3223, 116
  %v3276 = vpop.permute.xlu0 %3275
  %3277 = vrot.lane.b32.xlu0 %v3228, 116
  %v3278 = vpop.permute.xlu0 %3277
  %3279 = vrot.lane.b32.xlu0 %v3233, 116
  %v3280 = vpop.permute.xlu0 %3279
  %3281 = vrot.lane.b32.xlu0 %v3238, 116
  %v3282 = vpop.permute.xlu0 %3281
  %v3297 = vmul.f32 %v3173, %v3256
  %v3298 = vmul.f32 %v3178, %v3258
  %v3299 = vmul.f32 %v3173, %v3260
  %v3300 = vmul.f32 %v3178, %v3262
  %v3301 = vmul.f32 %v3173, %v3264
  %v3302 = vmul.f32 %v3178, %v3266
  %v3303 = vmul.f32 %v3173, %v3268
  %v3304 = vmul.f32 %v3178, %v3270
  %v3305 = vmul.f32 %v3173, %v3272
  %v3306 = vmul.f32 %v3178, %v3274
  %v3307 = vmul.f32 %v3173, %v3276
  %v3308 = vmul.f32 %v3178, %v3278
  %v3309 = vmul.f32 %v3173, %v3280
  %v3310 = vmul.f32 %v3178, %v3282
  %v3311 = vmul.f32 %v3183, %v3256
  %v3312 = vmul.f32 %v3188, %v3258
  %v3313 = vmul.f32 %v3183, %v3260
  %v3314 = vmul.f32 %v3188, %v3262
  %v3315 = vmul.f32 %v3183, %v3264
  %v3316 = vmul.f32 %v3188, %v3266
  %v3317 = vmul.f32 %v3183, %v3268
  %v3318 = vmul.f32 %v3188, %v3270
  %v3319 = vmul.f32 %v3183, %v3272
  %v3320 = vmul.f32 %v3188, %v3274
  %v3321 = vmul.f32 %v3183, %v3276
  %v3322 = vmul.f32 %v3188, %v3278
  %v3323 = vmul.f32 %v3183, %v3280
  %v3324 = vmul.f32 %v3188, %v3282
  %v3325 = vmul.f32 %v3193, %v3256
  %v3326 = vmul.f32 %v3198, %v3258
  %v3327 = vmul.f32 %v3193, %v3260
  %v3328 = vmul.f32 %v3198, %v3262
  %v3329 = vmul.f32 %v3193, %v3264
  %v3330 = vmul.f32 %v3198, %v3266
  %v3331 = vmul.f32 %v3193, %v3268
  %v3332 = vmul.f32 %v3198, %v3270
  %v3333 = vmul.f32 %v3193, %v3272
  %v3334 = vmul.f32 %v3198, %v3274
  %v3335 = vmul.f32 %v3193, %v3276
  %v3336 = vmul.f32 %v3198, %v3278
  %v3337 = vmul.f32 %v3193, %v3280
  %v3338 = vmul.f32 %v3198, %v3282
  %v3339 = vmul.f32 %v3203, %v3256
  %v3340 = vmul.f32 %v3208, %v3258
  %v3341 = vmul.f32 %v3203, %v3260
  %v3342 = vmul.f32 %v3208, %v3262
  %v3343 = vmul.f32 %v3203, %v3264
  %v3344 = vmul.f32 %v3208, %v3266
  %v3345 = vmul.f32 %v3203, %v3268
  %v3346 = vmul.f32 %v3208, %v3270
  %v3347 = vmul.f32 %v3203, %v3272
  %v3348 = vmul.f32 %v3208, %v3274
  %v3349 = vmul.f32 %v3203, %v3276
  %v3350 = vmul.f32 %v3208, %v3278
  %v3351 = vmul.f32 %v3203, %v3280
  %v3352 = vmul.f32 %v3208, %v3282
  %v3353 = vmul.f32 %v3213, %v3256
  %v3354 = vmul.f32 %v3218, %v3258
  %v3355 = vmul.f32 %v3213, %v3260
  %v3356 = vmul.f32 %v3218, %v3262
  %v3357 = vmul.f32 %v3213, %v3264
  %v3358 = vmul.f32 %v3218, %v3266
  %v3359 = vmul.f32 %v3213, %v3268
  %v3360 = vmul.f32 %v3218, %v3270
  %v3361 = vmul.f32 %v3213, %v3272
  %v3362 = vmul.f32 %v3218, %v3274
  %v3363 = vmul.f32 %v3213, %v3276
  %v3364 = vmul.f32 %v3218, %v3278
  %v3365 = vmul.f32 %v3213, %v3280
  %v3366 = vmul.f32 %v3218, %v3282
  %v3367 = vmul.f32 %v3223, %v3256
  %v3368 = vmul.f32 %v3228, %v3258
  %v3369 = vmul.f32 %v3223, %v3260
  %v3370 = vmul.f32 %v3228, %v3262
  %v3371 = vmul.f32 %v3223, %v3264
  %v3372 = vmul.f32 %v3228, %v3266
  %v3373 = vmul.f32 %v3223, %v3268
  %v3374 = vmul.f32 %v3228, %v3270
  %v3375 = vmul.f32 %v3223, %v3272
  %v3376 = vmul.f32 %v3228, %v3274
  %v3377 = vmul.f32 %v3223, %v3276
  %v3378 = vmul.f32 %v3228, %v3278
  %v3379 = vmul.f32 %v3223, %v3280
  %v3380 = vmul.f32 %v3228, %v3282
  %v3381 = vmul.f32 %v3233, %v3256
  %v3382 = vmul.f32 %v3238, %v3258
  %v3383 = vmul.f32 %v3233, %v3260
  %v3384 = vmul.f32 %v3238, %v3262
  %v3385 = vmul.f32 %v3233, %v3264
  %v3386 = vmul.f32 %v3238, %v3266
  %v3387 = vmul.f32 %v3233, %v3268
  %v3388 = vmul.f32 %v3238, %v3270
  %v3389 = vmul.f32 %v3233, %v3272
  %v3390 = vmul.f32 %v3238, %v3274
  %v3391 = vmul.f32 %v3233, %v3276
  %v3392 = vmul.f32 %v3238, %v3278
  %v3393 = vmul.f32 %v3233, %v3280
  %v3394 = vmul.f32 %v3238, %v3282
  %v3395 = vsel %vm57, %v3297, 0.0
  %3396 = vadd.xlane.f32.xlu0 %v3395
  %v3397 = vpop.xlane.xlu0 %3396
  %v3398 = vsel %vm57, %v3298, 0.0
  %3399 = vadd.xlane.f32.xlu0 %v3398
  %v3400 = vpop.xlane.xlu0 %3399
  %v3401 = vsel %vm57, %v3299, 0.0
  %3402 = vadd.xlane.f32.xlu0 %v3401
  %v3403 = vpop.xlane.xlu0 %3402
  %v3404 = vsel %vm57, %v3300, 0.0
  %3405 = vadd.xlane.f32.xlu0 %v3404
  %v3406 = vpop.xlane.xlu0 %3405
  %v3407 = vsel %vm57, %v3301, 0.0
  %3408 = vadd.xlane.f32.xlu0 %v3407
  %v3409 = vpop.xlane.xlu0 %3408
  %v3410 = vsel %vm57, %v3302, 0.0
  %3411 = vadd.xlane.f32.xlu0 %v3410
  %v3412 = vpop.xlane.xlu0 %3411
  %v3413 = vsel %vm57, %v3303, 0.0
  %3414 = vadd.xlane.f32.xlu0 %v3413
  %v3415 = vpop.xlane.xlu0 %3414
  %v3416 = vsel %vm57, %v3304, 0.0
  %3417 = vadd.xlane.f32.xlu0 %v3416
  %v3418 = vpop.xlane.xlu0 %3417
  %v3419 = vsel %vm57, %v3305, 0.0
  %3420 = vadd.xlane.f32.xlu0 %v3419
  %v3421 = vpop.xlane.xlu0 %3420
  %v3422 = vsel %vm57, %v3306, 0.0
  %3423 = vadd.xlane.f32.xlu0 %v3422
  %v3424 = vpop.xlane.xlu0 %3423
  %v3425 = vsel %vm57, %v3307, 0.0
  %3426 = vadd.xlane.f32.xlu0 %v3425
  %v3427 = vpop.xlane.xlu0 %3426
  %v3428 = vsel %vm57, %v3308, 0.0
  %3429 = vadd.xlane.f32.xlu0 %v3428
  %v3430 = vpop.xlane.xlu0 %3429
  %v3431 = vsel %vm57, %v3309, 0.0
  %3432 = vadd.xlane.f32.xlu0 %v3431
  %v3433 = vpop.xlane.xlu0 %3432
  %v3434 = vsel %vm57, %v3310, 0.0
  %3435 = vadd.xlane.f32.xlu0 %v3434
  %v3436 = vpop.xlane.xlu0 %3435
  %v3437 = vsel %vm57, %v3311, 0.0
  %3438 = vadd.xlane.f32.xlu0 %v3437
  %v3439 = vpop.xlane.xlu0 %3438
  %v3440 = vsel %vm57, %v3312, 0.0
  %3441 = vadd.xlane.f32.xlu0 %v3440
  %v3442 = vpop.xlane.xlu0 %3441
  %v3443 = vsel %vm57, %v3313, 0.0
  %3444 = vadd.xlane.f32.xlu0 %v3443
  %v3445 = vpop.xlane.xlu0 %3444
  %v3446 = vsel %vm57, %v3314, 0.0
  %3447 = vadd.xlane.f32.xlu0 %v3446
  %v3448 = vpop.xlane.xlu0 %3447
  %v3449 = vsel %vm57, %v3315, 0.0
  %3450 = vadd.xlane.f32.xlu0 %v3449
  %v3451 = vpop.xlane.xlu0 %3450
  %v3452 = vsel %vm57, %v3316, 0.0
  %3453 = vadd.xlane.f32.xlu0 %v3452
  %v3454 = vpop.xlane.xlu0 %3453
  %v3455 = vsel %vm57, %v3317, 0.0
  %3456 = vadd.xlane.f32.xlu0 %v3455
  %v3457 = vpop.xlane.xlu0 %3456
  %v3458 = vsel %vm57, %v3318, 0.0
  %3459 = vadd.xlane.f32.xlu0 %v3458
  %v3460 = vpop.xlane.xlu0 %3459
  %v3461 = vsel %vm57, %v3319, 0.0
  %3462 = vadd.xlane.f32.xlu0 %v3461
  %v3463 = vpop.xlane.xlu0 %3462
  %v3464 = vsel %vm57, %v3320, 0.0
  %3465 = vadd.xlane.f32.xlu0 %v3464
  %v3466 = vpop.xlane.xlu0 %3465
  %v3467 = vsel %vm57, %v3321, 0.0
  %3468 = vadd.xlane.f32.xlu0 %v3467
  %v3469 = vpop.xlane.xlu0 %3468
  %v3470 = vsel %vm57, %v3322, 0.0
  %3471 = vadd.xlane.f32.xlu0 %v3470
  %v3472 = vpop.xlane.xlu0 %3471
  %v3473 = vsel %vm57, %v3323, 0.0
  %3474 = vadd.xlane.f32.xlu0 %v3473
  %v3475 = vpop.xlane.xlu0 %3474
  %v3476 = vsel %vm57, %v3324, 0.0
  %3477 = vadd.xlane.f32.xlu0 %v3476
  %v3478 = vpop.xlane.xlu0 %3477
  %v3479 = vsel %vm57, %v3325, 0.0
  %3480 = vadd.xlane.f32.xlu0 %v3479
  %v3481 = vpop.xlane.xlu0 %3480
  %v3482 = vsel %vm57, %v3326, 0.0
  %3483 = vadd.xlane.f32.xlu0 %v3482
  %v3484 = vpop.xlane.xlu0 %3483
  %v3485 = vsel %vm57, %v3327, 0.0
  %3486 = vadd.xlane.f32.xlu0 %v3485
  %v3487 = vpop.xlane.xlu0 %3486
  %v3488 = vsel %vm57, %v3328, 0.0
  %3489 = vadd.xlane.f32.xlu0 %v3488
  %v3490 = vpop.xlane.xlu0 %3489
  %v3491 = vsel %vm57, %v3329, 0.0
  %3492 = vadd.xlane.f32.xlu0 %v3491
  %v3493 = vpop.xlane.xlu0 %3492
  %v3494 = vsel %vm57, %v3330, 0.0
  %3495 = vadd.xlane.f32.xlu0 %v3494
  %v3496 = vpop.xlane.xlu0 %3495
  %v3497 = vsel %vm57, %v3331, 0.0
  %3498 = vadd.xlane.f32.xlu0 %v3497
  %v3499 = vpop.xlane.xlu0 %3498
  %v3500 = vsel %vm57, %v3332, 0.0
  %3501 = vadd.xlane.f32.xlu0 %v3500
  %v3502 = vpop.xlane.xlu0 %3501
  %v3503 = vsel %vm57, %v3333, 0.0
  %3504 = vadd.xlane.f32.xlu0 %v3503
  %v3505 = vpop.xlane.xlu0 %3504
  %v3506 = vsel %vm57, %v3334, 0.0
  %3507 = vadd.xlane.f32.xlu0 %v3506
  %v3508 = vpop.xlane.xlu0 %3507
  %v3509 = vsel %vm57, %v3335, 0.0
  %3510 = vadd.xlane.f32.xlu0 %v3509
  %v3511 = vpop.xlane.xlu0 %3510
  %v3512 = vsel %vm57, %v3336, 0.0
  %3513 = vadd.xlane.f32.xlu0 %v3512
  %v3514 = vpop.xlane.xlu0 %3513
  %v3515 = vsel %vm57, %v3337, 0.0
  %3516 = vadd.xlane.f32.xlu0 %v3515
  %v3517 = vpop.xlane.xlu0 %3516
  %v3518 = vsel %vm57, %v3338, 0.0
  %3519 = vadd.xlane.f32.xlu0 %v3518
  %v3520 = vpop.xlane.xlu0 %3519
  %v3521 = vsel %vm57, %v3339, 0.0
  %3522 = vadd.xlane.f32.xlu0 %v3521
  %v3523 = vpop.xlane.xlu0 %3522
  %v3524 = vsel %vm57, %v3340, 0.0
  %3525 = vadd.xlane.f32.xlu0 %v3524
  %v3526 = vpop.xlane.xlu0 %3525
  %v3527 = vsel %vm57, %v3341, 0.0
  %3528 = vadd.xlane.f32.xlu0 %v3527
  %v3529 = vpop.xlane.xlu0 %3528
  %v3530 = vsel %vm57, %v3342, 0.0
  %3531 = vadd.xlane.f32.xlu0 %v3530
  %v3532 = vpop.xlane.xlu0 %3531
  %v3533 = vsel %vm57, %v3343, 0.0
  %3534 = vadd.xlane.f32.xlu0 %v3533
  %v3535 = vpop.xlane.xlu0 %3534
  %v3536 = vsel %vm57, %v3344, 0.0
  %3537 = vadd.xlane.f32.xlu0 %v3536
  %v3538 = vpop.xlane.xlu0 %3537
  %v3539 = vsel %vm57, %v3345, 0.0
  %3540 = vadd.xlane.f32.xlu0 %v3539
  %v3541 = vpop.xlane.xlu0 %3540
  %v3542 = vsel %vm57, %v3346, 0.0
  %3543 = vadd.xlane.f32.xlu0 %v3542
  %v3544 = vpop.xlane.xlu0 %3543
  %v3545 = vsel %vm57, %v3347, 0.0
  %3546 = vadd.xlane.f32.xlu0 %v3545
  %v3547 = vpop.xlane.xlu0 %3546
  %v3548 = vsel %vm57, %v3348, 0.0
  %3549 = vadd.xlane.f32.xlu0 %v3548
  %v3550 = vpop.xlane.xlu0 %3549
  %v3551 = vsel %vm57, %v3349, 0.0
  %3552 = vadd.xlane.f32.xlu0 %v3551
  %v3553 = vpop.xlane.xlu0 %3552
  %v3554 = vsel %vm57, %v3350, 0.0
  %3555 = vadd.xlane.f32.xlu0 %v3554
  %v3556 = vpop.xlane.xlu0 %3555
  %v3557 = vsel %vm57, %v3351, 0.0
  %3558 = vadd.xlane.f32.xlu0 %v3557
  %v3559 = vpop.xlane.xlu0 %3558
  %v3560 = vsel %vm57, %v3352, 0.0
  %3561 = vadd.xlane.f32.xlu0 %v3560
  %v3562 = vpop.xlane.xlu0 %3561
  %v3563 = vsel %vm57, %v3353, 0.0
  %3564 = vadd.xlane.f32.xlu0 %v3563
  %v3565 = vpop.xlane.xlu0 %3564
  %v3566 = vsel %vm57, %v3354, 0.0
  %3567 = vadd.xlane.f32.xlu0 %v3566
  %v3568 = vpop.xlane.xlu0 %3567
  %v3569 = vsel %vm57, %v3355, 0.0
  %3570 = vadd.xlane.f32.xlu0 %v3569
  %v3571 = vpop.xlane.xlu0 %3570
  %v3572 = vsel %vm57, %v3356, 0.0
  %3573 = vadd.xlane.f32.xlu0 %v3572
  %v3574 = vpop.xlane.xlu0 %3573
  %v3575 = vsel %vm57, %v3357, 0.0
  %3576 = vadd.xlane.f32.xlu0 %v3575
  %v3577 = vpop.xlane.xlu0 %3576
  %v3578 = vsel %vm57, %v3358, 0.0
  %3579 = vadd.xlane.f32.xlu0 %v3578
  %v3580 = vpop.xlane.xlu0 %3579
  %v3581 = vsel %vm57, %v3359, 0.0
  %3582 = vadd.xlane.f32.xlu0 %v3581
  %v3583 = vpop.xlane.xlu0 %3582
  %v3584 = vsel %vm57, %v3360, 0.0
  %3585 = vadd.xlane.f32.xlu0 %v3584
  %v3586 = vpop.xlane.xlu0 %3585
  %v3587 = vsel %vm57, %v3361, 0.0
  %3588 = vadd.xlane.f32.xlu0 %v3587
  %v3589 = vpop.xlane.xlu0 %3588
  %v3590 = vsel %vm57, %v3362, 0.0
  %3591 = vadd.xlane.f32.xlu0 %v3590
  %v3592 = vpop.xlane.xlu0 %3591
  %v3593 = vsel %vm57, %v3363, 0.0
  %3594 = vadd.xlane.f32.xlu0 %v3593
  %v3595 = vpop.xlane.xlu0 %3594
  %v3596 = vsel %vm57, %v3364, 0.0
  %3597 = vadd.xlane.f32.xlu0 %v3596
  %v3598 = vpop.xlane.xlu0 %3597
  %v3599 = vsel %vm57, %v3365, 0.0
  %3600 = vadd.xlane.f32.xlu0 %v3599
  %v3601 = vpop.xlane.xlu0 %3600
  %v3602 = vsel %vm57, %v3366, 0.0
  %3603 = vadd.xlane.f32.xlu0 %v3602
  %v3604 = vpop.xlane.xlu0 %3603
  %v3605 = vsel %vm57, %v3367, 0.0
  %3606 = vadd.xlane.f32.xlu0 %v3605
  %v3607 = vpop.xlane.xlu0 %3606
  %v3608 = vsel %vm57, %v3368, 0.0
  %3609 = vadd.xlane.f32.xlu0 %v3608
  %v3610 = vpop.xlane.xlu0 %3609
  %v3611 = vsel %vm57, %v3369, 0.0
  %3612 = vadd.xlane.f32.xlu0 %v3611
  %v3613 = vpop.xlane.xlu0 %3612
  %v3614 = vsel %vm57, %v3370, 0.0
  %3615 = vadd.xlane.f32.xlu0 %v3614
  %v3616 = vpop.xlane.xlu0 %3615
  %v3617 = vsel %vm57, %v3371, 0.0
  %3618 = vadd.xlane.f32.xlu0 %v3617
  %v3619 = vpop.xlane.xlu0 %3618
  %v3620 = vsel %vm57, %v3372, 0.0
  %3621 = vadd.xlane.f32.xlu0 %v3620
  %v3622 = vpop.xlane.xlu0 %3621
  %v3623 = vsel %vm57, %v3373, 0.0
  %3624 = vadd.xlane.f32.xlu0 %v3623
  %v3625 = vpop.xlane.xlu0 %3624
  %v3626 = vsel %vm57, %v3374, 0.0
  %3627 = vadd.xlane.f32.xlu0 %v3626
  %v3628 = vpop.xlane.xlu0 %3627
  %v3629 = vsel %vm57, %v3375, 0.0
  %3630 = vadd.xlane.f32.xlu0 %v3629
  %v3631 = vpop.xlane.xlu0 %3630
  %v3632 = vsel %vm57, %v3376, 0.0
  %3633 = vadd.xlane.f32.xlu0 %v3632
  %v3634 = vpop.xlane.xlu0 %3633
  %v3635 = vsel %vm57, %v3377, 0.0
  %3636 = vadd.xlane.f32.xlu0 %v3635
  %v3637 = vpop.xlane.xlu0 %3636
  %v3638 = vsel %vm57, %v3378, 0.0
  %3639 = vadd.xlane.f32.xlu0 %v3638
  %v3640 = vpop.xlane.xlu0 %3639
  %v3641 = vsel %vm57, %v3379, 0.0
  %3642 = vadd.xlane.f32.xlu0 %v3641
  %v3643 = vpop.xlane.xlu0 %3642
  %v3644 = vsel %vm57, %v3380, 0.0
  %3645 = vadd.xlane.f32.xlu0 %v3644
  %v3646 = vpop.xlane.xlu0 %3645
  %v3647 = vsel %vm57, %v3381, 0.0
  %3648 = vadd.xlane.f32.xlu0 %v3647
  %v3649 = vpop.xlane.xlu0 %3648
  %v3650 = vsel %vm57, %v3382, 0.0
  %3651 = vadd.xlane.f32.xlu0 %v3650
  %v3652 = vpop.xlane.xlu0 %3651
  %v3653 = vsel %vm57, %v3383, 0.0
  %3654 = vadd.xlane.f32.xlu0 %v3653
  %v3655 = vpop.xlane.xlu0 %3654
  %v3656 = vsel %vm57, %v3384, 0.0
  %3657 = vadd.xlane.f32.xlu0 %v3656
  %v3658 = vpop.xlane.xlu0 %3657
  %v3659 = vsel %vm57, %v3385, 0.0
  %3660 = vadd.xlane.f32.xlu0 %v3659
  %v3661 = vpop.xlane.xlu0 %3660
  %v3662 = vsel %vm57, %v3386, 0.0
  %3663 = vadd.xlane.f32.xlu0 %v3662
  %v3664 = vpop.xlane.xlu0 %3663
  %v3665 = vsel %vm57, %v3387, 0.0
  %3666 = vadd.xlane.f32.xlu0 %v3665
  %v3667 = vpop.xlane.xlu0 %3666
  %v3668 = vsel %vm57, %v3388, 0.0
  %3669 = vadd.xlane.f32.xlu0 %v3668
  %v3670 = vpop.xlane.xlu0 %3669
  %v3671 = vsel %vm57, %v3389, 0.0
  %3672 = vadd.xlane.f32.xlu0 %v3671
  %v3673 = vpop.xlane.xlu0 %3672
  %v3674 = vsel %vm57, %v3390, 0.0
  %3675 = vadd.xlane.f32.xlu0 %v3674
  %v3676 = vpop.xlane.xlu0 %3675
  %v3677 = vsel %vm57, %v3391, 0.0
  %3678 = vadd.xlane.f32.xlu0 %v3677
  %v3679 = vpop.xlane.xlu0 %3678
  %v3680 = vsel %vm57, %v3392, 0.0
  %3681 = vadd.xlane.f32.xlu0 %v3680
  %v3682 = vpop.xlane.xlu0 %3681
  %v3683 = vsel %vm57, %v3393, 0.0
  %3684 = vadd.xlane.f32.xlu0 %v3683
  %v3685 = vpop.xlane.xlu0 %3684
  %v3686 = vsel %vm57, %v3394, 0.0
  %3687 = vadd.xlane.f32.xlu0 %v3686
  %v3688 = vpop.xlane.xlu0 %3687
  %v3689 = vmul.f32 %v3397, 0.28867513
  %v3690 = vmul.f32 %v3400, 0.28867513
  %v3691 = vmul.f32 %v3403, 0.28867513
  %v3692 = vmul.f32 %v3406, 0.28867513
  %v3693 = vmul.f32 %v3409, 0.28867513
  %v3694 = vmul.f32 %v3412, 0.28867513
  %v3695 = vmul.f32 %v3415, 0.28867513
  %v3696 = vmul.f32 %v3418, 0.28867513
  %v3697 = vmul.f32 %v3421, 0.28867513
  %v3698 = vmul.f32 %v3424, 0.28867513
  %v3699 = vmul.f32 %v3427, 0.28867513
  %v3700 = vmul.f32 %v3430, 0.28867513
  %v3701 = vmul.f32 %v3433, 0.28867513
  %v3702 = vmul.f32 %v3436, 0.28867513
  %v3703 = vmul.f32 %v3439, 0.28867513
  %v3704 = vmul.f32 %v3442, 0.28867513
  %v3705 = vmul.f32 %v3445, 0.28867513
  %v3706 = vmul.f32 %v3448, 0.28867513
  %v3707 = vmul.f32 %v3451, 0.28867513
  %v3708 = vmul.f32 %v3454, 0.28867513
  %v3709 = vmul.f32 %v3457, 0.28867513
  %v3710 = vmul.f32 %v3460, 0.28867513
  %v3711 = vmul.f32 %v3463, 0.28867513
  %v3712 = vmul.f32 %v3466, 0.28867513
  %v3713 = vmul.f32 %v3469, 0.28867513
  %v3714 = vmul.f32 %v3472, 0.28867513
  %v3715 = vmul.f32 %v3475, 0.28867513
  %v3716 = vmul.f32 %v3478, 0.28867513
  %v3717 = vmul.f32 %v3481, 0.28867513
  %v3718 = vmul.f32 %v3484, 0.28867513
  %v3719 = vmul.f32 %v3487, 0.28867513
  %v3720 = vmul.f32 %v3490, 0.28867513
  %v3721 = vmul.f32 %v3493, 0.28867513
  %v3722 = vmul.f32 %v3496, 0.28867513
  %v3723 = vmul.f32 %v3499, 0.28867513
  %v3724 = vmul.f32 %v3502, 0.28867513
  %v3725 = vmul.f32 %v3505, 0.28867513
  %v3726 = vmul.f32 %v3508, 0.28867513
  %v3727 = vmul.f32 %v3511, 0.28867513
  %v3728 = vmul.f32 %v3514, 0.28867513
  %v3729 = vmul.f32 %v3517, 0.28867513
  %v3730 = vmul.f32 %v3520, 0.28867513
  %v3731 = vmul.f32 %v3523, 0.28867513
  %v3732 = vmul.f32 %v3526, 0.28867513
  %v3733 = vmul.f32 %v3529, 0.28867513
  %v3734 = vmul.f32 %v3532, 0.28867513
  %v3735 = vmul.f32 %v3535, 0.28867513
  %v3736 = vmul.f32 %v3538, 0.28867513
  %v3737 = vmul.f32 %v3541, 0.28867513
  %v3738 = vmul.f32 %v3544, 0.28867513
  %v3739 = vmul.f32 %v3547, 0.28867513
  %v3740 = vmul.f32 %v3550, 0.28867513
  %v3741 = vmul.f32 %v3553, 0.28867513
  %v3742 = vmul.f32 %v3556, 0.28867513
  %v3743 = vmul.f32 %v3559, 0.28867513
  %v3744 = vmul.f32 %v3562, 0.28867513
  %v3745 = vmul.f32 %v3565, 0.28867513
  %v3746 = vmul.f32 %v3568, 0.28867513
  %v3747 = vmul.f32 %v3571, 0.28867513
  %v3748 = vmul.f32 %v3574, 0.28867513
  %v3749 = vmul.f32 %v3577, 0.28867513
  %v3750 = vmul.f32 %v3580, 0.28867513
  %v3751 = vmul.f32 %v3583, 0.28867513
  %v3752 = vmul.f32 %v3586, 0.28867513
  %v3753 = vmul.f32 %v3589, 0.28867513
  %v3754 = vmul.f32 %v3592, 0.28867513
  %v3755 = vmul.f32 %v3595, 0.28867513
  %v3756 = vmul.f32 %v3598, 0.28867513
  %v3757 = vmul.f32 %v3601, 0.28867513
  %v3758 = vmul.f32 %v3604, 0.28867513
  %v3759 = vmul.f32 %v3607, 0.28867513
  %v3760 = vmul.f32 %v3610, 0.28867513
  %v3761 = vmul.f32 %v3613, 0.28867513
  %v3762 = vmul.f32 %v3616, 0.28867513
  %v3763 = vmul.f32 %v3619, 0.28867513
  %v3764 = vmul.f32 %v3622, 0.28867513
  %v3765 = vmul.f32 %v3625, 0.28867513
  %v3766 = vmul.f32 %v3628, 0.28867513
  %v3767 = vmul.f32 %v3631, 0.28867513
  %v3768 = vmul.f32 %v3634, 0.28867513
  %v3769 = vmul.f32 %v3637, 0.28867513
  %v3770 = vmul.f32 %v3640, 0.28867513
  %v3771 = vmul.f32 %v3643, 0.28867513
  %v3772 = vmul.f32 %v3646, 0.28867513
  %v3773 = vmul.f32 %v3649, 0.28867513
  %v3774 = vmul.f32 %v3652, 0.28867513
  %v3775 = vmul.f32 %v3655, 0.28867513
  %v3776 = vmul.f32 %v3658, 0.28867513
  %v3777 = vmul.f32 %v3661, 0.28867513
  %v3778 = vmul.f32 %v3664, 0.28867513
  %v3779 = vmul.f32 %v3667, 0.28867513
  %v3780 = vmul.f32 %v3670, 0.28867513
  %v3781 = vmul.f32 %v3673, 0.28867513
  %v3782 = vmul.f32 %v3676, 0.28867513
  %v3783 = vmul.f32 %v3679, 0.28867513
  %v3784 = vmul.f32 %v3682, 0.28867513
  %v3785 = vmul.f32 %v3685, 0.28867513
  %v3786 = vmul.f32 %v3688, 0.28867513
  %v3787 = vmax.f32 %v3689, %v3691
  %v3788 = vmax.f32 %v3787, %v3693
  %v3789 = vmax.f32 %v3788, %v3695
  %v3790 = vmax.f32 %v3789, %v3697
  %v3791 = vmax.f32 %v3790, %v3699
  %v3792 = vmax.f32 %v3791, %v3701
  %v3793 = vmax.f32 %v3690, %v3692
  %v3794 = vmax.f32 %v3793, %v3694
  %v3795 = vmax.f32 %v3794, %v3696
  %v3796 = vmax.f32 %v3795, %v3698
  %v3797 = vmax.f32 %v3796, %v3700
  %v3798 = vmax.f32 %v3797, %v3702
  %v3799 = vmax.f32 %v3703, %v3705
  %v3800 = vmax.f32 %v3799, %v3707
  %v3801 = vmax.f32 %v3800, %v3709
  %v3802 = vmax.f32 %v3801, %v3711
  %v3803 = vmax.f32 %v3802, %v3713
  %v3804 = vmax.f32 %v3803, %v3715
  %v3805 = vmax.f32 %v3704, %v3706
  %v3806 = vmax.f32 %v3805, %v3708
  %v3807 = vmax.f32 %v3806, %v3710
  %v3808 = vmax.f32 %v3807, %v3712
  %v3809 = vmax.f32 %v3808, %v3714
  %v3810 = vmax.f32 %v3809, %v3716
  %v3811 = vmax.f32 %v3717, %v3719
  %v3812 = vmax.f32 %v3811, %v3721
  %v3813 = vmax.f32 %v3812, %v3723
  %v3814 = vmax.f32 %v3813, %v3725
  %v3815 = vmax.f32 %v3814, %v3727
  %v3816 = vmax.f32 %v3815, %v3729
  %v3817 = vmax.f32 %v3718, %v3720
  %v3818 = vmax.f32 %v3817, %v3722
  %v3819 = vmax.f32 %v3818, %v3724
  %v3820 = vmax.f32 %v3819, %v3726
  %v3821 = vmax.f32 %v3820, %v3728
  %v3822 = vmax.f32 %v3821, %v3730
  %v3823 = vmax.f32 %v3731, %v3733
  %v3824 = vmax.f32 %v3823, %v3735
  %v3825 = vmax.f32 %v3824, %v3737
  %v3826 = vmax.f32 %v3825, %v3739
  %v3827 = vmax.f32 %v3826, %v3741
  %v3828 = vmax.f32 %v3827, %v3743
  %v3829 = vmax.f32 %v3732, %v3734
  %v3830 = vmax.f32 %v3829, %v3736
  %v3831 = vmax.f32 %v3830, %v3738
  %v3832 = vmax.f32 %v3831, %v3740
  %v3833 = vmax.f32 %v3832, %v3742
  %v3834 = vmax.f32 %v3833, %v3744
  %v3835 = vmax.f32 %v3745, %v3747
  %v3836 = vmax.f32 %v3835, %v3749
  %v3837 = vmax.f32 %v3836, %v3751
  %v3838 = vmax.f32 %v3837, %v3753
  %v3839 = vmax.f32 %v3838, %v3755
  %v3840 = vmax.f32 %v3839, %v3757
  %v3841 = vmax.f32 %v3746, %v3748
  %v3842 = vmax.f32 %v3841, %v3750
  %v3843 = vmax.f32 %v3842, %v3752
  %v3844 = vmax.f32 %v3843, %v3754
  %v3845 = vmax.f32 %v3844, %v3756
  %v3846 = vmax.f32 %v3845, %v3758
  %v3847 = vmax.f32 %v3759, %v3761
  %v3848 = vmax.f32 %v3847, %v3763
  %v3849 = vmax.f32 %v3848, %v3765
  %v3850 = vmax.f32 %v3849, %v3767
  %v3851 = vmax.f32 %v3850, %v3769
  %v3852 = vmax.f32 %v3851, %v3771
  %v3853 = vmax.f32 %v3760, %v3762
  %v3854 = vmax.f32 %v3853, %v3764
  %v3855 = vmax.f32 %v3854, %v3766
  %v3856 = vmax.f32 %v3855, %v3768
  %v3857 = vmax.f32 %v3856, %v3770
  %v3858 = vmax.f32 %v3857, %v3772
  %v3859 = vmax.f32 %v3773, %v3775
  %v3860 = vmax.f32 %v3859, %v3777
  %v3861 = vmax.f32 %v3860, %v3779
  %v3862 = vmax.f32 %v3861, %v3781
  %v3863 = vmax.f32 %v3862, %v3783
  %v3864 = vmax.f32 %v3863, %v3785
  %v3865 = vmax.f32 %v3774, %v3776
  %v3866 = vmax.f32 %v3865, %v3778
  %v3867 = vmax.f32 %v3866, %v3780
  %v3868 = vmax.f32 %v3867, %v3782
  %v3869 = vmax.f32 %v3868, %v3784
  %v3870 = vmax.f32 %v3869, %v3786
  %v3871 = vsub.f32 %v3689, %v3792
  %v3872 = vsub.f32 %v3690, %v3798
  %v3873 = vsub.f32 %v3691, %v3792
  %v3874 = vsub.f32 %v3692, %v3798
  %v3875 = vsub.f32 %v3693, %v3792
  %v3876 = vsub.f32 %v3694, %v3798
  %v3877 = vsub.f32 %v3695, %v3792
  %v3878 = vsub.f32 %v3696, %v3798
  %v3879 = vsub.f32 %v3697, %v3792
  %v3880 = vsub.f32 %v3698, %v3798
  %v3881 = vsub.f32 %v3699, %v3792
  %v3882 = vsub.f32 %v3700, %v3798
  %v3883 = vsub.f32 %v3701, %v3792
  %v3884 = vsub.f32 %v3702, %v3798
  %v3885 = vsub.f32 %v3703, %v3804
  %v3886 = vsub.f32 %v3704, %v3810
  %v3887 = vsub.f32 %v3705, %v3804
  %v3888 = vsub.f32 %v3706, %v3810
  %v3889 = vsub.f32 %v3707, %v3804
  %v3890 = vsub.f32 %v3708, %v3810
  %v3891 = vsub.f32 %v3709, %v3804
  %v3892 = vsub.f32 %v3710, %v3810
  %v3893 = vsub.f32 %v3711, %v3804
  %v3894 = vsub.f32 %v3712, %v3810
  %v3895 = vsub.f32 %v3713, %v3804
  %v3896 = vsub.f32 %v3714, %v3810
  %v3897 = vsub.f32 %v3715, %v3804
  %v3898 = vsub.f32 %v3716, %v3810
  %v3899 = vsub.f32 %v3717, %v3816
  %v3900 = vsub.f32 %v3718, %v3822
  %v3901 = vsub.f32 %v3719, %v3816
  %v3902 = vsub.f32 %v3720, %v3822
  %v3903 = vsub.f32 %v3721, %v3816
  %v3904 = vsub.f32 %v3722, %v3822
  %v3905 = vsub.f32 %v3723, %v3816
  %v3906 = vsub.f32 %v3724, %v3822
  %v3907 = vsub.f32 %v3725, %v3816
  %v3908 = vsub.f32 %v3726, %v3822
  %v3909 = vsub.f32 %v3727, %v3816
  %v3910 = vsub.f32 %v3728, %v3822
  %v3911 = vsub.f32 %v3729, %v3816
  %v3912 = vsub.f32 %v3730, %v3822
  %v3913 = vsub.f32 %v3731, %v3828
  %v3914 = vsub.f32 %v3732, %v3834
  %v3915 = vsub.f32 %v3733, %v3828
  %v3916 = vsub.f32 %v3734, %v3834
  %v3917 = vsub.f32 %v3735, %v3828
  %v3918 = vsub.f32 %v3736, %v3834
  %v3919 = vsub.f32 %v3737, %v3828
  %v3920 = vsub.f32 %v3738, %v3834
  %v3921 = vsub.f32 %v3739, %v3828
  %v3922 = vsub.f32 %v3740, %v3834
  %v3923 = vsub.f32 %v3741, %v3828
  %v3924 = vsub.f32 %v3742, %v3834
  %v3925 = vsub.f32 %v3743, %v3828
  %v3926 = vsub.f32 %v3744, %v3834
  %v3927 = vsub.f32 %v3745, %v3840
  %v3928 = vsub.f32 %v3746, %v3846
  %v3929 = vsub.f32 %v3747, %v3840
  %v3930 = vsub.f32 %v3748, %v3846
  %v3931 = vsub.f32 %v3749, %v3840
  %v3932 = vsub.f32 %v3750, %v3846
  %v3933 = vsub.f32 %v3751, %v3840
  %v3934 = vsub.f32 %v3752, %v3846
  %v3935 = vsub.f32 %v3753, %v3840
  %v3936 = vsub.f32 %v3754, %v3846
  %v3937 = vsub.f32 %v3755, %v3840
  %v3938 = vsub.f32 %v3756, %v3846
  %v3939 = vsub.f32 %v3757, %v3840
  %v3940 = vsub.f32 %v3758, %v3846
  %v3941 = vsub.f32 %v3759, %v3852
  %v3942 = vsub.f32 %v3760, %v3858
  %v3943 = vsub.f32 %v3761, %v3852
  %v3944 = vsub.f32 %v3762, %v3858
  %v3945 = vsub.f32 %v3763, %v3852
  %v3946 = vsub.f32 %v3764, %v3858
  %v3947 = vsub.f32 %v3765, %v3852
  %v3948 = vsub.f32 %v3766, %v3858
  %v3949 = vsub.f32 %v3767, %v3852
  %v3950 = vsub.f32 %v3768, %v3858
  %v3951 = vsub.f32 %v3769, %v3852
  %v3952 = vsub.f32 %v3770, %v3858
  %v3953 = vsub.f32 %v3771, %v3852
  %v3954 = vsub.f32 %v3772, %v3858
  %v3955 = vsub.f32 %v3773, %v3864
  %v3956 = vsub.f32 %v3774, %v3870
  %v3957 = vsub.f32 %v3775, %v3864
  %v3958 = vsub.f32 %v3776, %v3870
  %v3959 = vsub.f32 %v3777, %v3864
  %v3960 = vsub.f32 %v3778, %v3870
  %v3961 = vsub.f32 %v3779, %v3864
  %v3962 = vsub.f32 %v3780, %v3870
  %v3963 = vsub.f32 %v3781, %v3864
  %v3964 = vsub.f32 %v3782, %v3870
  %v3965 = vsub.f32 %v3783, %v3864
  %v3966 = vsub.f32 %v3784, %v3870
  %v3967 = vsub.f32 %v3785, %v3864
  %v3968 = vsub.f32 %v3786, %v3870
  %v3969 = vmul.f32 %v3871, 1.442695
  %v3970 = vpow.pop %v3969
  %v3971 = vmul.f32 %v3872, 1.442695
  %v3972 = vpow.pop %v3971
  %v3973 = vmul.f32 %v3873, 1.442695
  %v3974 = vpow.pop %v3973
  %v3975 = vmul.f32 %v3874, 1.442695
  %v3976 = vpow.pop %v3975
  %v3977 = vmul.f32 %v3875, 1.442695
  %v3978 = vpow.pop %v3977
  %v3979 = vmul.f32 %v3876, 1.442695
  %v3980 = vpow.pop %v3979
  %v3981 = vmul.f32 %v3877, 1.442695
  %v3982 = vpow.pop %v3981
  %v3983 = vmul.f32 %v3878, 1.442695
  %v3984 = vpow.pop %v3983
  %v3985 = vmul.f32 %v3879, 1.442695
  %v3986 = vpow.pop %v3985
  %v3987 = vmul.f32 %v3880, 1.442695
  %v3988 = vpow.pop %v3987
  %v3989 = vmul.f32 %v3881, 1.442695
  %v3990 = vpow.pop %v3989
  %v3991 = vmul.f32 %v3882, 1.442695
  %v3992 = vpow.pop %v3991
  %v3993 = vmul.f32 %v3883, 1.442695
  %v3994 = vpow.pop %v3993
  %v3995 = vmul.f32 %v3884, 1.442695
  %v3996 = vpow.pop %v3995
  %v3997 = vmul.f32 %v3885, 1.442695
  %v3998 = vpow.pop %v3997
  %v3999 = vmul.f32 %v3886, 1.442695
  %v4000 = vpow.pop %v3999
  %v4001 = vmul.f32 %v3887, 1.442695
  %v4002 = vpow.pop %v4001
  %v4003 = vmul.f32 %v3888, 1.442695
  %v4004 = vpow.pop %v4003
  %v4005 = vmul.f32 %v3889, 1.442695
  %v4006 = vpow.pop %v4005
  %v4007 = vmul.f32 %v3890, 1.442695
  %v4008 = vpow.pop %v4007
  %v4009 = vmul.f32 %v3891, 1.442695
  %v4010 = vpow.pop %v4009
  %v4011 = vmul.f32 %v3892, 1.442695
  %v4012 = vpow.pop %v4011
  %v4013 = vmul.f32 %v3893, 1.442695
  %v4014 = vpow.pop %v4013
  %v4015 = vmul.f32 %v3894, 1.442695
  %v4016 = vpow.pop %v4015
  %v4017 = vmul.f32 %v3895, 1.442695
  %v4018 = vpow.pop %v4017
  %v4019 = vmul.f32 %v3896, 1.442695
  %v4020 = vpow.pop %v4019
  %v4021 = vmul.f32 %v3897, 1.442695
  %v4022 = vpow.pop %v4021
  %v4023 = vmul.f32 %v3898, 1.442695
  %v4024 = vpow.pop %v4023
  %v4025 = vmul.f32 %v3899, 1.442695
  %v4026 = vpow.pop %v4025
  %v4027 = vmul.f32 %v3900, 1.442695
  %v4028 = vpow.pop %v4027
  %v4029 = vmul.f32 %v3901, 1.442695
  %v4030 = vpow.pop %v4029
  %v4031 = vmul.f32 %v3902, 1.442695
  %v4032 = vpow.pop %v4031
  %v4033 = vmul.f32 %v3903, 1.442695
  %v4034 = vpow.pop %v4033
  %v4035 = vmul.f32 %v3904, 1.442695
  %v4036 = vpow.pop %v4035
  %v4037 = vmul.f32 %v3905, 1.442695
  %v4038 = vpow.pop %v4037
  %v4039 = vmul.f32 %v3906, 1.442695
  %v4040 = vpow.pop %v4039
  %v4041 = vmul.f32 %v3907, 1.442695
  %v4042 = vpow.pop %v4041
  %v4043 = vmul.f32 %v3908, 1.442695
  %v4044 = vpow.pop %v4043
  %v4045 = vmul.f32 %v3909, 1.442695
  %v4046 = vpow.pop %v4045
  %v4047 = vmul.f32 %v3910, 1.442695
  %v4048 = vpow.pop %v4047
  %v4049 = vmul.f32 %v3911, 1.442695
  %v4050 = vpow.pop %v4049
  %v4051 = vmul.f32 %v3912, 1.442695
  %v4052 = vpow.pop %v4051
  %v4053 = vmul.f32 %v3913, 1.442695
  %v4054 = vpow.pop %v4053
  %v4055 = vmul.f32 %v3914, 1.442695
  %v4056 = vpow.pop %v4055
  %v4057 = vmul.f32 %v3915, 1.442695
  %v4058 = vpow.pop %v4057
  %v4059 = vmul.f32 %v3916, 1.442695
  %v4060 = vpow.pop %v4059
  %v4061 = vmul.f32 %v3917, 1.442695
  %v4062 = vpow.pop %v4061
  %v4063 = vmul.f32 %v3918, 1.442695
  %v4064 = vpow.pop %v4063
  %v4065 = vmul.f32 %v3919, 1.442695
  %v4066 = vpow.pop %v4065
  %v4067 = vmul.f32 %v3920, 1.442695
  %v4068 = vpow.pop %v4067
  %v4069 = vmul.f32 %v3921, 1.442695
  %v4070 = vpow.pop %v4069
  %v4071 = vmul.f32 %v3922, 1.442695
  %v4072 = vpow.pop %v4071
  %v4073 = vmul.f32 %v3923, 1.442695
  %v4074 = vpow.pop %v4073
  %v4075 = vmul.f32 %v3924, 1.442695
  %v4076 = vpow.pop %v4075
  %v4077 = vmul.f32 %v3925, 1.442695
  %v4078 = vpow.pop %v4077
  %v4079 = vmul.f32 %v3926, 1.442695
  %v4080 = vpow.pop %v4079
  %v4081 = vmul.f32 %v3927, 1.442695
  %v4082 = vpow.pop %v4081
  %v4083 = vmul.f32 %v3928, 1.442695
  %v4084 = vpow.pop %v4083
  %v4085 = vmul.f32 %v3929, 1.442695
  %v4086 = vpow.pop %v4085
  %v4087 = vmul.f32 %v3930, 1.442695
  %v4088 = vpow.pop %v4087
  %v4089 = vmul.f32 %v3931, 1.442695
  %v4090 = vpow.pop %v4089
  %v4091 = vmul.f32 %v3932, 1.442695
  %v4092 = vpow.pop %v4091
  %v4093 = vmul.f32 %v3933, 1.442695
  %v4094 = vpow.pop %v4093
  %v4095 = vmul.f32 %v3934, 1.442695
  %v4096 = vpow.pop %v4095
  %v4097 = vmul.f32 %v3935, 1.442695
  %v4098 = vpow.pop %v4097
  %v4099 = vmul.f32 %v3936, 1.442695
  %v4100 = vpow.pop %v4099
  %v4101 = vmul.f32 %v3937, 1.442695
  %v4102 = vpow.pop %v4101
  %v4103 = vmul.f32 %v3938, 1.442695
  %v4104 = vpow.pop %v4103
  %v4105 = vmul.f32 %v3939, 1.442695
  %v4106 = vpow.pop %v4105
  %v4107 = vmul.f32 %v3940, 1.442695
  %v4108 = vpow.pop %v4107
  %v4109 = vmul.f32 %v3941, 1.442695
  %v4110 = vpow.pop %v4109
  %v4111 = vmul.f32 %v3942, 1.442695
  %v4112 = vpow.pop %v4111
  %v4113 = vmul.f32 %v3943, 1.442695
  %v4114 = vpow.pop %v4113
  %v4115 = vmul.f32 %v3944, 1.442695
  %v4116 = vpow.pop %v4115
  %v4117 = vmul.f32 %v3945, 1.442695
  %v4118 = vpow.pop %v4117
  %v4119 = vmul.f32 %v3946, 1.442695
  %v4120 = vpow.pop %v4119
  %v4121 = vmul.f32 %v3947, 1.442695
  %v4122 = vpow.pop %v4121
  %v4123 = vmul.f32 %v3948, 1.442695
  %v4124 = vpow.pop %v4123
  %v4125 = vmul.f32 %v3949, 1.442695
  %v4126 = vpow.pop %v4125
  %v4127 = vmul.f32 %v3950, 1.442695
  %v4128 = vpow.pop %v4127
  %v4129 = vmul.f32 %v3951, 1.442695
  %v4130 = vpow.pop %v4129
  %v4131 = vmul.f32 %v3952, 1.442695
  %v4132 = vpow.pop %v4131
  %v4133 = vmul.f32 %v3953, 1.442695
  %v4134 = vpow.pop %v4133
  %v4135 = vmul.f32 %v3954, 1.442695
  %v4136 = vpow.pop %v4135
  %v4137 = vmul.f32 %v3955, 1.442695
  %v4138 = vpow.pop %v4137
  %v4139 = vmul.f32 %v3956, 1.442695
  %v4140 = vpow.pop %v4139
  %v4141 = vmul.f32 %v3957, 1.442695
  %v4142 = vpow.pop %v4141
  %v4143 = vmul.f32 %v3958, 1.442695
  %v4144 = vpow.pop %v4143
  %v4145 = vmul.f32 %v3959, 1.442695
  %v4146 = vpow.pop %v4145
  %v4147 = vmul.f32 %v3960, 1.442695
  %v4148 = vpow.pop %v4147
  %v4149 = vmul.f32 %v3961, 1.442695
  %v4150 = vpow.pop %v4149
  %v4151 = vmul.f32 %v3962, 1.442695
  %v4152 = vpow.pop %v4151
  %v4153 = vmul.f32 %v3963, 1.442695
  %v4154 = vpow.pop %v4153
  %v4155 = vmul.f32 %v3964, 1.442695
  %v4156 = vpow.pop %v4155
  %v4157 = vmul.f32 %v3965, 1.442695
  %v4158 = vpow.pop %v4157
  %v4159 = vmul.f32 %v3966, 1.442695
  %v4160 = vpow.pop %v4159
  %v4161 = vmul.f32 %v3967, 1.442695
  %v4162 = vpow.pop %v4161
  %v4163 = vmul.f32 %v3968, 1.442695
  %v4164 = vpow.pop %v4163
  %v4165 = vadd.f32 %v3970, %v3974
  %v4166 = vadd.f32 %v4165, %v3978
  %v4167 = vadd.f32 %v4166, %v3982
  %v4168 = vadd.f32 %v4167, %v3986
  %v4169 = vadd.f32 %v4168, %v3990
  %v4170 = vadd.f32 %v4169, %v3994
  %v4171 = vadd.f32 %v3972, %v3976
  %v4172 = vadd.f32 %v4171, %v3980
  %v4173 = vadd.f32 %v4172, %v3984
  %v4174 = vadd.f32 %v4173, %v3988
  %v4175 = vadd.f32 %v4174, %v3992
  %v4176 = vadd.f32 %v4175, %v3996
  %v4177 = vadd.f32 %v3998, %v4002
  %v4178 = vadd.f32 %v4177, %v4006
  %v4179 = vadd.f32 %v4178, %v4010
  %v4180 = vadd.f32 %v4179, %v4014
  %v4181 = vadd.f32 %v4180, %v4018
  %v4182 = vadd.f32 %v4181, %v4022
  %v4183 = vadd.f32 %v4000, %v4004
  %v4184 = vadd.f32 %v4183, %v4008
  %v4185 = vadd.f32 %v4184, %v4012
  %v4186 = vadd.f32 %v4185, %v4016
  %v4187 = vadd.f32 %v4186, %v4020
  %v4188 = vadd.f32 %v4187, %v4024
  %v4189 = vadd.f32 %v4026, %v4030
  %v4190 = vadd.f32 %v4189, %v4034
  %v4191 = vadd.f32 %v4190, %v4038
  %v4192 = vadd.f32 %v4191, %v4042
  %v4193 = vadd.f32 %v4192, %v4046
  %v4194 = vadd.f32 %v4193, %v4050
  %v4195 = vadd.f32 %v4028, %v4032
  %v4196 = vadd.f32 %v4195, %v4036
  %v4197 = vadd.f32 %v4196, %v4040
  %v4198 = vadd.f32 %v4197, %v4044
  %v4199 = vadd.f32 %v4198, %v4048
  %v4200 = vadd.f32 %v4199, %v4052
  %v4201 = vadd.f32 %v4054, %v4058
  %v4202 = vadd.f32 %v4201, %v4062
  %v4203 = vadd.f32 %v4202, %v4066
  %v4204 = vadd.f32 %v4203, %v4070
  %v4205 = vadd.f32 %v4204, %v4074
  %v4206 = vadd.f32 %v4205, %v4078
  %v4207 = vadd.f32 %v4056, %v4060
  %v4208 = vadd.f32 %v4207, %v4064
  %v4209 = vadd.f32 %v4208, %v4068
  %v4210 = vadd.f32 %v4209, %v4072
  %v4211 = vadd.f32 %v4210, %v4076
  %v4212 = vadd.f32 %v4211, %v4080
  %v4213 = vadd.f32 %v4082, %v4086
  %v4214 = vadd.f32 %v4213, %v4090
  %v4215 = vadd.f32 %v4214, %v4094
  %v4216 = vadd.f32 %v4215, %v4098
  %v4217 = vadd.f32 %v4216, %v4102
  %v4218 = vadd.f32 %v4217, %v4106
  %v4219 = vadd.f32 %v4084, %v4088
  %v4220 = vadd.f32 %v4219, %v4092
  %v4221 = vadd.f32 %v4220, %v4096
  %v4222 = vadd.f32 %v4221, %v4100
  %v4223 = vadd.f32 %v4222, %v4104
  %v4224 = vadd.f32 %v4223, %v4108
  %v4225 = vadd.f32 %v4110, %v4114
  %v4226 = vadd.f32 %v4225, %v4118
  %v4227 = vadd.f32 %v4226, %v4122
  %v4228 = vadd.f32 %v4227, %v4126
  %v4229 = vadd.f32 %v4228, %v4130
  %v4230 = vadd.f32 %v4229, %v4134
  %v4231 = vadd.f32 %v4112, %v4116
  %v4232 = vadd.f32 %v4231, %v4120
  %v4233 = vadd.f32 %v4232, %v4124
  %v4234 = vadd.f32 %v4233, %v4128
  %v4235 = vadd.f32 %v4234, %v4132
  %v4236 = vadd.f32 %v4235, %v4136
  %v4237 = vadd.f32 %v4138, %v4142
  %v4238 = vadd.f32 %v4237, %v4146
  %v4239 = vadd.f32 %v4238, %v4150
  %v4240 = vadd.f32 %v4239, %v4154
  %v4241 = vadd.f32 %v4240, %v4158
  %v4242 = vadd.f32 %v4241, %v4162
  %v4243 = vadd.f32 %v4140, %v4144
  %v4244 = vadd.f32 %v4243, %v4148
  %v4245 = vadd.f32 %v4244, %v4152
  %v4246 = vadd.f32 %v4245, %v4156
  %v4247 = vadd.f32 %v4246, %v4160
  %v4248 = vadd.f32 %v4247, %v4164
  %v4249 = vrcp.pop %v4170
  %v4250 = vrcp.pop %v4176
  %v4251 = vrcp.pop %v4182
  %v4252 = vrcp.pop %v4188
  %v4253 = vrcp.pop %v4194
  %v4254 = vrcp.pop %v4200
  %v4255 = vrcp.pop %v4206
  %v4256 = vrcp.pop %v4212
  %v4257 = vrcp.pop %v4218
  %v4258 = vrcp.pop %v4224
  %v4259 = vrcp.pop %v4230
  %v4260 = vrcp.pop %v4236
  %v4261 = vrcp.pop %v4242
  %v4262 = vrcp.pop %v4248
  %v4263 = vmul.f32 %v3970, %v4249
  %v4264 = vmul.f32 %v3972, %v4250
  %v4265 = vmul.f32 %v3974, %v4249
  %v4266 = vmul.f32 %v3976, %v4250
  %v4267 = vmul.f32 %v3978, %v4249
  %v4268 = vmul.f32 %v3980, %v4250
  %v4269 = vmul.f32 %v3982, %v4249
  %v4270 = vmul.f32 %v3984, %v4250
  %v4271 = vmul.f32 %v3986, %v4249
  %v4272 = vmul.f32 %v3988, %v4250
  %v4273 = vmul.f32 %v3990, %v4249
  %v4274 = vmul.f32 %v3992, %v4250
  %v4275 = vmul.f32 %v3994, %v4249
  %v4276 = vmul.f32 %v3996, %v4250
  %v4277 = vmul.f32 %v3998, %v4251
  %v4278 = vmul.f32 %v4000, %v4252
  %v4279 = vmul.f32 %v4002, %v4251
  %v4280 = vmul.f32 %v4004, %v4252
  %v4281 = vmul.f32 %v4006, %v4251
  %v4282 = vmul.f32 %v4008, %v4252
  %v4283 = vmul.f32 %v4010, %v4251
  %v4284 = vmul.f32 %v4012, %v4252
  %v4285 = vmul.f32 %v4014, %v4251
  %v4286 = vmul.f32 %v4016, %v4252
  %v4287 = vmul.f32 %v4018, %v4251
  %v4288 = vmul.f32 %v4020, %v4252
  %v4289 = vmul.f32 %v4022, %v4251
  %v4290 = vmul.f32 %v4024, %v4252
  %v4291 = vmul.f32 %v4026, %v4253
  %v4292 = vmul.f32 %v4028, %v4254
  %v4293 = vmul.f32 %v4030, %v4253
  %v4294 = vmul.f32 %v4032, %v4254
  %v4295 = vmul.f32 %v4034, %v4253
  %v4296 = vmul.f32 %v4036, %v4254
  %v4297 = vmul.f32 %v4038, %v4253
  %v4298 = vmul.f32 %v4040, %v4254
  %v4299 = vmul.f32 %v4042, %v4253
  %v4300 = vmul.f32 %v4044, %v4254
  %v4301 = vmul.f32 %v4046, %v4253
  %v4302 = vmul.f32 %v4048, %v4254
  %v4303 = vmul.f32 %v4050, %v4253
  %v4304 = vmul.f32 %v4052, %v4254
  %v4305 = vmul.f32 %v4054, %v4255
  %v4306 = vmul.f32 %v4056, %v4256
  %v4307 = vmul.f32 %v4058, %v4255
  %v4308 = vmul.f32 %v4060, %v4256
  %v4309 = vmul.f32 %v4062, %v4255
  %v4310 = vmul.f32 %v4064, %v4256
  %v4311 = vmul.f32 %v4066, %v4255
  %v4312 = vmul.f32 %v4068, %v4256
  %v4313 = vmul.f32 %v4070, %v4255
  %v4314 = vmul.f32 %v4072, %v4256
  %v4315 = vmul.f32 %v4074, %v4255
  %v4316 = vmul.f32 %v4076, %v4256
  %v4317 = vmul.f32 %v4078, %v4255
  %v4318 = vmul.f32 %v4080, %v4256
  %v4319 = vmul.f32 %v4082, %v4257
  %v4320 = vmul.f32 %v4084, %v4258
  %v4321 = vmul.f32 %v4086, %v4257
  %v4322 = vmul.f32 %v4088, %v4258
  %v4323 = vmul.f32 %v4090, %v4257
  %v4324 = vmul.f32 %v4092, %v4258
  %v4325 = vmul.f32 %v4094, %v4257
  %v4326 = vmul.f32 %v4096, %v4258
  %v4327 = vmul.f32 %v4098, %v4257
  %v4328 = vmul.f32 %v4100, %v4258
  %v4329 = vmul.f32 %v4102, %v4257
  %v4330 = vmul.f32 %v4104, %v4258
  %v4331 = vmul.f32 %v4106, %v4257
  %v4332 = vmul.f32 %v4108, %v4258
  %v4333 = vmul.f32 %v4110, %v4259
  %v4334 = vmul.f32 %v4112, %v4260
  %v4335 = vmul.f32 %v4114, %v4259
  %v4336 = vmul.f32 %v4116, %v4260
  %v4337 = vmul.f32 %v4118, %v4259
  %v4338 = vmul.f32 %v4120, %v4260
  %v4339 = vmul.f32 %v4122, %v4259
  %v4340 = vmul.f32 %v4124, %v4260
  %v4341 = vmul.f32 %v4126, %v4259
  %v4342 = vmul.f32 %v4128, %v4260
  %v4343 = vmul.f32 %v4130, %v4259
  %v4344 = vmul.f32 %v4132, %v4260
  %v4345 = vmul.f32 %v4134, %v4259
  %v4346 = vmul.f32 %v4136, %v4260
  %v4347 = vmul.f32 %v4138, %v4261
  %v4348 = vmul.f32 %v4140, %v4262
  %v4349 = vmul.f32 %v4142, %v4261
  %v4350 = vmul.f32 %v4144, %v4262
  %v4351 = vmul.f32 %v4146, %v4261
  %v4352 = vmul.f32 %v4148, %v4262
  %v4353 = vmul.f32 %v4150, %v4261
  %v4354 = vmul.f32 %v4152, %v4262
  %v4355 = vmul.f32 %v4154, %v4261
  %v4356 = vmul.f32 %v4156, %v4262
  %v4357 = vmul.f32 %v4158, %v4261
  %v4358 = vmul.f32 %v4160, %v4262
  %v4359 = vmul.f32 %v4162, %v4261
  %v4360 = vmul.f32 %v4164, %v4262
  %v4361 = vmul.f32 %v4263, %v3173
  %v4362 = vmul.f32 %v4264, %v3178
  %v4363 = vmul.f32 %v4265, %v3183
  %v4364 = vmul.f32 %v4266, %v3188
  %v4365 = vmul.f32 %v4267, %v3193
  %v4366 = vmul.f32 %v4268, %v3198
  %v4367 = vmul.f32 %v4269, %v3203
  %v4368 = vmul.f32 %v4270, %v3208
  %v4369 = vmul.f32 %v4271, %v3213
  %v4370 = vmul.f32 %v4272, %v3218
  %v4371 = vmul.f32 %v4273, %v3223
  %v4372 = vmul.f32 %v4274, %v3228
  %v4373 = vmul.f32 %v4275, %v3233
  %v4374 = vmul.f32 %v4276, %v3238
  %v4375 = vmul.f32 %v4277, %v3173
  %v4376 = vmul.f32 %v4278, %v3178
  %v4377 = vmul.f32 %v4279, %v3183
  %v4378 = vmul.f32 %v4280, %v3188
  %v4379 = vmul.f32 %v4281, %v3193
  %v4380 = vmul.f32 %v4282, %v3198
  %v4381 = vmul.f32 %v4283, %v3203
  %v4382 = vmul.f32 %v4284, %v3208
  %v4383 = vmul.f32 %v4285, %v3213
  %v4384 = vmul.f32 %v4286, %v3218
  %v4385 = vmul.f32 %v4287, %v3223
  %v4386 = vmul.f32 %v4288, %v3228
  %v4387 = vmul.f32 %v4289, %v3233
  %v4388 = vmul.f32 %v4290, %v3238
  %v4389 = vmul.f32 %v4291, %v3173
  %v4390 = vmul.f32 %v4292, %v3178
  %v4391 = vmul.f32 %v4293, %v3183
  %v4392 = vmul.f32 %v4294, %v3188
  %v4393 = vmul.f32 %v4295, %v3193
  %v4394 = vmul.f32 %v4296, %v3198
  %v4395 = vmul.f32 %v4297, %v3203
  %v4396 = vmul.f32 %v4298, %v3208
  %v4397 = vmul.f32 %v4299, %v3213
  %v4398 = vmul.f32 %v4300, %v3218
  %v4399 = vmul.f32 %v4301, %v3223
  %v4400 = vmul.f32 %v4302, %v3228
  %v4401 = vmul.f32 %v4303, %v3233
  %v4402 = vmul.f32 %v4304, %v3238
  %v4403 = vmul.f32 %v4305, %v3173
  %v4404 = vmul.f32 %v4306, %v3178
  %v4405 = vmul.f32 %v4307, %v3183
  %v4406 = vmul.f32 %v4308, %v3188
  %v4407 = vmul.f32 %v4309, %v3193
  %v4408 = vmul.f32 %v4310, %v3198
  %v4409 = vmul.f32 %v4311, %v3203
  %v4410 = vmul.f32 %v4312, %v3208
  %v4411 = vmul.f32 %v4313, %v3213
  %v4412 = vmul.f32 %v4314, %v3218
  %v4413 = vmul.f32 %v4315, %v3223
  %v4414 = vmul.f32 %v4316, %v3228
  %v4415 = vmul.f32 %v4317, %v3233
  %v4416 = vmul.f32 %v4318, %v3238
  %v4417 = vmul.f32 %v4319, %v3173
  %v4418 = vmul.f32 %v4320, %v3178
  %v4419 = vmul.f32 %v4321, %v3183
  %v4420 = vmul.f32 %v4322, %v3188
  %v4421 = vmul.f32 %v4323, %v3193
  %v4422 = vmul.f32 %v4324, %v3198
  %v4423 = vmul.f32 %v4325, %v3203
  %v4424 = vmul.f32 %v4326, %v3208
  %v4425 = vmul.f32 %v4327, %v3213
  %v4426 = vmul.f32 %v4328, %v3218
  %v4427 = vmul.f32 %v4329, %v3223
  %v4428 = vmul.f32 %v4330, %v3228
  %v4429 = vmul.f32 %v4331, %v3233
  %v4430 = vmul.f32 %v4332, %v3238
  %v4431 = vmul.f32 %v4333, %v3173
  %v4432 = vmul.f32 %v4334, %v3178
  %v4433 = vmul.f32 %v4335, %v3183
  %v4434 = vmul.f32 %v4336, %v3188
  %v4435 = vmul.f32 %v4337, %v3193
  %v4436 = vmul.f32 %v4338, %v3198
  %v4437 = vmul.f32 %v4339, %v3203
  %v4438 = vmul.f32 %v4340, %v3208
  %v4439 = vmul.f32 %v4341, %v3213
  %v4440 = vmul.f32 %v4342, %v3218
  %v4441 = vmul.f32 %v4343, %v3223
  %v4442 = vmul.f32 %v4344, %v3228
  %v4443 = vmul.f32 %v4345, %v3233
  %v4444 = vmul.f32 %v4346, %v3238
  %v4445 = vmul.f32 %v4347, %v3173
  %v4446 = vmul.f32 %v4348, %v3178
  %v4447 = vmul.f32 %v4349, %v3183
  %v4448 = vmul.f32 %v4350, %v3188
  %v4449 = vmul.f32 %v4351, %v3193
  %v4450 = vmul.f32 %v4352, %v3198
  %v4451 = vmul.f32 %v4353, %v3203
  %v4452 = vmul.f32 %v4354, %v3208
  %v4453 = vmul.f32 %v4355, %v3213
  %v4454 = vmul.f32 %v4356, %v3218
  %v4455 = vmul.f32 %v4357, %v3223
  %v4456 = vmul.f32 %v4358, %v3228
  %v4457 = vmul.f32 %v4359, %v3233
  %v4458 = vmul.f32 %v4360, %v3238
  %v4459 = vsel %vm1683, %v4361, 0.0
  %v4460 = vsel %vm1683, %v4363, 0.0
  %v4461 = vadd.f32 %v4459, %v4460
  %v4462 = vsel %vm1683, %v4365, 0.0
  %v4463 = vadd.f32 %v4461, %v4462
  %v4464 = vsel %vm1683, %v4367, 0.0
  %v4465 = vadd.f32 %v4463, %v4464
  %v4466 = vsel %vm1683, %v4369, 0.0
  %v4467 = vadd.f32 %v4465, %v4466
  %v4468 = vsel %vm1683, %v4371, 0.0
  %v4469 = vadd.f32 %v4467, %v4468
  %v4470 = vsel %vm1683, %v4373, 0.0
  %v4471 = vadd.f32 %v4469, %v4470
  %v4472 = vsel %vm1683, %v4362, 0.0
  %v4473 = vsel %vm1683, %v4364, 0.0
  %v4474 = vadd.f32 %v4472, %v4473
  %v4475 = vsel %vm1683, %v4366, 0.0
  %v4476 = vadd.f32 %v4474, %v4475
  %v4477 = vsel %vm1683, %v4368, 0.0
  %v4478 = vadd.f32 %v4476, %v4477
  %v4479 = vsel %vm1683, %v4370, 0.0
  %v4480 = vadd.f32 %v4478, %v4479
  %v4481 = vsel %vm1683, %v4372, 0.0
  %v4482 = vadd.f32 %v4480, %v4481
  %v4483 = vsel %vm1683, %v4374, 0.0
  %v4484 = vadd.f32 %v4482, %v4483
  %v4485 = vsel %vm1683, %v4375, 0.0
  %v4486 = vsel %vm1683, %v4377, 0.0
  %v4487 = vadd.f32 %v4485, %v4486
  %v4488 = vsel %vm1683, %v4379, 0.0
  %v4489 = vadd.f32 %v4487, %v4488
  %v4490 = vsel %vm1683, %v4381, 0.0
  %v4491 = vadd.f32 %v4489, %v4490
  %v4492 = vsel %vm1683, %v4383, 0.0
  %v4493 = vadd.f32 %v4491, %v4492
  %v4494 = vsel %vm1683, %v4385, 0.0
  %v4495 = vadd.f32 %v4493, %v4494
  %v4496 = vsel %vm1683, %v4387, 0.0
  %v4497 = vadd.f32 %v4495, %v4496
  %v4498 = vsel %vm1683, %v4376, 0.0
  %v4499 = vsel %vm1683, %v4378, 0.0
  %v4500 = vadd.f32 %v4498, %v4499
  %v4501 = vsel %vm1683, %v4380, 0.0
  %v4502 = vadd.f32 %v4500, %v4501
  %v4503 = vsel %vm1683, %v4382, 0.0
  %v4504 = vadd.f32 %v4502, %v4503
  %v4505 = vsel %vm1683, %v4384, 0.0
  %v4506 = vadd.f32 %v4504, %v4505
  %v4507 = vsel %vm1683, %v4386, 0.0
  %v4508 = vadd.f32 %v4506, %v4507
  %v4509 = vsel %vm1683, %v4388, 0.0
  %v4510 = vadd.f32 %v4508, %v4509
  %v4511 = vsel %vm1683, %v4389, 0.0
  %v4512 = vsel %vm1683, %v4391, 0.0
  %v4513 = vadd.f32 %v4511, %v4512
  %v4514 = vsel %vm1683, %v4393, 0.0
  %v4515 = vadd.f32 %v4513, %v4514
  %v4516 = vsel %vm1683, %v4395, 0.0
  %v4517 = vadd.f32 %v4515, %v4516
  %v4518 = vsel %vm1683, %v4397, 0.0
  %v4519 = vadd.f32 %v4517, %v4518
  %v4520 = vsel %vm1683, %v4399, 0.0
  %v4521 = vadd.f32 %v4519, %v4520
  %v4522 = vsel %vm1683, %v4401, 0.0
  %v4523 = vadd.f32 %v4521, %v4522
  %v4524 = vsel %vm1683, %v4390, 0.0
  %v4525 = vsel %vm1683, %v4392, 0.0
  %v4526 = vadd.f32 %v4524, %v4525
  %v4527 = vsel %vm1683, %v4394, 0.0
  %v4528 = vadd.f32 %v4526, %v4527
  %v4529 = vsel %vm1683, %v4396, 0.0
  %v4530 = vadd.f32 %v4528, %v4529
  %v4531 = vsel %vm1683, %v4398, 0.0
  %v4532 = vadd.f32 %v4530, %v4531
  %v4533 = vsel %vm1683, %v4400, 0.0
  %v4534 = vadd.f32 %v4532, %v4533
  %v4535 = vsel %vm1683, %v4402, 0.0
  %v4536 = vadd.f32 %v4534, %v4535
  %v4537 = vsel %vm1683, %v4403, 0.0
  %v4538 = vsel %vm1683, %v4405, 0.0
  %v4539 = vadd.f32 %v4537, %v4538
  %v4540 = vsel %vm1683, %v4407, 0.0
  %v4541 = vadd.f32 %v4539, %v4540
  %v4542 = vsel %vm1683, %v4409, 0.0
  %v4543 = vadd.f32 %v4541, %v4542
  %v4544 = vsel %vm1683, %v4411, 0.0
  %v4545 = vadd.f32 %v4543, %v4544
  %v4546 = vsel %vm1683, %v4413, 0.0
  %v4547 = vadd.f32 %v4545, %v4546
  %v4548 = vsel %vm1683, %v4415, 0.0
  %v4549 = vadd.f32 %v4547, %v4548
  %v4550 = vsel %vm1683, %v4404, 0.0
  %v4551 = vsel %vm1683, %v4406, 0.0
  %v4552 = vadd.f32 %v4550, %v4551
  %v4553 = vsel %vm1683, %v4408, 0.0
  %v4554 = vadd.f32 %v4552, %v4553
  %v4555 = vsel %vm1683, %v4410, 0.0
  %v4556 = vadd.f32 %v4554, %v4555
  %v4557 = vsel %vm1683, %v4412, 0.0
  %v4558 = vadd.f32 %v4556, %v4557
  %v4559 = vsel %vm1683, %v4414, 0.0
  %v4560 = vadd.f32 %v4558, %v4559
  %v4561 = vsel %vm1683, %v4416, 0.0
  %v4562 = vadd.f32 %v4560, %v4561
  %v4563 = vsel %vm1683, %v4417, 0.0
  %v4564 = vsel %vm1683, %v4419, 0.0
  %v4565 = vadd.f32 %v4563, %v4564
  %v4566 = vsel %vm1683, %v4421, 0.0
  %v4567 = vadd.f32 %v4565, %v4566
  %v4568 = vsel %vm1683, %v4423, 0.0
  %v4569 = vadd.f32 %v4567, %v4568
  %v4570 = vsel %vm1683, %v4425, 0.0
  %v4571 = vadd.f32 %v4569, %v4570
  %v4572 = vsel %vm1683, %v4427, 0.0
  %v4573 = vadd.f32 %v4571, %v4572
  %v4574 = vsel %vm1683, %v4429, 0.0
  %v4575 = vadd.f32 %v4573, %v4574
  %v4576 = vsel %vm1683, %v4418, 0.0
  %v4577 = vsel %vm1683, %v4420, 0.0
  %v4578 = vadd.f32 %v4576, %v4577
  %v4579 = vsel %vm1683, %v4422, 0.0
  %v4580 = vadd.f32 %v4578, %v4579
  %v4581 = vsel %vm1683, %v4424, 0.0
  %v4582 = vadd.f32 %v4580, %v4581
  %v4583 = vsel %vm1683, %v4426, 0.0
  %v4584 = vadd.f32 %v4582, %v4583
  %v4585 = vsel %vm1683, %v4428, 0.0
  %v4586 = vadd.f32 %v4584, %v4585
  %v4587 = vsel %vm1683, %v4430, 0.0
  %v4588 = vadd.f32 %v4586, %v4587
  %v4589 = vsel %vm1683, %v4431, 0.0
  %v4590 = vsel %vm1683, %v4433, 0.0
  %v4591 = vadd.f32 %v4589, %v4590
  %v4592 = vsel %vm1683, %v4435, 0.0
  %v4593 = vadd.f32 %v4591, %v4592
  %v4594 = vsel %vm1683, %v4437, 0.0
  %v4595 = vadd.f32 %v4593, %v4594
  %v4596 = vsel %vm1683, %v4439, 0.0
  %v4597 = vadd.f32 %v4595, %v4596
  %v4598 = vsel %vm1683, %v4441, 0.0
  %v4599 = vadd.f32 %v4597, %v4598
  %v4600 = vsel %vm1683, %v4443, 0.0
  %v4601 = vadd.f32 %v4599, %v4600
  %v4602 = vsel %vm1683, %v4432, 0.0
  %v4603 = vsel %vm1683, %v4434, 0.0
  %v4604 = vadd.f32 %v4602, %v4603
  %v4605 = vsel %vm1683, %v4436, 0.0
  %v4606 = vadd.f32 %v4604, %v4605
  %v4607 = vsel %vm1683, %v4438, 0.0
  %v4608 = vadd.f32 %v4606, %v4607
  %v4609 = vsel %vm1683, %v4440, 0.0
  %v4610 = vadd.f32 %v4608, %v4609
  %v4611 = vsel %vm1683, %v4442, 0.0
  %v4612 = vadd.f32 %v4610, %v4611
  %v4613 = vsel %vm1683, %v4444, 0.0
  %v4614 = vadd.f32 %v4612, %v4613
  %v4615 = vsel %vm1683, %v4445, 0.0
  %v4616 = vsel %vm1683, %v4447, 0.0
  %v4617 = vadd.f32 %v4615, %v4616
  %v4618 = vsel %vm1683, %v4449, 0.0
  %v4619 = vadd.f32 %v4617, %v4618
  %v4620 = vsel %vm1683, %v4451, 0.0
  %v4621 = vadd.f32 %v4619, %v4620
  %v4622 = vsel %vm1683, %v4453, 0.0
  %v4623 = vadd.f32 %v4621, %v4622
  %v4624 = vsel %vm1683, %v4455, 0.0
  %v4625 = vadd.f32 %v4623, %v4624
  %v4626 = vsel %vm1683, %v4457, 0.0
  %v4627 = vadd.f32 %v4625, %v4626
  %v4628 = vsel %vm1683, %v4446, 0.0
  %v4629 = vsel %vm1683, %v4448, 0.0
  %v4630 = vadd.f32 %v4628, %v4629
  %v4631 = vsel %vm1683, %v4450, 0.0
  %v4632 = vadd.f32 %v4630, %v4631
  %v4633 = vsel %vm1683, %v4452, 0.0
  %v4634 = vadd.f32 %v4632, %v4633
  %v4635 = vsel %vm1683, %v4454, 0.0
  %v4636 = vadd.f32 %v4634, %v4635
  %v4637 = vsel %vm1683, %v4456, 0.0
  %v4638 = vadd.f32 %v4636, %v4637
  %v4639 = vsel %vm1683, %v4458, 0.0
  %v4640 = vadd.f32 %v4638, %v4639
  %s4641 = scalar_lea.vmem %s3, 16
  %v4642 = vld [vmem:[%s4641] sm:$0xff]
  %v4643 = vld [vmem:[%s4641 + $0x8] sm:$0xf]
  %v4644 = vld [vmem:[%s4 + $0x1] sm:$0x1]
  %v4645 = vlaneseq
  %v4646 = vshrl.u32 %v4645, 7
  %v4647 = vsub.s32 0, %v4646
  %v4648 = vrot.slane %v4644, %v4647
  %4663 = vrot.lane.b32.xlu0 %v4471, 104
  %v4664 = vpop.permute.xlu0 %4663
  %4665 = vrot.lane.b32.xlu0 %v4484, 104
  %v4666 = vpop.permute.xlu0 %4665
  %4667 = vrot.lane.b32.xlu0 %v4497, 104
  %v4668 = vpop.permute.xlu0 %4667
  %4669 = vrot.lane.b32.xlu0 %v4510, 104
  %v4670 = vpop.permute.xlu0 %4669
  %4671 = vrot.lane.b32.xlu0 %v4523, 104
  %v4672 = vpop.permute.xlu0 %4671
  %4673 = vrot.lane.b32.xlu0 %v4536, 104
  %v4674 = vpop.permute.xlu0 %4673
  %4675 = vrot.lane.b32.xlu0 %v4549, 104
  %v4676 = vpop.permute.xlu0 %4675
  %4677 = vrot.lane.b32.xlu0 %v4562, 104
  %v4678 = vpop.permute.xlu0 %4677
  %4679 = vrot.lane.b32.xlu0 %v4575, 104
  %v4680 = vpop.permute.xlu0 %4679
  %4681 = vrot.lane.b32.xlu0 %v4588, 104
  %v4682 = vpop.permute.xlu0 %4681
  %4683 = vrot.lane.b32.xlu0 %v4601, 104
  %v4684 = vpop.permute.xlu0 %4683
  %4685 = vrot.lane.b32.xlu0 %v4614, 104
  %v4686 = vpop.permute.xlu0 %4685
  %4687 = vrot.lane.b32.xlu0 %v4627, 104
  %v4688 = vpop.permute.xlu0 %4687
  %4689 = vrot.lane.b32.xlu0 %v4640, 104
  %v4690 = vpop.permute.xlu0 %4689
  %v4691 = vsel %vm57, %v4664, 0
  %v4693 = vsel %vm57, %v4666, 0
  %v4695 = vsel %vm57, %v4668, 0
  %v4697 = vsel %vm57, %v4670, 0
  %v4699 = vsel %vm57, %v4672, 0
  %v4701 = vsel %vm57, %v4674, 0
  %v4703 = vsel %vm57, %v4676, 0
  %v4705 = vsel %vm57, %v4678, 0
  %v4707 = vsel %vm57, %v4680, 0
  %v4709 = vsel %vm57, %v4682, 0
  %v4711 = vsel %vm57, %v4684, 0
  %v4713 = vsel %vm57, %v4686, 0
  %v4715 = vsel %vm57, %v4688, 0
  %v4717 = vsel %vm57, %v4690, 0
  %v4720 = vsel %vm326, %v4643, 0
  %4722 = vmatprep.subr.mxu0 0.0
  %4723 = vmatpush1.msra.mxu0 %v4642
  %4724 = vmatprep.subr.mxu0 0.0
  %4725 = vmatpush1.msra.mxu0 %v4720
  %4726 = vmatprep.subr.mxu0 0.0
  %4727 = vmatpush1.msra.mxu0 0.0
  %4728 = vmatprep.subr.mxu0 0.0
  %4729 = vmatpush1.msra.mxu0 0.0
  %4730 = vmatprep.subr.mxu0 0.0
  %4731 = vmatpush1.msra.mxu0 0.0
  %4732 = vmatprep.subr.mxu0 0.0
  %4733 = vmatpush1.msra.mxu0 0.0
  %4734 = vmatprep.subr.mxu0 0.0
  %4735 = vmatpush1.msra.mxu0 0.0
  %4736 = vmatprep.subr.mxu0 0.0
  %4737 = vmatpush1.msra.mxu0 0.0
  %4738 = vmatprep.subr.mxu0 0.0
  %4739 = vmatpush1.msra.mxu0 0.0
  %4740 = vmatprep.subr.mxu0 0.0
  %4741 = vmatpush1.msra.mxu0 0.0
  %4742 = vmatprep.subr.mxu0 0.0
  %4743 = vmatpush1.msra.mxu0 0.0
  %4744 = vmatprep.subr.mxu0 0.0
  %4745 = vmatpush1.msra.mxu0 0.0
  %4746 = vmatprep.subr.mxu0 0.0
  %4747 = vmatpush1.msra.mxu0 0.0
  %4748 = vmatprep.subr.mxu0 0.0
  %4749 = vmatpush1.msra.mxu0 0.0
  %4750 = vmatprep.subr.mxu0 0.0
  %4751 = vmatpush1.msra.mxu0 0.0
  %4752 = vmatprep.subr.mxu0 0.0
  %4753 = vmatpush1.msra.mxu0 0.0
  %4754 = vmatprep.subr.mxu0 0.0
  %4755 = vmatpush1.msra.mxu0 0.0
  %4756 = vmatprep.subr.mxu0 0.0
  %4757 = vmatpush1.msra.mxu0 0.0
  %4758 = vmatprep.subr.mxu0 0.0
  %4759 = vmatpush1.msra.mxu0 0.0
  %4760 = vmatprep.subr.mxu0 0.0
  %4761 = vmatpush1.msra.mxu0 0.0
  %4762 = vmatprep.subr.mxu0 0.0
  %4763 = vmatpush1.msra.mxu0 0.0
  %4764 = vmatprep.subr.mxu0 0.0
  %4765 = vmatpush1.msra.mxu0 0.0
  %4766 = vmatprep.subr.mxu0 0.0
  %4767 = vmatpush1.msra.mxu0 0.0
  %4768 = vmatprep.subr.mxu0 0.0
  %4769 = vmatpush1.msra.mxu0 0.0
  %4770 = vmatprep.subr.mxu0 0.0
  %4771 = vmatpush1.msra.mxu0 0.0
  %4772 = vmatprep.subr.mxu0 0.0
  %4773 = vmatpush1.msra.mxu0 0.0
  %4774 = vmatprep.subr.mxu0 0.0
  %4775 = vmatpush1.msra.mxu0 0.0
  %4776 = vmatprep.subr.mxu0 0.0
  %4777 = vmatpush1.msra.mxu0 0.0
  %4778 = vmatprep.subr.mxu0 0.0
  %4779 = vmatpush1.msra.mxu0 0.0
  %4780 = vmatprep.subr.mxu0 0.0
  %4781 = vmatpush1.msra.mxu0 0.0
  %4782 = vmatprep.subr.mxu0 0.0
  %4783 = vmatpush1.msra.mxu0 0.0
  %4784 = vmatprep.subr.mxu0 0.0
  %4785 = vmatpush1.msra.mxu0 0.0
  %4786 = vmatprep.mubr.f32.mxu0 0.0
  %4787 = vmatmul.mubr.f32.gmra.mrb[0].mxu0 %v4691
  %v4788 = vpop.f32.mrb[0].mxu0
  %v4789 = vadd.f32 %v4648, %v4788
  %v4790 = vpop.f32.mrb[0].mxu0
  %4791 = vmatprep.mubr.f32.mxu0 0.0
  %4792 = vmatmul.mubr.f32.gmra.mrb[0].mxu0 %v4693
  %v4793 = vpop.f32.mrb[0].mxu0
  %v4794 = vadd.f32 %v4648, %v4793
  %v4795 = vpop.f32.mrb[0].mxu0
  %4796 = vmatprep.mubr.f32.mxu0 0.0
  %4797 = vmatmul.mubr.f32.gmra.mrb[0].mxu0 %v4695
  %v4798 = vpop.f32.mrb[0].mxu0
  %v4799 = vadd.f32 %v4648, %v4798
  %v4800 = vpop.f32.mrb[0].mxu0
  %4801 = vmatprep.mubr.f32.mxu0 0.0
  %4802 = vmatmul.mubr.f32.gmra.mrb[0].mxu0 %v4697
  %v4803 = vpop.f32.mrb[0].mxu0
  %v4804 = vadd.f32 %v4648, %v4803
  %v4805 = vpop.f32.mrb[0].mxu0
  %4806 = vmatprep.mubr.f32.mxu0 0.0
  %4807 = vmatmul.mubr.f32.gmra.mrb[0].mxu0 %v4699
  %v4808 = vpop.f32.mrb[0].mxu0
  %v4809 = vadd.f32 %v4648, %v4808
  %v4810 = vpop.f32.mrb[0].mxu0
  %4811 = vmatprep.mubr.f32.mxu0 0.0
  %4812 = vmatmul.mubr.f32.gmra.mrb[0].mxu0 %v4701
  %v4813 = vpop.f32.mrb[0].mxu0
  %v4814 = vadd.f32 %v4648, %v4813
  %v4815 = vpop.f32.mrb[0].mxu0
  %4816 = vmatprep.mubr.f32.mxu0 0.0
  %4817 = vmatmul.mubr.f32.gmra.mrb[0].mxu0 %v4703
  %v4818 = vpop.f32.mrb[0].mxu0
  %v4819 = vadd.f32 %v4648, %v4818
  %v4820 = vpop.f32.mrb[0].mxu0
  %4821 = vmatprep.mubr.f32.mxu0 0.0
  %4822 = vmatmul.mubr.f32.gmra.mrb[0].mxu0 %v4705
  %v4823 = vpop.f32.mrb[0].mxu0
  %v4824 = vadd.f32 %v4648, %v4823
  %v4825 = vpop.f32.mrb[0].mxu0
  %4826 = vmatprep.mubr.f32.mxu0 0.0
  %4827 = vmatmul.mubr.f32.gmra.mrb[0].mxu0 %v4707
  %v4828 = vpop.f32.mrb[0].mxu0
  %v4829 = vadd.f32 %v4648, %v4828
  %v4830 = vpop.f32.mrb[0].mxu0
  %4831 = vmatprep.mubr.f32.mxu0 0.0
  %4832 = vmatmul.mubr.f32.gmra.mrb[0].mxu0 %v4709
  %v4833 = vpop.f32.mrb[0].mxu0
  %v4834 = vadd.f32 %v4648, %v4833
  %v4835 = vpop.f32.mrb[0].mxu0
  %4836 = vmatprep.mubr.f32.mxu0 0.0
  %4837 = vmatmul.mubr.f32.gmra.mrb[0].mxu0 %v4711
  %v4838 = vpop.f32.mrb[0].mxu0
  %v4839 = vadd.f32 %v4648, %v4838
  %v4840 = vpop.f32.mrb[0].mxu0
  %4841 = vmatprep.mubr.f32.mxu0 0.0
  %4842 = vmatmul.mubr.f32.gmra.mrb[0].mxu0 %v4713
  %v4843 = vpop.f32.mrb[0].mxu0
  %v4844 = vadd.f32 %v4648, %v4843
  %v4845 = vpop.f32.mrb[0].mxu0
  %4846 = vmatprep.mubr.f32.mxu0 0.0
  %4847 = vmatmul.mubr.f32.gmra.mrb[0].mxu0 %v4715
  %v4848 = vpop.f32.mrb[0].mxu0
  %v4849 = vadd.f32 %v4648, %v4848
  %v4850 = vpop.f32.mrb[0].mxu0
  %4851 = vmatprep.mubr.f32.mxu0 0.0
  %4852 = vmatmul.mubr.f32.gmra.mrb[0].mxu0 %v4717
  %v4853 = vpop.f32.mrb[0].mxu0
  %v4854 = vadd.f32 %v4648, %v4853
  %v4855 = vpop.f32.mrb[0].mxu0
  %4856 = vdwg.mxu0
  %v4857 = vadd.f32 %v2818, %v4789
  %v4858 = vadd.f32 %v2819, %v4794
  %v4859 = vadd.f32 %v2820, %v4799
  %v4860 = vadd.f32 %v2821, %v4804
  %v4861 = vadd.f32 %v2822, %v4809
  %v4862 = vadd.f32 %v2823, %v4814
  %v4863 = vadd.f32 %v2824, %v4819
  %v4864 = vadd.f32 %v2825, %v4824
  %v4865 = vadd.f32 %v2826, %v4829
  %v4866 = vadd.f32 %v2827, %v4834
  %v4867 = vadd.f32 %v2828, %v4839
  %v4868 = vadd.f32 %v2829, %v4844
  %v4869 = vadd.f32 %v2830, %v4849
  %v4870 = vadd.f32 %v2831, %v4854
  %s4871 = scalar_lea.vmem %s6, 2
  %v4872 = vld [vmem:[%s4871] sm:$0x1]
  %v4873 = vld [vmem:[%s4871 + $0x1] sm:$0x1]
  %v4874 = vsel %vm57, %v4857, 0.0
  %4875 = vadd.xlane.f32.xlu0 %v4874
  %v4876 = vpop.xlane.xlu0 %4875
  %v4877 = vsel %vm57, %v4858, 0.0
  %4878 = vadd.xlane.f32.xlu0 %v4877
  %v4879 = vpop.xlane.xlu0 %4878
  %v4880 = vsel %vm57, %v4859, 0.0
  %4881 = vadd.xlane.f32.xlu0 %v4880
  %v4882 = vpop.xlane.xlu0 %4881
  %v4883 = vsel %vm57, %v4860, 0.0
  %4884 = vadd.xlane.f32.xlu0 %v4883
  %v4885 = vpop.xlane.xlu0 %4884
  %v4886 = vsel %vm57, %v4861, 0.0
  %4887 = vadd.xlane.f32.xlu0 %v4886
  %v4888 = vpop.xlane.xlu0 %4887
  %v4889 = vsel %vm57, %v4862, 0.0
  %4890 = vadd.xlane.f32.xlu0 %v4889
  %v4891 = vpop.xlane.xlu0 %4890
  %v4892 = vsel %vm57, %v4863, 0.0
  %4893 = vadd.xlane.f32.xlu0 %v4892
  %v4894 = vpop.xlane.xlu0 %4893
  %v4895 = vsel %vm57, %v4864, 0.0
  %4896 = vadd.xlane.f32.xlu0 %v4895
  %v4897 = vpop.xlane.xlu0 %4896
  %v4898 = vsel %vm57, %v4865, 0.0
  %4899 = vadd.xlane.f32.xlu0 %v4898
  %v4900 = vpop.xlane.xlu0 %4899
  %v4901 = vsel %vm57, %v4866, 0.0
  %4902 = vadd.xlane.f32.xlu0 %v4901
  %v4903 = vpop.xlane.xlu0 %4902
  %v4904 = vsel %vm57, %v4867, 0.0
  %4905 = vadd.xlane.f32.xlu0 %v4904
  %v4906 = vpop.xlane.xlu0 %4905
  %v4907 = vsel %vm57, %v4868, 0.0
  %4908 = vadd.xlane.f32.xlu0 %v4907
  %v4909 = vpop.xlane.xlu0 %4908
  %v4910 = vsel %vm57, %v4869, 0.0
  %4911 = vadd.xlane.f32.xlu0 %v4910
  %v4912 = vpop.xlane.xlu0 %4911
  %v4913 = vsel %vm57, %v4870, 0.0
  %4914 = vadd.xlane.f32.xlu0 %v4913
  %v4915 = vpop.xlane.xlu0 %4914
  %v4916 = vmul.f32 %v4876, %v100
  %v4917 = vmul.f32 %v4879, %v100
  %v4918 = vmul.f32 %v4882, %v100
  %v4919 = vmul.f32 %v4885, %v100
  %v4920 = vmul.f32 %v4888, %v100
  %v4921 = vmul.f32 %v4891, %v100
  %v4922 = vmul.f32 %v4894, %v100
  %v4923 = vmul.f32 %v4897, %v100
  %v4924 = vmul.f32 %v4900, %v100
  %v4925 = vmul.f32 %v4903, %v100
  %v4926 = vmul.f32 %v4906, %v100
  %v4927 = vmul.f32 %v4909, %v100
  %v4928 = vmul.f32 %v4912, %v100
  %v4929 = vmul.f32 %v4915, %v100
  %v4930 = vsub.f32 %v4857, %v4916
  %v4931 = vsub.f32 %v4858, %v4917
  %v4932 = vsub.f32 %v4859, %v4918
  %v4933 = vsub.f32 %v4860, %v4919
  %v4934 = vsub.f32 %v4861, %v4920
  %v4935 = vsub.f32 %v4862, %v4921
  %v4936 = vsub.f32 %v4863, %v4922
  %v4937 = vsub.f32 %v4864, %v4923
  %v4938 = vsub.f32 %v4865, %v4924
  %v4939 = vsub.f32 %v4866, %v4925
  %v4940 = vsub.f32 %v4867, %v4926
  %v4941 = vsub.f32 %v4868, %v4927
  %v4942 = vsub.f32 %v4869, %v4928
  %v4943 = vsub.f32 %v4870, %v4929
  %v4944 = vmul.f32 %v4930, %v4930
  %v4945 = vmul.f32 %v4931, %v4931
  %v4946 = vmul.f32 %v4932, %v4932
  %v4947 = vmul.f32 %v4933, %v4933
  %v4948 = vmul.f32 %v4934, %v4934
  %v4949 = vmul.f32 %v4935, %v4935
  %v4950 = vmul.f32 %v4936, %v4936
  %v4951 = vmul.f32 %v4937, %v4937
  %v4952 = vmul.f32 %v4938, %v4938
  %v4953 = vmul.f32 %v4939, %v4939
  %v4954 = vmul.f32 %v4940, %v4940
  %v4955 = vmul.f32 %v4941, %v4941
  %v4956 = vmul.f32 %v4942, %v4942
  %v4957 = vmul.f32 %v4943, %v4943
  %v4958 = vsel %vm57, %v4944, 0.0
  %4959 = vadd.xlane.f32.xlu0 %v4958
  %v4960 = vpop.xlane.xlu0 %4959
  %v4961 = vsel %vm57, %v4945, 0.0
  %4962 = vadd.xlane.f32.xlu0 %v4961
  %v4963 = vpop.xlane.xlu0 %4962
  %v4964 = vsel %vm57, %v4946, 0.0
  %4965 = vadd.xlane.f32.xlu0 %v4964
  %v4966 = vpop.xlane.xlu0 %4965
  %v4967 = vsel %vm57, %v4947, 0.0
  %4968 = vadd.xlane.f32.xlu0 %v4967
  %v4969 = vpop.xlane.xlu0 %4968
  %v4970 = vsel %vm57, %v4948, 0.0
  %4971 = vadd.xlane.f32.xlu0 %v4970
  %v4972 = vpop.xlane.xlu0 %4971
  %v4973 = vsel %vm57, %v4949, 0.0
  %4974 = vadd.xlane.f32.xlu0 %v4973
  %v4975 = vpop.xlane.xlu0 %4974
  %v4976 = vsel %vm57, %v4950, 0.0
  %4977 = vadd.xlane.f32.xlu0 %v4976
  %v4978 = vpop.xlane.xlu0 %4977
  %v4979 = vsel %vm57, %v4951, 0.0
  %4980 = vadd.xlane.f32.xlu0 %v4979
  %v4981 = vpop.xlane.xlu0 %4980
  %v4982 = vsel %vm57, %v4952, 0.0
  %4983 = vadd.xlane.f32.xlu0 %v4982
  %v4984 = vpop.xlane.xlu0 %4983
  %v4985 = vsel %vm57, %v4953, 0.0
  %4986 = vadd.xlane.f32.xlu0 %v4985
  %v4987 = vpop.xlane.xlu0 %4986
  %v4988 = vsel %vm57, %v4954, 0.0
  %4989 = vadd.xlane.f32.xlu0 %v4988
  %v4990 = vpop.xlane.xlu0 %4989
  %v4991 = vsel %vm57, %v4955, 0.0
  %4992 = vadd.xlane.f32.xlu0 %v4991
  %v4993 = vpop.xlane.xlu0 %4992
  %v4994 = vsel %vm57, %v4956, 0.0
  %4995 = vadd.xlane.f32.xlu0 %v4994
  %v4996 = vpop.xlane.xlu0 %4995
  %v4997 = vsel %vm57, %v4957, 0.0
  %4998 = vadd.xlane.f32.xlu0 %v4997
  %v4999 = vpop.xlane.xlu0 %4998
  %v5000 = vmul.f32 %v4960, %v100
  %v5001 = vmul.f32 %v4963, %v100
  %v5002 = vmul.f32 %v4966, %v100
  %v5003 = vmul.f32 %v4969, %v100
  %v5004 = vmul.f32 %v4972, %v100
  %v5005 = vmul.f32 %v4975, %v100
  %v5006 = vmul.f32 %v4978, %v100
  %v5007 = vmul.f32 %v4981, %v100
  %v5008 = vmul.f32 %v4984, %v100
  %v5009 = vmul.f32 %v4987, %v100
  %v5010 = vmul.f32 %v4990, %v100
  %v5011 = vmul.f32 %v4993, %v100
  %v5012 = vmul.f32 %v4996, %v100
  %v5013 = vmul.f32 %v4999, %v100
  %v5014 = vadd.f32 %v5000, 1e-05
  %v5015 = vadd.f32 %v5001, 1e-05
  %v5016 = vadd.f32 %v5002, 1e-05
  %v5017 = vadd.f32 %v5003, 1e-05
  %v5018 = vadd.f32 %v5004, 1e-05
  %v5019 = vadd.f32 %v5005, 1e-05
  %v5020 = vadd.f32 %v5006, 1e-05
  %v5021 = vadd.f32 %v5007, 1e-05
  %v5022 = vadd.f32 %v5008, 1e-05
  %v5023 = vadd.f32 %v5009, 1e-05
  %v5024 = vadd.f32 %v5010, 1e-05
  %v5025 = vadd.f32 %v5011, 1e-05
  %v5026 = vadd.f32 %v5012, 1e-05
  %v5027 = vadd.f32 %v5013, 1e-05
  %v5028 = vrsqrt.pop %v5014
  %v5029 = vrsqrt.pop %v5015
  %v5030 = vrsqrt.pop %v5016
  %v5031 = vrsqrt.pop %v5017
  %v5032 = vrsqrt.pop %v5018
  %v5033 = vrsqrt.pop %v5019
  %v5034 = vrsqrt.pop %v5020
  %v5035 = vrsqrt.pop %v5021
  %v5036 = vrsqrt.pop %v5022
  %v5037 = vrsqrt.pop %v5023
  %v5038 = vrsqrt.pop %v5024
  %v5039 = vrsqrt.pop %v5025
  %v5040 = vrsqrt.pop %v5026
  %v5041 = vrsqrt.pop %v5027
  %v5042 = vmul.f32 %v4930, %v5028
  %v5043 = vmul.f32 %v4931, %v5029
  %v5044 = vmul.f32 %v4932, %v5030
  %v5045 = vmul.f32 %v4933, %v5031
  %v5046 = vmul.f32 %v4934, %v5032
  %v5047 = vmul.f32 %v4935, %v5033
  %v5048 = vmul.f32 %v4936, %v5034
  %v5049 = vmul.f32 %v4937, %v5035
  %v5050 = vmul.f32 %v4938, %v5036
  %v5051 = vmul.f32 %v4939, %v5037
  %v5052 = vmul.f32 %v4940, %v5038
  %v5053 = vmul.f32 %v4941, %v5039
  %v5054 = vmul.f32 %v4942, %v5040
  %v5055 = vmul.f32 %v4943, %v5041
  %v5056 = vlaneseq
  %v5057 = vshrl.u32 %v5056, 7
  %v5058 = vsub.s32 0, %v5057
  %v5059 = vrot.slane %v4872, %v5058
  %v5060 = vmul.f32 %v5042, %v5059
  %v5061 = vmul.f32 %v5043, %v5059
  %v5062 = vmul.f32 %v5044, %v5059
  %v5063 = vmul.f32 %v5045, %v5059
  %v5064 = vmul.f32 %v5046, %v5059
  %v5065 = vmul.f32 %v5047, %v5059
  %v5066 = vmul.f32 %v5048, %v5059
  %v5067 = vmul.f32 %v5049, %v5059
  %v5068 = vmul.f32 %v5050, %v5059
  %v5069 = vmul.f32 %v5051, %v5059
  %v5070 = vmul.f32 %v5052, %v5059
  %v5071 = vmul.f32 %v5053, %v5059
  %v5072 = vmul.f32 %v5054, %v5059
  %v5073 = vmul.f32 %v5055, %v5059
  %v5074 = vlaneseq
  %v5075 = vshrl.u32 %v5074, 7
  %v5076 = vsub.s32 0, %v5075
  %v5077 = vrot.slane %v4873, %v5076
  %v5078 = vadd.f32 %v5060, %v5077
  %v5079 = vadd.f32 %v5061, %v5077
  %v5080 = vadd.f32 %v5062, %v5077
  %v5081 = vadd.f32 %v5063, %v5077
  %v5082 = vadd.f32 %v5064, %v5077
  %v5083 = vadd.f32 %v5065, %v5077
  %v5084 = vadd.f32 %v5066, %v5077
  %v5085 = vadd.f32 %v5067, %v5077
  %v5086 = vadd.f32 %v5068, %v5077
  %v5087 = vadd.f32 %v5069, %v5077
  %v5088 = vadd.f32 %v5070, %v5077
  %v5089 = vadd.f32 %v5071, %v5077
  %v5090 = vadd.f32 %v5072, %v5077
  %v5091 = vadd.f32 %v5073, %v5077
  %s5092 = scalar_lea.vmem %s7, 16
  %v5093 = vld [vmem:[%s5092] sm:$0xff]
  %v5094 = vld [vmem:[%s5092 + $0x8] sm:$0xf]
  %v5095 = vld [vmem:[%s8 + $0x1] sm:$0x1]
  %v5096 = vlaneseq
  %v5097 = vshrl.u32 %v5096, 7
  %v5098 = vsub.s32 0, %v5097
  %v5099 = vrot.slane %v5095, %v5098
  %v5101 = vsel %vm57, %v5078, 0
  %v5104 = vsel %vm57, %v5079, 0
  %v5107 = vsel %vm57, %v5080, 0
  %v5110 = vsel %vm57, %v5081, 0
  %v5113 = vsel %vm57, %v5082, 0
  %v5116 = vsel %vm57, %v5083, 0
  %v5119 = vsel %vm57, %v5084, 0
  %v5122 = vsel %vm57, %v5085, 0
  %v5125 = vsel %vm57, %v5086, 0
  %v5128 = vsel %vm57, %v5087, 0
  %v5131 = vsel %vm57, %v5088, 0
  %v5134 = vsel %vm57, %v5089, 0
  %v5137 = vsel %vm57, %v5090, 0
  %v5140 = vsel %vm57, %v5091, 0
  %v5143 = vsel %vm326, %v5094, 0
  %5145 = vmatprep.subr.mxu0 0.0
  %5146 = vmatpush1.msra.mxu0 %v5093
  %5147 = vmatprep.subr.mxu0 0.0
  %5148 = vmatpush1.msra.mxu0 %v5143
  %5149 = vmatprep.subr.mxu0 0.0
  %5150 = vmatpush1.msra.mxu0 0.0
  %5151 = vmatprep.subr.mxu0 0.0
  %5152 = vmatpush1.msra.mxu0 0.0
  %5153 = vmatprep.subr.mxu0 0.0
  %5154 = vmatpush1.msra.mxu0 0.0
  %5155 = vmatprep.subr.mxu0 0.0
  %5156 = vmatpush1.msra.mxu0 0.0
  %5157 = vmatprep.subr.mxu0 0.0
  %5158 = vmatpush1.msra.mxu0 0.0
  %5159 = vmatprep.subr.mxu0 0.0
  %5160 = vmatpush1.msra.mxu0 0.0
  %5161 = vmatprep.subr.mxu0 0.0
  %5162 = vmatpush1.msra.mxu0 0.0
  %5163 = vmatprep.subr.mxu0 0.0
  %5164 = vmatpush1.msra.mxu0 0.0
  %5165 = vmatprep.subr.mxu0 0.0
  %5166 = vmatpush1.msra.mxu0 0.0
  %5167 = vmatprep.subr.mxu0 0.0
  %5168 = vmatpush1.msra.mxu0 0.0
  %5169 = vmatprep.subr.mxu0 0.0
  %5170 = vmatpush1.msra.mxu0 0.0
  %5171 = vmatprep.subr.mxu0 0.0
  %5172 = vmatpush1.msra.mxu0 0.0
  %5173 = vmatprep.subr.mxu0 0.0
  %5174 = vmatpush1.msra.mxu0 0.0
  %5175 = vmatprep.subr.mxu0 0.0
  %5176 = vmatpush1.msra.mxu0 0.0
  %5177 = vmatprep.subr.mxu0 0.0
  %5178 = vmatpush1.msra.mxu0 0.0
  %5179 = vmatprep.subr.mxu0 0.0
  %5180 = vmatpush1.msra.mxu0 0.0
  %5181 = vmatprep.subr.mxu0 0.0
  %5182 = vmatpush1.msra.mxu0 0.0
  %5183 = vmatprep.subr.mxu0 0.0
  %5184 = vmatpush1.msra.mxu0 0.0
  %5185 = vmatprep.subr.mxu0 0.0
  %5186 = vmatpush1.msra.mxu0 0.0
  %5187 = vmatprep.subr.mxu0 0.0
  %5188 = vmatpush1.msra.mxu0 0.0
  %5189 = vmatprep.subr.mxu0 0.0
  %5190 = vmatpush1.msra.mxu0 0.0
  %5191 = vmatprep.subr.mxu0 0.0
  %5192 = vmatpush1.msra.mxu0 0.0
  %5193 = vmatprep.subr.mxu0 0.0
  %5194 = vmatpush1.msra.mxu0 0.0
  %5195 = vmatprep.subr.mxu0 0.0
  %5196 = vmatpush1.msra.mxu0 0.0
  %5197 = vmatprep.subr.mxu0 0.0
  %5198 = vmatpush1.msra.mxu0 0.0
  %5199 = vmatprep.subr.mxu0 0.0
  %5200 = vmatpush1.msra.mxu0 0.0
  %5201 = vmatprep.subr.mxu0 0.0
  %5202 = vmatpush1.msra.mxu0 0.0
  %5203 = vmatprep.subr.mxu0 0.0
  %5204 = vmatpush1.msra.mxu0 0.0
  %5205 = vmatprep.subr.mxu0 0.0
  %5206 = vmatpush1.msra.mxu0 0.0
  %5207 = vmatprep.subr.mxu0 0.0
  %5208 = vmatpush1.msra.mxu0 0.0
  %5209 = vmatprep.mubr.f32.mxu0 0.0
  %5210 = vmatmul.mubr.f32.gmra.mrb[0].mxu0 %v5101
  %v5211 = vpop.f32.mrb[0].mxu0
  %v5212 = vadd.f32 %v5099, %v5211
  %v5213 = vpop.f32.mrb[0].mxu0
  %5214 = vmatprep.mubr.f32.mxu0 0.0
  %5215 = vmatmul.mubr.f32.gmra.mrb[0].mxu0 %v5104
  %v5216 = vpop.f32.mrb[0].mxu0
  %v5217 = vadd.f32 %v5099, %v5216
  %v5218 = vpop.f32.mrb[0].mxu0
  %5219 = vmatprep.mubr.f32.mxu0 0.0
  %5220 = vmatmul.mubr.f32.gmra.mrb[0].mxu0 %v5107
  %v5221 = vpop.f32.mrb[0].mxu0
  %v5222 = vadd.f32 %v5099, %v5221
  %v5223 = vpop.f32.mrb[0].mxu0
  %5224 = vmatprep.mubr.f32.mxu0 0.0
  %5225 = vmatmul.mubr.f32.gmra.mrb[0].mxu0 %v5110
  %v5226 = vpop.f32.mrb[0].mxu0
  %v5227 = vadd.f32 %v5099, %v5226
  %v5228 = vpop.f32.mrb[0].mxu0
  %5229 = vmatprep.mubr.f32.mxu0 0.0
  %5230 = vmatmul.mubr.f32.gmra.mrb[0].mxu0 %v5113
  %v5231 = vpop.f32.mrb[0].mxu0
  %v5232 = vadd.f32 %v5099, %v5231
  %v5233 = vpop.f32.mrb[0].mxu0
  %5234 = vmatprep.mubr.f32.mxu0 0.0
  %5235 = vmatmul.mubr.f32.gmra.mrb[0].mxu0 %v5116
  %v5236 = vpop.f32.mrb[0].mxu0
  %v5237 = vadd.f32 %v5099, %v5236
  %v5238 = vpop.f32.mrb[0].mxu0
  %5239 = vmatprep.mubr.f32.mxu0 0.0
  %5240 = vmatmul.mubr.f32.gmra.mrb[0].mxu0 %v5119
  %v5241 = vpop.f32.mrb[0].mxu0
  %v5242 = vadd.f32 %v5099, %v5241
  %v5243 = vpop.f32.mrb[0].mxu0
  %5244 = vmatprep.mubr.f32.mxu0 0.0
  %5245 = vmatmul.mubr.f32.gmra.mrb[0].mxu0 %v5122
  %v5246 = vpop.f32.mrb[0].mxu0
  %v5247 = vadd.f32 %v5099, %v5246
  %v5248 = vpop.f32.mrb[0].mxu0
  %5249 = vmatprep.mubr.f32.mxu0 0.0
  %5250 = vmatmul.mubr.f32.gmra.mrb[0].mxu0 %v5125
  %v5251 = vpop.f32.mrb[0].mxu0
  %v5252 = vadd.f32 %v5099, %v5251
  %v5253 = vpop.f32.mrb[0].mxu0
  %5254 = vmatprep.mubr.f32.mxu0 0.0
  %5255 = vmatmul.mubr.f32.gmra.mrb[0].mxu0 %v5128
  %v5256 = vpop.f32.mrb[0].mxu0
  %v5257 = vadd.f32 %v5099, %v5256
  %v5258 = vpop.f32.mrb[0].mxu0
  %5259 = vmatprep.mubr.f32.mxu0 0.0
  %5260 = vmatmul.mubr.f32.gmra.mrb[0].mxu0 %v5131
  %v5261 = vpop.f32.mrb[0].mxu0
  %v5262 = vadd.f32 %v5099, %v5261
  %v5263 = vpop.f32.mrb[0].mxu0
  %5264 = vmatprep.mubr.f32.mxu0 0.0
  %5265 = vmatmul.mubr.f32.gmra.mrb[0].mxu0 %v5134
  %v5266 = vpop.f32.mrb[0].mxu0
  %v5267 = vadd.f32 %v5099, %v5266
  %v5268 = vpop.f32.mrb[0].mxu0
  %5269 = vmatprep.mubr.f32.mxu0 0.0
  %5270 = vmatmul.mubr.f32.gmra.mrb[0].mxu0 %v5137
  %v5271 = vpop.f32.mrb[0].mxu0
  %v5272 = vadd.f32 %v5099, %v5271
  %v5273 = vpop.f32.mrb[0].mxu0
  %5274 = vmatprep.mubr.f32.mxu0 0.0
  %5275 = vmatmul.mubr.f32.gmra.mrb[0].mxu0 %v5140
  %v5276 = vpop.f32.mrb[0].mxu0
  %v5277 = vadd.f32 %v5099, %v5276
  %v5278 = vpop.f32.mrb[0].mxu0
  %5279 = vdwg.mxu0
  %v5280 = vmax.f32 %v5212, 0.0
  %v5281 = vmax.f32 %v5217, 0.0
  %v5282 = vmax.f32 %v5222, 0.0
  %v5283 = vmax.f32 %v5227, 0.0
  %v5284 = vmax.f32 %v5232, 0.0
  %v5285 = vmax.f32 %v5237, 0.0
  %v5286 = vmax.f32 %v5242, 0.0
  %v5287 = vmax.f32 %v5247, 0.0
  %v5288 = vmax.f32 %v5252, 0.0
  %v5289 = vmax.f32 %v5257, 0.0
  %v5290 = vmax.f32 %v5262, 0.0
  %v5291 = vmax.f32 %v5267, 0.0
  %v5292 = vmax.f32 %v5272, 0.0
  %v5293 = vmax.f32 %v5277, 0.0
  %vm5294 = vcmp.le.f32.partialorder %v5280, 0.0
  %vm5295 = vcmp.le.f32.partialorder %v5281, 0.0
  %vm5296 = vcmp.le.f32.partialorder %v5282, 0.0
  %vm5297 = vcmp.le.f32.partialorder %v5283, 0.0
  %vm5298 = vcmp.le.f32.partialorder %v5284, 0.0
  %vm5299 = vcmp.le.f32.partialorder %v5285, 0.0
  %vm5300 = vcmp.le.f32.partialorder %v5286, 0.0
  %vm5301 = vcmp.le.f32.partialorder %v5287, 0.0
  %vm5302 = vcmp.le.f32.partialorder %v5288, 0.0
  %vm5303 = vcmp.le.f32.partialorder %v5289, 0.0
  %vm5304 = vcmp.le.f32.partialorder %v5290, 0.0
  %vm5305 = vcmp.le.f32.partialorder %v5291, 0.0
  %vm5306 = vcmp.le.f32.partialorder %v5292, 0.0
  %vm5307 = vcmp.le.f32.partialorder %v5293, 0.0
  %v5308 = vsel %vm5294, 1, 0
  %v5309 = vsel %vm5295, 1, 0
  %v5310 = vsel %vm5296, 1, 0
  %v5311 = vsel %vm5297, 1, 0
  %v5312 = vsel %vm5298, 1, 0
  %v5313 = vsel %vm5299, 1, 0
  %v5314 = vsel %vm5300, 1, 0
  %v5315 = vsel %vm5301, 1, 0
  %v5316 = vsel %vm5302, 1, 0
  %v5317 = vsel %vm5303, 1, 0
  %v5318 = vsel %vm5304, 1, 0
  %v5319 = vsel %vm5305, 1, 0
  %v5320 = vsel %vm5306, 1, 0
  %v5321 = vsel %vm5307, 1, 0
  %v5322 = vcvt.s32.f32 %v5308
  %v5323 = vcvt.s32.f32 %v5309
  %v5324 = vcvt.s32.f32 %v5310
  %v5325 = vcvt.s32.f32 %v5311
  %v5326 = vcvt.s32.f32 %v5312
  %v5327 = vcvt.s32.f32 %v5313
  %v5328 = vcvt.s32.f32 %v5314
  %v5329 = vcvt.s32.f32 %v5315
  %v5330 = vcvt.s32.f32 %v5316
  %v5331 = vcvt.s32.f32 %v5317
  %v5332 = vcvt.s32.f32 %v5318
  %v5333 = vcvt.s32.f32 %v5319
  %v5334 = vcvt.s32.f32 %v5320
  %v5335 = vcvt.s32.f32 %v5321
  %v5336 = vsel %vm2558, %v5322, 0.0
  %5337 = vadd.xlane.f32.xlu0 %v5336
  %v5338 = vpop.xlane.xlu0 %5337
  %v5339 = vsel %vm2558, %v5323, 0.0
  %5340 = vadd.xlane.f32.xlu0 %v5339
  %v5341 = vpop.xlane.xlu0 %5340
  %v5342 = vsel %vm2558, %v5324, 0.0
  %5343 = vadd.xlane.f32.xlu0 %v5342
  %v5344 = vpop.xlane.xlu0 %5343
  %v5345 = vsel %vm2558, %v5325, 0.0
  %5346 = vadd.xlane.f32.xlu0 %v5345
  %v5347 = vpop.xlane.xlu0 %5346
  %v5348 = vsel %vm2558, %v5326, 0.0
  %5349 = vadd.xlane.f32.xlu0 %v5348
  %v5350 = vpop.xlane.xlu0 %5349
  %v5351 = vsel %vm2558, %v5327, 0.0
  %5352 = vadd.xlane.f32.xlu0 %v5351
  %v5353 = vpop.xlane.xlu0 %5352
  %v5354 = vsel %vm2558, %v5328, 0.0
  %5355 = vadd.xlane.f32.xlu0 %v5354
  %v5356 = vpop.xlane.xlu0 %5355
  %v5357 = vsel %vm2558, %v5329, 0.0
  %5358 = vadd.xlane.f32.xlu0 %v5357
  %v5359 = vpop.xlane.xlu0 %5358
  %v5360 = vsel %vm2558, %v5330, 0.0
  %5361 = vadd.xlane.f32.xlu0 %v5360
  %v5362 = vpop.xlane.xlu0 %5361
  %v5363 = vsel %vm2558, %v5331, 0.0
  %5364 = vadd.xlane.f32.xlu0 %v5363
  %v5365 = vpop.xlane.xlu0 %5364
  %v5366 = vsel %vm2558, %v5332, 0.0
  %5367 = vadd.xlane.f32.xlu0 %v5366
  %v5368 = vpop.xlane.xlu0 %5367
  %v5369 = vsel %vm2558, %v5333, 0.0
  %5370 = vadd.xlane.f32.xlu0 %v5369
  %v5371 = vpop.xlane.xlu0 %5370
  %v5372 = vsel %vm2558, %v5334, 0.0
  %5373 = vadd.xlane.f32.xlu0 %v5372
  %v5374 = vpop.xlane.xlu0 %5373
  %v5375 = vsel %vm2558, %v5335, 0.0
  %5376 = vadd.xlane.f32.xlu0 %v5375
  %v5377 = vpop.xlane.xlu0 %5376
  %v5378 = vmul.f32 %v5338, %v2601
  %v5379 = vmul.f32 %v5341, %v2601
  %v5380 = vmul.f32 %v5344, %v2601
  %v5381 = vmul.f32 %v5347, %v2601
  %v5382 = vmul.f32 %v5350, %v2601
  %v5383 = vmul.f32 %v5353, %v2601
  %v5384 = vmul.f32 %v5356, %v2601
  %v5385 = vmul.f32 %v5359, %v2601
  %v5386 = vmul.f32 %v5362, %v2601
  %v5387 = vmul.f32 %v5365, %v2601
  %v5388 = vmul.f32 %v5368, %v2601
  %v5389 = vmul.f32 %v5371, %v2601
  %v5390 = vmul.f32 %v5374, %v2601
  %v5391 = vmul.f32 %v5377, %v2601
  %v5392 = vadd.f32 %v5378, %v5380
  %v5393 = vadd.f32 %v5379, %v5381
  %v5394 = vadd.f32 %v5392, %v5382
  %v5395 = vadd.f32 %v5393, %v5383
  %v5396 = vadd.f32 %v5394, %v5384
  %v5397 = vadd.f32 %v5395, %v5385
  %v5398 = vadd.f32 %v5396, %v5386
  %v5399 = vadd.f32 %v5397, %v5387
  %v5400 = vadd.f32 %v5398, %v5388
  %v5401 = vadd.f32 %v5399, %v5389
  %v5402 = vadd.f32 %v5400, %v5390
  %v5403 = vadd.f32 %v5401, %v5391
  %v5404 = vmul.f32 %v5402, 0.14285715
  %v5405 = vmul.f32 %v5403, 0.14285715
  %s5406 = scalar_lea.vmem %s9, 48
  %v5407 = vld [vmem:[%s5406] sm:$0xff]
  %v5408 = vld [vmem:[%s5406 + $0x8] sm:$0xff]
  %v5409 = vld [vmem:[%s5406 + $0x10] sm:$0xff]
  %v5410 = vld [vmem:[%s5406 + $0x18] sm:$0xff]
  %v5411 = vld [vmem:[%s5406 + $0x20] sm:$0xff]
  %v5412 = vld [vmem:[%s5406 + $0x28] sm:$0xff]
  %v5413 = vld [vmem:[%s10 + $0x1] sm:$0x1]
  %v5414 = vlaneseq
  %v5415 = vshrl.u32 %v5414, 7
  %v5416 = vsub.s32 0, %v5415
  %v5417 = vrot.slane %v5413, %v5416
  %v5419 = vsel %vm2558, %v5280, 0
  %v5422 = vsel %vm2558, %v5281, 0
  %v5425 = vsel %vm2558, %v5282, 0
  %v5428 = vsel %vm2558, %v5283, 0
  %v5431 = vsel %vm2558, %v5284, 0
  %v5434 = vsel %vm2558, %v5285, 0
  %v5437 = vsel %vm2558, %v5286, 0
  %v5440 = vsel %vm2558, %v5287, 0
  %v5443 = vsel %vm2558, %v5288, 0
  %v5446 = vsel %vm2558, %v5289, 0
  %v5449 = vsel %vm2558, %v5290, 0
  %v5452 = vsel %vm2558, %v5291, 0
  %v5455 = vsel %vm2558, %v5292, 0
  %v5458 = vsel %vm2558, %v5293, 0
  %5460 = vmatprep.subr.mxu0 0.0
  %5461 = vmatpush1.msra.mxu0 %v5407
  %5462 = vmatprep.subr.mxu0 0.0
  %5463 = vmatpush1.msra.mxu0 %v5408
  %5464 = vmatprep.subr.mxu0 0.0
  %5465 = vmatpush1.msra.mxu0 %v5409
  %5466 = vmatprep.subr.mxu0 0.0
  %5467 = vmatpush1.msra.mxu0 %v5410
  %5468 = vmatprep.subr.mxu0 0.0
  %5469 = vmatpush1.msra.mxu0 %v5411
  %5470 = vmatprep.subr.mxu0 0.0
  %5471 = vmatpush1.msra.mxu0 %v5412
  %5472 = vmatprep.subr.mxu0 0.0
  %5473 = vmatpush1.msra.mxu0 0.0
  %5474 = vmatprep.subr.mxu0 0.0
  %5475 = vmatpush1.msra.mxu0 0.0
  %5476 = vmatprep.subr.mxu0 0.0
  %5477 = vmatpush1.msra.mxu0 0.0
  %5478 = vmatprep.subr.mxu0 0.0
  %5479 = vmatpush1.msra.mxu0 0.0
  %5480 = vmatprep.subr.mxu0 0.0
  %5481 = vmatpush1.msra.mxu0 0.0
  %5482 = vmatprep.subr.mxu0 0.0
  %5483 = vmatpush1.msra.mxu0 0.0
  %5484 = vmatprep.subr.mxu0 0.0
  %5485 = vmatpush1.msra.mxu0 0.0
  %5486 = vmatprep.subr.mxu0 0.0
  %5487 = vmatpush1.msra.mxu0 0.0
  %5488 = vmatprep.subr.mxu0 0.0
  %5489 = vmatpush1.msra.mxu0 0.0
  %5490 = vmatprep.subr.mxu0 0.0
  %5491 = vmatpush1.msra.mxu0 0.0
  %5492 = vmatprep.subr.mxu0 0.0
  %5493 = vmatpush1.msra.mxu0 0.0
  %5494 = vmatprep.subr.mxu0 0.0
  %5495 = vmatpush1.msra.mxu0 0.0
  %5496 = vmatprep.subr.mxu0 0.0
  %5497 = vmatpush1.msra.mxu0 0.0
  %5498 = vmatprep.subr.mxu0 0.0
  %5499 = vmatpush1.msra.mxu0 0.0
  %5500 = vmatprep.subr.mxu0 0.0
  %5501 = vmatpush1.msra.mxu0 0.0
  %5502 = vmatprep.subr.mxu0 0.0
  %5503 = vmatpush1.msra.mxu0 0.0
  %5504 = vmatprep.subr.mxu0 0.0
  %5505 = vmatpush1.msra.mxu0 0.0
  %5506 = vmatprep.subr.mxu0 0.0
  %5507 = vmatpush1.msra.mxu0 0.0
  %5508 = vmatprep.subr.mxu0 0.0
  %5509 = vmatpush1.msra.mxu0 0.0
  %5510 = vmatprep.subr.mxu0 0.0
  %5511 = vmatpush1.msra.mxu0 0.0
  %5512 = vmatprep.subr.mxu0 0.0
  %5513 = vmatpush1.msra.mxu0 0.0
  %5514 = vmatprep.subr.mxu0 0.0
  %5515 = vmatpush1.msra.mxu0 0.0
  %5516 = vmatprep.subr.mxu0 0.0
  %5517 = vmatpush1.msra.mxu0 0.0
  %5518 = vmatprep.subr.mxu0 0.0
  %5519 = vmatpush1.msra.mxu0 0.0
  %5520 = vmatprep.subr.mxu0 0.0
  %5521 = vmatpush1.msra.mxu0 0.0
  %5522 = vmatprep.subr.mxu0 0.0
  %5523 = vmatpush1.msra.mxu0 0.0
  %5524 = vmatprep.mubr.f32.mxu0 0.0
  %5525 = vmatmul.mubr.f32.gmra.mrb[0].mxu0 %v5419
  %v5526 = vpop.f32.mrb[0].mxu0
  %v5527 = vadd.f32 %v5417, %v5526
  %v5528 = vpop.f32.mrb[0].mxu0
  %5529 = vmatprep.mubr.f32.mxu0 0.0
  %5530 = vmatmul.mubr.f32.gmra.mrb[0].mxu0 %v5422
  %v5531 = vpop.f32.mrb[0].mxu0
  %v5532 = vadd.f32 %v5417, %v5531
  %v5533 = vpop.f32.mrb[0].mxu0
  %5534 = vmatprep.mubr.f32.mxu0 0.0
  %5535 = vmatmul.mubr.f32.gmra.mrb[0].mxu0 %v5425
  %v5536 = vpop.f32.mrb[0].mxu0
  %v5537 = vadd.f32 %v5417, %v5536
  %v5538 = vpop.f32.mrb[0].mxu0
  %5539 = vmatprep.mubr.f32.mxu0 0.0
  %5540 = vmatmul.mubr.f32.gmra.mrb[0].mxu0 %v5428
  %v5541 = vpop.f32.mrb[0].mxu0
  %v5542 = vadd.f32 %v5417, %v5541
  %v5543 = vpop.f32.mrb[0].mxu0
  %5544 = vmatprep.mubr.f32.mxu0 0.0
  %5545 = vmatmul.mubr.f32.gmra.mrb[0].mxu0 %v5431
  %v5546 = vpop.f32.mrb[0].mxu0
  %v5547 = vadd.f32 %v5417, %v5546
  %v5548 = vpop.f32.mrb[0].mxu0
  %5549 = vmatprep.mubr.f32.mxu0 0.0
  %5550 = vmatmul.mubr.f32.gmra.mrb[0].mxu0 %v5434
  %v5551 = vpop.f32.mrb[0].mxu0
  %v5552 = vadd.f32 %v5417, %v5551
  %v5553 = vpop.f32.mrb[0].mxu0
  %5554 = vmatprep.mubr.f32.mxu0 0.0
  %5555 = vmatmul.mubr.f32.gmra.mrb[0].mxu0 %v5437
  %v5556 = vpop.f32.mrb[0].mxu0
  %v5557 = vadd.f32 %v5417, %v5556
  %v5558 = vpop.f32.mrb[0].mxu0
  %5559 = vmatprep.mubr.f32.mxu0 0.0
  %5560 = vmatmul.mubr.f32.gmra.mrb[0].mxu0 %v5440
  %v5561 = vpop.f32.mrb[0].mxu0
  %v5562 = vadd.f32 %v5417, %v5561
  %v5563 = vpop.f32.mrb[0].mxu0
  %5564 = vmatprep.mubr.f32.mxu0 0.0
  %5565 = vmatmul.mubr.f32.gmra.mrb[0].mxu0 %v5443
  %v5566 = vpop.f32.mrb[0].mxu0
  %v5567 = vadd.f32 %v5417, %v5566
  %v5568 = vpop.f32.mrb[0].mxu0
  %5569 = vmatprep.mubr.f32.mxu0 0.0
  %5570 = vmatmul.mubr.f32.gmra.mrb[0].mxu0 %v5446
  %v5571 = vpop.f32.mrb[0].mxu0
  %v5572 = vadd.f32 %v5417, %v5571
  %v5573 = vpop.f32.mrb[0].mxu0
  %5574 = vmatprep.mubr.f32.mxu0 0.0
  %5575 = vmatmul.mubr.f32.gmra.mrb[0].mxu0 %v5449
  %v5576 = vpop.f32.mrb[0].mxu0
  %v5577 = vadd.f32 %v5417, %v5576
  %v5578 = vpop.f32.mrb[0].mxu0
  %5579 = vmatprep.mubr.f32.mxu0 0.0
  %5580 = vmatmul.mubr.f32.gmra.mrb[0].mxu0 %v5452
  %v5581 = vpop.f32.mrb[0].mxu0
  %v5582 = vadd.f32 %v5417, %v5581
  %v5583 = vpop.f32.mrb[0].mxu0
  %5584 = vmatprep.mubr.f32.mxu0 0.0
  %5585 = vmatmul.mubr.f32.gmra.mrb[0].mxu0 %v5455
  %v5586 = vpop.f32.mrb[0].mxu0
  %v5587 = vadd.f32 %v5417, %v5586
  %v5588 = vpop.f32.mrb[0].mxu0
  %5589 = vmatprep.mubr.f32.mxu0 0.0
  %5590 = vmatmul.mubr.f32.gmra.mrb[0].mxu0 %v5458
  %v5591 = vpop.f32.mrb[0].mxu0
  %v5592 = vadd.f32 %v5417, %v5591
  %v5593 = vpop.f32.mrb[0].mxu0
  %5594 = vdwg.mxu0
  %v5595 = vadd.f32 %v4857, %v5527
  %v5596 = vadd.f32 %v4858, %v5532
  %v5597 = vadd.f32 %v4859, %v5537
  %v5598 = vadd.f32 %v4860, %v5542
  %v5599 = vadd.f32 %v4861, %v5547
  %v5600 = vadd.f32 %v4862, %v5552
  %v5601 = vadd.f32 %v4863, %v5557
  %v5602 = vadd.f32 %v4864, %v5562
  %v5603 = vadd.f32 %v4865, %v5567
  %v5604 = vadd.f32 %v4866, %v5572
  %v5605 = vadd.f32 %v4867, %v5577
  %v5606 = vadd.f32 %v4868, %v5582
  %v5607 = vadd.f32 %v4869, %v5587
  %v5608 = vadd.f32 %v4870, %v5592
  %v5609 = vld [vmem:[%s11] sm:$0x1]
  %v5610 = vld [vmem:[%s11 + $0x1] sm:$0x1]
  %v5611 = vsel %vm57, %v5595, 0.0
  %5612 = vadd.xlane.f32.xlu0 %v5611
  %v5613 = vpop.xlane.xlu0 %5612
  %v5614 = vsel %vm57, %v5596, 0.0
  %5615 = vadd.xlane.f32.xlu0 %v5614
  %v5616 = vpop.xlane.xlu0 %5615
  %v5617 = vsel %vm57, %v5597, 0.0
  %5618 = vadd.xlane.f32.xlu0 %v5617
  %v5619 = vpop.xlane.xlu0 %5618
  %v5620 = vsel %vm57, %v5598, 0.0
  %5621 = vadd.xlane.f32.xlu0 %v5620
  %v5622 = vpop.xlane.xlu0 %5621
  %v5623 = vsel %vm57, %v5599, 0.0
  %5624 = vadd.xlane.f32.xlu0 %v5623
  %v5625 = vpop.xlane.xlu0 %5624
  %v5626 = vsel %vm57, %v5600, 0.0
  %5627 = vadd.xlane.f32.xlu0 %v5626
  %v5628 = vpop.xlane.xlu0 %5627
  %v5629 = vsel %vm57, %v5601, 0.0
  %5630 = vadd.xlane.f32.xlu0 %v5629
  %v5631 = vpop.xlane.xlu0 %5630
  %v5632 = vsel %vm57, %v5602, 0.0
  %5633 = vadd.xlane.f32.xlu0 %v5632
  %v5634 = vpop.xlane.xlu0 %5633
  %v5635 = vsel %vm57, %v5603, 0.0
  %5636 = vadd.xlane.f32.xlu0 %v5635
  %v5637 = vpop.xlane.xlu0 %5636
  %v5638 = vsel %vm57, %v5604, 0.0
  %5639 = vadd.xlane.f32.xlu0 %v5638
  %v5640 = vpop.xlane.xlu0 %5639
  %v5641 = vsel %vm57, %v5605, 0.0
  %5642 = vadd.xlane.f32.xlu0 %v5641
  %v5643 = vpop.xlane.xlu0 %5642
  %v5644 = vsel %vm57, %v5606, 0.0
  %5645 = vadd.xlane.f32.xlu0 %v5644
  %v5646 = vpop.xlane.xlu0 %5645
  %v5647 = vsel %vm57, %v5607, 0.0
  %5648 = vadd.xlane.f32.xlu0 %v5647
  %v5649 = vpop.xlane.xlu0 %5648
  %v5650 = vsel %vm57, %v5608, 0.0
  %5651 = vadd.xlane.f32.xlu0 %v5650
  %v5652 = vpop.xlane.xlu0 %5651
  %v5653 = vmul.f32 %v5613, %v100
  %v5654 = vmul.f32 %v5616, %v100
  %v5655 = vmul.f32 %v5619, %v100
  %v5656 = vmul.f32 %v5622, %v100
  %v5657 = vmul.f32 %v5625, %v100
  %v5658 = vmul.f32 %v5628, %v100
  %v5659 = vmul.f32 %v5631, %v100
  %v5660 = vmul.f32 %v5634, %v100
  %v5661 = vmul.f32 %v5637, %v100
  %v5662 = vmul.f32 %v5640, %v100
  %v5663 = vmul.f32 %v5643, %v100
  %v5664 = vmul.f32 %v5646, %v100
  %v5665 = vmul.f32 %v5649, %v100
  %v5666 = vmul.f32 %v5652, %v100
  %v5667 = vsub.f32 %v5595, %v5653
  %v5668 = vsub.f32 %v5596, %v5654
  %v5669 = vsub.f32 %v5597, %v5655
  %v5670 = vsub.f32 %v5598, %v5656
  %v5671 = vsub.f32 %v5599, %v5657
  %v5672 = vsub.f32 %v5600, %v5658
  %v5673 = vsub.f32 %v5601, %v5659
  %v5674 = vsub.f32 %v5602, %v5660
  %v5675 = vsub.f32 %v5603, %v5661
  %v5676 = vsub.f32 %v5604, %v5662
  %v5677 = vsub.f32 %v5605, %v5663
  %v5678 = vsub.f32 %v5606, %v5664
  %v5679 = vsub.f32 %v5607, %v5665
  %v5680 = vsub.f32 %v5608, %v5666
  %v5681 = vmul.f32 %v5667, %v5667
  %v5682 = vmul.f32 %v5668, %v5668
  %v5683 = vmul.f32 %v5669, %v5669
  %v5684 = vmul.f32 %v5670, %v5670
  %v5685 = vmul.f32 %v5671, %v5671
  %v5686 = vmul.f32 %v5672, %v5672
  %v5687 = vmul.f32 %v5673, %v5673
  %v5688 = vmul.f32 %v5674, %v5674
  %v5689 = vmul.f32 %v5675, %v5675
  %v5690 = vmul.f32 %v5676, %v5676
  %v5691 = vmul.f32 %v5677, %v5677
  %v5692 = vmul.f32 %v5678, %v5678
  %v5693 = vmul.f32 %v5679, %v5679
  %v5694 = vmul.f32 %v5680, %v5680
  %v5695 = vsel %vm57, %v5681, 0.0
  %5696 = vadd.xlane.f32.xlu0 %v5695
  %v5697 = vpop.xlane.xlu0 %5696
  %v5698 = vsel %vm57, %v5682, 0.0
  %5699 = vadd.xlane.f32.xlu0 %v5698
  %v5700 = vpop.xlane.xlu0 %5699
  %v5701 = vsel %vm57, %v5683, 0.0
  %5702 = vadd.xlane.f32.xlu0 %v5701
  %v5703 = vpop.xlane.xlu0 %5702
  %v5704 = vsel %vm57, %v5684, 0.0
  %5705 = vadd.xlane.f32.xlu0 %v5704
  %v5706 = vpop.xlane.xlu0 %5705
  %v5707 = vsel %vm57, %v5685, 0.0
  %5708 = vadd.xlane.f32.xlu0 %v5707
  %v5709 = vpop.xlane.xlu0 %5708
  %v5710 = vsel %vm57, %v5686, 0.0
  %5711 = vadd.xlane.f32.xlu0 %v5710
  %v5712 = vpop.xlane.xlu0 %5711
  %v5713 = vsel %vm57, %v5687, 0.0
  %5714 = vadd.xlane.f32.xlu0 %v5713
  %v5715 = vpop.xlane.xlu0 %5714
  %v5716 = vsel %vm57, %v5688, 0.0
  %5717 = vadd.xlane.f32.xlu0 %v5716
  %v5718 = vpop.xlane.xlu0 %5717
  %v5719 = vsel %vm57, %v5689, 0.0
  %5720 = vadd.xlane.f32.xlu0 %v5719
  %v5721 = vpop.xlane.xlu0 %5720
  %v5722 = vsel %vm57, %v5690, 0.0
  %5723 = vadd.xlane.f32.xlu0 %v5722
  %v5724 = vpop.xlane.xlu0 %5723
  %v5725 = vsel %vm57, %v5691, 0.0
  %5726 = vadd.xlane.f32.xlu0 %v5725
  %v5727 = vpop.xlane.xlu0 %5726
  %v5728 = vsel %vm57, %v5692, 0.0
  %5729 = vadd.xlane.f32.xlu0 %v5728
  %v5730 = vpop.xlane.xlu0 %5729
  %v5731 = vsel %vm57, %v5693, 0.0
  %5732 = vadd.xlane.f32.xlu0 %v5731
  %v5733 = vpop.xlane.xlu0 %5732
  %v5734 = vsel %vm57, %v5694, 0.0
  %5735 = vadd.xlane.f32.xlu0 %v5734
  %v5736 = vpop.xlane.xlu0 %5735
  %v5737 = vmul.f32 %v5697, %v100
  %v5738 = vmul.f32 %v5700, %v100
  %v5739 = vmul.f32 %v5703, %v100
  %v5740 = vmul.f32 %v5706, %v100
  %v5741 = vmul.f32 %v5709, %v100
  %v5742 = vmul.f32 %v5712, %v100
  %v5743 = vmul.f32 %v5715, %v100
  %v5744 = vmul.f32 %v5718, %v100
  %v5745 = vmul.f32 %v5721, %v100
  %v5746 = vmul.f32 %v5724, %v100
  %v5747 = vmul.f32 %v5727, %v100
  %v5748 = vmul.f32 %v5730, %v100
  %v5749 = vmul.f32 %v5733, %v100
  %v5750 = vmul.f32 %v5736, %v100
  %v5751 = vadd.f32 %v5737, 1e-05
  %v5752 = vadd.f32 %v5738, 1e-05
  %v5753 = vadd.f32 %v5739, 1e-05
  %v5754 = vadd.f32 %v5740, 1e-05
  %v5755 = vadd.f32 %v5741, 1e-05
  %v5756 = vadd.f32 %v5742, 1e-05
  %v5757 = vadd.f32 %v5743, 1e-05
  %v5758 = vadd.f32 %v5744, 1e-05
  %v5759 = vadd.f32 %v5745, 1e-05
  %v5760 = vadd.f32 %v5746, 1e-05
  %v5761 = vadd.f32 %v5747, 1e-05
  %v5762 = vadd.f32 %v5748, 1e-05
  %v5763 = vadd.f32 %v5749, 1e-05
  %v5764 = vadd.f32 %v5750, 1e-05
  %v5765 = vrsqrt.pop %v5751
  %v5766 = vrsqrt.pop %v5752
  %v5767 = vrsqrt.pop %v5753
  %v5768 = vrsqrt.pop %v5754
  %v5769 = vrsqrt.pop %v5755
  %v5770 = vrsqrt.pop %v5756
  %v5771 = vrsqrt.pop %v5757
  %v5772 = vrsqrt.pop %v5758
  %v5773 = vrsqrt.pop %v5759
  %v5774 = vrsqrt.pop %v5760
  %v5775 = vrsqrt.pop %v5761
  %v5776 = vrsqrt.pop %v5762
  %v5777 = vrsqrt.pop %v5763
  %v5778 = vrsqrt.pop %v5764
  %v5779 = vmul.f32 %v5667, %v5765
  %v5780 = vmul.f32 %v5668, %v5766
  %v5781 = vmul.f32 %v5669, %v5767
  %v5782 = vmul.f32 %v5670, %v5768
  %v5783 = vmul.f32 %v5671, %v5769
  %v5784 = vmul.f32 %v5672, %v5770
  %v5785 = vmul.f32 %v5673, %v5771
  %v5786 = vmul.f32 %v5674, %v5772
  %v5787 = vmul.f32 %v5675, %v5773
  %v5788 = vmul.f32 %v5676, %v5774
  %v5789 = vmul.f32 %v5677, %v5775
  %v5790 = vmul.f32 %v5678, %v5776
  %v5791 = vmul.f32 %v5679, %v5777
  %v5792 = vmul.f32 %v5680, %v5778
  %v5793 = vlaneseq
  %v5794 = vshrl.u32 %v5793, 7
  %v5795 = vsub.s32 0, %v5794
  %v5796 = vrot.slane %v5609, %v5795
  %v5797 = vmul.f32 %v5779, %v5796
  %v5798 = vmul.f32 %v5780, %v5796
  %v5799 = vmul.f32 %v5781, %v5796
  %v5800 = vmul.f32 %v5782, %v5796
  %v5801 = vmul.f32 %v5783, %v5796
  %v5802 = vmul.f32 %v5784, %v5796
  %v5803 = vmul.f32 %v5785, %v5796
  %v5804 = vmul.f32 %v5786, %v5796
  %v5805 = vmul.f32 %v5787, %v5796
  %v5806 = vmul.f32 %v5788, %v5796
  %v5807 = vmul.f32 %v5789, %v5796
  %v5808 = vmul.f32 %v5790, %v5796
  %v5809 = vmul.f32 %v5791, %v5796
  %v5810 = vmul.f32 %v5792, %v5796
  %v5811 = vlaneseq
  %v5812 = vshrl.u32 %v5811, 7
  %v5813 = vsub.s32 0, %v5812
  %v5814 = vrot.slane %v5610, %v5813
  %v5815 = vadd.f32 %v5797, %v5814
  %v5816 = vadd.f32 %v5798, %v5814
  %v5817 = vadd.f32 %v5799, %v5814
  %v5818 = vadd.f32 %v5800, %v5814
  %v5819 = vadd.f32 %v5801, %v5814
  %v5820 = vadd.f32 %v5802, %v5814
  %v5821 = vadd.f32 %v5803, %v5814
  %v5822 = vadd.f32 %v5804, %v5814
  %v5823 = vadd.f32 %v5805, %v5814
  %v5824 = vadd.f32 %v5806, %v5814
  %v5825 = vadd.f32 %v5807, %v5814
  %v5826 = vadd.f32 %v5808, %v5814
  %v5827 = vadd.f32 %v5809, %v5814
  %v5828 = vadd.f32 %v5810, %v5814
  %5831 = vrot.lane.b32.xlu0 %v5817, 12
  %v5832 = vpop.permute.xlu0 %5831
  %5833 = vrot.lane.b32.xlu0 %v5818, 12
  %v5834 = vpop.permute.xlu0 %5833
  %5839 = vrot.lane.b32.xlu0 %v5819, 24
  %v5840 = vpop.permute.xlu0 %5839
  %5841 = vrot.lane.b32.xlu0 %v5820, 24
  %v5842 = vpop.permute.xlu0 %5841
  %5847 = vrot.lane.b32.xlu0 %v5821, 36
  %v5848 = vpop.permute.xlu0 %5847
  %5849 = vrot.lane.b32.xlu0 %v5822, 36
  %v5850 = vpop.permute.xlu0 %5849
  %5855 = vrot.lane.b32.xlu0 %v5823, 48
  %v5856 = vpop.permute.xlu0 %5855
  %5857 = vrot.lane.b32.xlu0 %v5824, 48
  %v5858 = vpop.permute.xlu0 %5857
  %5863 = vrot.lane.b32.xlu0 %v5825, 60
  %v5864 = vpop.permute.xlu0 %5863
  %5865 = vrot.lane.b32.xlu0 %v5826, 60
  %v5866 = vpop.permute.xlu0 %5865
  %5871 = vrot.lane.b32.xlu0 %v5827, 72
  %v5872 = vpop.permute.xlu0 %5871
  %5873 = vrot.lane.b32.xlu0 %v5828, 72
  %v5874 = vpop.permute.xlu0 %5873
  %v5877 = vsel %vm57, %v5815, %v5832
  %v5878 = vsel %vm57, %v5816, %v5834
  %vm5879 = vcmask 195584
  %v5880 = vsel %vm5879, %v5877, %v5840
  %v5881 = vsel %vm5879, %v5878, %v5842
  %vm5882 = vcmask 293888
  %v5883 = vsel %vm5882, %v5880, %v5848
  %v5884 = vsel %vm5882, %v5881, %v5850
  %v5885 = vsel %vm2558, %v5883, %v5856
  %v5886 = vsel %vm2558, %v5884, %v5858
  %vm5887 = vcmask 490496
  %v5888 = vsel %vm5887, %v5885, %v5864
  %v5889 = vsel %vm5887, %v5886, %v5866
  %vm5890 = vcmask 588800
  %v5891 = vsel %vm5890, %v5888, %v5872
  %v5892 = vsel %vm5890, %v5889, %v5874
  %vm5893 = vcmask 687104
  %v5894 = vsel %vm5893, %v5891, %v2628
  %v5895 = vsel %vm5893, %v5892, %v2629
  %vm5896 = vcmask 695296
  %v5897 = vsel %vm5896, %v5894, %v5404
  %v5898 = vsel %vm5896, %v5895, %v5405
  %vm5899 = vcmask 703488
  %v5900 = vsel %vm5899, %v5897, 0.0
  %v5901 = vsel %vm5899, %v5898, 0.0
  %5902 = vst [vmem:[%s12] sm:$0xff] %v5900
  %5903 = vst [vmem:[%s12 + $0x8] sm:$0xff] %v5901
  // Predicated region
  $region50: #{card_enc_forward.1} parent=0 // pred_check
    _
  $region51: #{card_enc_forward.1} parent=0 // pred_check_branch
    %5905 = sbr.rel (0) target = $region53
  $region52: #{card_enc_forward.1} parent=0 // pred_region
    _
  $region53: #{card_enc_forward.1} parent=0 // pred_fallthru
    _
  // Predicated region
  $region54: #{card_enc_forward.1} parent=0 // pred_check
    _
  $region55: #{card_enc_forward.1} parent=0 // pred_check_branch
    %5907 = sbr.rel (0) target = $region57
  $region56: #{card_enc_forward.1} parent=0 // pred_region
    _
  $region57: #{card_enc_forward.1} parent=0 // pred_fallthru
    _

</llo_original>
